<compile_context>
chip_gen: v6e
topology: v6e:2x2x1
jax: 0.10.0
libtpu: 0.0.40
codegen_flags: <defaults>
</compile_context>

<pallas_src>
import jax
import jax.numpy as jnp
from jax.experimental import pallas as pl
from jax.experimental.pallas import tpu as pltpu

SELU_ALPHA = 1.6732632423543772
SELU_SCALE = 1.0507009873554805

HIDDEN1 = 1024
HIDDEN2 = 1024
HIDDEN3 = 512
OUT = 8


def _selu(x):
    return SELU_SCALE * jnp.where(x > 0, x, SELU_ALPHA * (jnp.exp(x) - 1.0))


def mlp_kernel(x_ref,
               w1_ref, b1_ref,
               w2_ref, b2_ref,
               w3_ref, b3_ref,
               w4_ref, b4_ref,
               o_ref):
    """Fused forward: nn1 -> selu -> nn2 -> selu -> nn3 -> selu -> nn4 -> softmax.

    All weights fit comfortably in VMEM (~3.1 MiB bf16), so everything is
    loaded in one DMA burst and the whole network runs in a single kernel
    invocation.  Dropout(p=0.8) is identity at inference time.
    """
    h1 = _selu(jnp.dot(x_ref[...], w1_ref[...],
                       preferred_element_type=jnp.float32) + b1_ref[...])
    h2 = _selu(jnp.dot(h1.astype(jnp.bfloat16), w2_ref[...],
                       preferred_element_type=jnp.float32) + b2_ref[...])
    h3 = _selu(jnp.dot(h2.astype(jnp.bfloat16), w3_ref[...],
                       preferred_element_type=jnp.float32) + b3_ref[...])
    logits = jnp.dot(h3.astype(jnp.bfloat16), w4_ref[...],
                     preferred_element_type=jnp.float32) + b4_ref[...]

    # softmax over dim=1 (feature axis of the 2-D output); exact f32 divide.
    m = jnp.max(logits, axis=-1, keepdims=True)
    e = jnp.exp(logits - m)
    o_ref[...] = (e / jnp.sum(e, axis=-1, keepdims=True)).astype(o_ref.dtype)


@jax.jit
def fe_nn_forward(x, params):
    (w1, b1), (w2, b2), (w3, b3), (w4, b4) = params
    batch, _ = x.shape

    # Single-step kernel: every operand is a full-array VMEM block.
    vmem = pl.BlockSpec(memory_space=pltpu.MemorySpace.VMEM)
    return pl.pallas_call(
        mlp_kernel,
        out_shape=jax.ShapeDtypeStruct((batch, OUT), jnp.float32),
        in_specs=[vmem] * 9,
        out_specs=vmem,
    )(x.astype(jnp.bfloat16), w1, b1, w2, b2, w3, b3, w4, b4)


def init_linear(key, fan_in, fan_out):
    """Matches the PyTorch module: kaiming_uniform_(nonlinearity='relu') on the
    weight (bound = sqrt(2) * sqrt(3/fan_in)) and PyTorch's default bias init
    (uniform(-1/sqrt(fan_in), 1/sqrt(fan_in))).  Weight returned as
    (fan_in, fan_out) bf16 so the kernel computes x @ W + b."""
    kw, kb = jax.random.split(key)
    gain = jnp.sqrt(2.0)  # relu gain
    bound_w = gain * jnp.sqrt(3.0 / fan_in)
    w = jax.random.uniform(kw, (fan_in, fan_out), jnp.float32, -bound_w, bound_w)
    bound_b = 1.0 / jnp.sqrt(fan_in)
    b = jax.random.uniform(kb, (1, fan_out), jnp.float32, -bound_b, bound_b)
    return w.astype(jnp.bfloat16), b


def reference_forward(x, params):
    """Pure-JAX reference with the same bf16 weight / f32-accumulate path."""
    (w1, b1), (w2, b2), (w3, b3), (w4, b4) = params
    h = _selu(jnp.dot(x.astype(jnp.bfloat16), w1,
                      preferred_element_type=jnp.float32) + b1)
    h = _selu(jnp.dot(h.astype(jnp.bfloat16), w2,
                      preferred_element_type=jnp.float32) + b2)
    h = _selu(jnp.dot(h.astype(jnp.bfloat16), w3,
                      preferred_element_type=jnp.float32) + b3)
    logits = jnp.dot(h.astype(jnp.bfloat16), w4,
                     preferred_element_type=jnp.float32) + b4
    return jax.nn.softmax(logits, axis=1)


if __name__ == "__main__":
    key = jax.random.PRNGKey(0)
    k_x, k1, k2, k3, k4 = jax.random.split(key, 5)

    FEATURES = 32
    BATCH = 8

    # Only nn1..nn4 participate in forward(); nn5..nn8 are dead code in the
    # reference module, so they are not materialized.
    params = (
        init_linear(k1, FEATURES, HIDDEN1),
        init_linear(k2, HIDDEN1, HIDDEN2),
        init_linear(k3, HIDDEN2, HIDDEN3),
        init_linear(k4, HIDDEN3, OUT),
    )

    x = jax.random.normal(k_x, (BATCH, FEATURES), jnp.float32)

    out = jax.block_until_ready(fe_nn_forward(x, params))
    ref = jax.block_until_ready(reference_forward(x, params))

    # Sanity checks: shape, softmax rows sum to 1, matches pure-JAX reference.
    assert out.shape == (BATCH, OUT)
    row_sums = jnp.sum(out, axis=1)
    assert bool(jnp.all(jnp.abs(row_sums - 1.0) < 1e-3))
    assert bool(jnp.all(jnp.abs(out - ref) < 1e-2))

    print("KERNEL_OK")
</pallas_src>

<mosaic_0001>
module attributes {stable_mosaic.version = 11 : i64} {
  func.func @mlp_kernel(%arg0: memref<8x32xbf16, #tpu.memory_space<vmem>>, %arg1: memref<32x1024xbf16, #tpu.memory_space<vmem>>, %arg2: memref<1x1024xf32, #tpu.memory_space<vmem>>, %arg3: memref<1024x1024xbf16, #tpu.memory_space<vmem>>, %arg4: memref<1x1024xf32, #tpu.memory_space<vmem>>, %arg5: memref<1024x512xbf16, #tpu.memory_space<vmem>>, %arg6: memref<1x512xf32, #tpu.memory_space<vmem>>, %arg7: memref<512x8xbf16, #tpu.memory_space<vmem>>, %arg8: memref<1x8xf32, #tpu.memory_space<vmem>>, %arg9: memref<8x8xf32, #tpu.memory_space<vmem>>) attributes {dimension_semantics = [], scalar_prefetch = 0 : i64, scratch_operands = 0 : i64, tpu.core_type = #tpu.core_type<tc>} {
    %c0 = arith.constant 0 : index
    %c0_0 = arith.constant 0 : index
    %0 = vector.load %arg0[%c0, %c0_0] : memref<8x32xbf16, #tpu.memory_space<vmem>>, vector<8x32xbf16>
    %c0_1 = arith.constant 0 : index
    %c0_2 = arith.constant 0 : index
    %1 = vector.load %arg1[%c0_1, %c0_2] : memref<32x1024xbf16, #tpu.memory_space<vmem>>, vector<32x1024xbf16>
    %cst = arith.constant dense<0.000000e+00> : vector<8x1024xf32>
    %2 = tpu.matmul %0, %1, %cst {dimension_numbers = #tpu.dot_dimension_numbers<[1], [0], [0], [1], [0, 0, 1, 1], [], []>} : vector<8x32xbf16>, vector<32x1024xbf16>, vector<8x1024xf32> -> vector<8x1024xf32>
    %c0_3 = arith.constant 0 : index
    %c0_4 = arith.constant 0 : index
    %3 = vector.load %arg2[%c0_3, %c0_4] : memref<1x1024xf32, #tpu.memory_space<vmem>>, vector<1x1024xf32>
    %4 = vector.broadcast %3 : vector<1x1024xf32> to vector<8x1024xf32>
    %5 = arith.addf %2, %4 : vector<8x1024xf32>
    %cst_5 = arith.constant 0.000000e+00 : f32
    %6 = vector.broadcast %cst_5 : f32 to vector<8x1024xf32>
    %7 = arith.cmpf ogt, %5, %6 : vector<8x1024xf32>
    %8 = math.exp %5 : vector<8x1024xf32>
    %cst_6 = arith.constant 1.000000e+00 : f32
    %9 = vector.broadcast %cst_6 : f32 to vector<8x1024xf32>
    %10 = arith.subf %8, %9 : vector<8x1024xf32>
    %cst_7 = arith.constant 1.67326319 : f32
    %11 = vector.broadcast %cst_7 : f32 to vector<8x1024xf32>
    %12 = arith.mulf %11, %10 : vector<8x1024xf32>
    %13 = arith.select %7, %5, %12 : vector<8x1024xi1>, vector<8x1024xf32>
    %cst_8 = arith.constant 1.05070102 : f32
    %14 = vector.broadcast %cst_8 : f32 to vector<8x1024xf32>
    %15 = arith.mulf %14, %13 : vector<8x1024xf32>
    %16 = arith.truncf %15 : vector<8x1024xf32> to vector<8x1024xbf16>
    %c0_9 = arith.constant 0 : index
    %c0_10 = arith.constant 0 : index
    %17 = vector.load %arg3[%c0_9, %c0_10] : memref<1024x1024xbf16, #tpu.memory_space<vmem>>, vector<1024x1024xbf16>
    %cst_11 = arith.constant dense<0.000000e+00> : vector<8x1024xf32>
    %18 = tpu.matmul %16, %17, %cst_11 {dimension_numbers = #tpu.dot_dimension_numbers<[1], [0], [0], [1], [0, 0, 1, 1], [], []>} : vector<8x1024xbf16>, vector<1024x1024xbf16>, vector<8x1024xf32> -> vector<8x1024xf32>
    %c0_12 = arith.constant 0 : index
    %c0_13 = arith.constant 0 : index
    %19 = vector.load %arg4[%c0_12, %c0_13] : memref<1x1024xf32, #tpu.memory_space<vmem>>, vector<1x1024xf32>
    %20 = vector.broadcast %19 : vector<1x1024xf32> to vector<8x1024xf32>
    %21 = arith.addf %18, %20 : vector<8x1024xf32>
    %cst_14 = arith.constant 0.000000e+00 : f32
    %22 = vector.broadcast %cst_14 : f32 to vector<8x1024xf32>
    %23 = arith.cmpf ogt, %21, %22 : vector<8x1024xf32>
    %24 = math.exp %21 : vector<8x1024xf32>
    %cst_15 = arith.constant 1.000000e+00 : f32
    %25 = vector.broadcast %cst_15 : f32 to vector<8x1024xf32>
    %26 = arith.subf %24, %25 : vector<8x1024xf32>
    %cst_16 = arith.constant 1.67326319 : f32
    %27 = vector.broadcast %cst_16 : f32 to vector<8x1024xf32>
    %28 = arith.mulf %27, %26 : vector<8x1024xf32>
    %29 = arith.select %23, %21, %28 : vector<8x1024xi1>, vector<8x1024xf32>
    %cst_17 = arith.constant 1.05070102 : f32
    %30 = vector.broadcast %cst_17 : f32 to vector<8x1024xf32>
    %31 = arith.mulf %30, %29 : vector<8x1024xf32>
    %32 = arith.truncf %31 : vector<8x1024xf32> to vector<8x1024xbf16>
    %c0_18 = arith.constant 0 : index
    %c0_19 = arith.constant 0 : index
    %33 = vector.load %arg5[%c0_18, %c0_19] : memref<1024x512xbf16, #tpu.memory_space<vmem>>, vector<1024x512xbf16>
    %cst_20 = arith.constant dense<0.000000e+00> : vector<8x512xf32>
    %34 = tpu.matmul %32, %33, %cst_20 {dimension_numbers = #tpu.dot_dimension_numbers<[1], [0], [0], [1], [0, 0, 1, 1], [], []>} : vector<8x1024xbf16>, vector<1024x512xbf16>, vector<8x512xf32> -> vector<8x512xf32>
    %c0_21 = arith.constant 0 : index
    %c0_22 = arith.constant 0 : index
    %35 = vector.load %arg6[%c0_21, %c0_22] : memref<1x512xf32, #tpu.memory_space<vmem>>, vector<1x512xf32>
    %36 = vector.broadcast %35 : vector<1x512xf32> to vector<8x512xf32>
    %37 = arith.addf %34, %36 : vector<8x512xf32>
    %cst_23 = arith.constant 0.000000e+00 : f32
    %38 = vector.broadcast %cst_23 : f32 to vector<8x512xf32>
    %39 = arith.cmpf ogt, %37, %38 : vector<8x512xf32>
    %40 = math.exp %37 : vector<8x512xf32>
    %cst_24 = arith.constant 1.000000e+00 : f32
    %41 = vector.broadcast %cst_24 : f32 to vector<8x512xf32>
    %42 = arith.subf %40, %41 : vector<8x512xf32>
    %cst_25 = arith.constant 1.67326319 : f32
    %43 = vector.broadcast %cst_25 : f32 to vector<8x512xf32>
    %44 = arith.mulf %43, %42 : vector<8x512xf32>
    %45 = arith.select %39, %37, %44 : vector<8x512xi1>, vector<8x512xf32>
    %cst_26 = arith.constant 1.05070102 : f32
    %46 = vector.broadcast %cst_26 : f32 to vector<8x512xf32>
    %47 = arith.mulf %46, %45 : vector<8x512xf32>
    %48 = arith.truncf %47 : vector<8x512xf32> to vector<8x512xbf16>
    %c0_27 = arith.constant 0 : index
    %c0_28 = arith.constant 0 : index
    %49 = vector.load %arg7[%c0_27, %c0_28] : memref<512x8xbf16, #tpu.memory_space<vmem>>, vector<512x8xbf16>
    %cst_29 = arith.constant dense<0.000000e+00> : vector<8x8xf32>
    %50 = tpu.matmul %48, %49, %cst_29 {dimension_numbers = #tpu.dot_dimension_numbers<[1], [0], [0], [1], [0, 0, 1, 1], [], []>} : vector<8x512xbf16>, vector<512x8xbf16>, vector<8x8xf32> -> vector<8x8xf32>
    %c0_30 = arith.constant 0 : index
    %c0_31 = arith.constant 0 : index
    %51 = vector.load %arg8[%c0_30, %c0_31] : memref<1x8xf32, #tpu.memory_space<vmem>>, vector<1x8xf32>
    %52 = vector.broadcast %51 : vector<1x8xf32> to vector<8x8xf32>
    %53 = arith.addf %50, %52 : vector<8x8xf32>
    %cst_32 = arith.constant dense<0xFF800000> : vector<8xf32>
    %54 = vector.multi_reduction <maximumf>, %53, %cst_32 [1] : vector<8x8xf32> to vector<8xf32>
    %55 = vector.shape_cast %54 : vector<8xf32> to vector<8x1xf32>
    %56 = vector.broadcast %55 : vector<8x1xf32> to vector<8x8xf32>
    %57 = arith.subf %53, %56 : vector<8x8xf32>
    %58 = math.exp %57 : vector<8x8xf32>
    %cst_33 = arith.constant dense<0.000000e+00> : vector<8xf32>
    %59 = vector.multi_reduction <add>, %58, %cst_33 [1] : vector<8x8xf32> to vector<8xf32>
    %60 = vector.shape_cast %59 : vector<8xf32> to vector<8x1xf32>
    %61 = vector.broadcast %60 : vector<8x1xf32> to vector<8x8xf32>
    %62 = arith.divf %58, %61 : vector<8x8xf32>
    %c0_34 = arith.constant 0 : index
    %c0_35 = arith.constant 0 : index
    %63 = vector.load %arg9[%c0_34, %c0_35] : memref<8x8xf32, #tpu.memory_space<vmem>>, vector<8x8xf32>
    tpu.vector_store %arg9[%c0_34, %c0_35], %62 {strides = array<i32>} : memref<8x8xf32, #tpu.memory_space<vmem>>, vector<8x8xf32>,
    return
  }
}

</mosaic_0001>

<llo_original>
// kernel: fe_nn_forward.1
$region0: #{fe_nn_forward.1}
  #allocation0 [shape = 'u32[]', space=smem, size = 0x4, offset = 0x4, fixed_abs, tag = 'smem constant byte address 0x4 - core index']
  #allocation1 [shape = 'u32[144,128]{1,0:T(1,128)}', space=vmem, size = 0x12000, scoped, tag = 'internal scratch']
  %s0 = inlined_call_operand.vmem [shape: bf16[8,32], index: 0, kind: input, shape index: {}]
  %s1 = inlined_call_operand.hbm [shape: bf16[32,1024], index: 1, kind: input, shape index: {}]
  %s2 = inlined_call_operand.hbm [shape: f32[1,1024], index: 2, kind: input, shape index: {}]
  %s3 = inlined_call_operand.hbm [shape: bf16[1024,1024], index: 3, kind: input, shape index: {}]
  %s4 = inlined_call_operand.hbm [shape: f32[1,1024], index: 4, kind: input, shape index: {}]
  %s5 = inlined_call_operand.hbm [shape: bf16[1024,512], index: 5, kind: input, shape index: {}]
  %s6 = inlined_call_operand.hbm [shape: f32[1,512], index: 6, kind: input, shape index: {}]
  %s7 = inlined_call_operand.vmem [shape: bf16[512,8], index: 7, kind: input, shape index: {}]
  %s8 = inlined_call_operand.hbm [shape: f32[1,8], index: 8, kind: input, shape index: {}]
  %s9 = inlined_call_operand.hbm [shape: f32[8,8], index: 9, kind: output, shape index: {}]
  %s10 = sld [smem:[#allocation0]]
  $region74: #{fe_nn_forward.1} parent=0
    _
  %s12 = ssub.s32 1, %s10
  %s13 = scalar_select 0, %s12, %s10
  $region1: #{fe_nn_forward.1} parent=0
    #allocation2 [shape = 'u8[65536]{0}', space=vmem, size = 0x10000, scoped, tag = 'input window, operand 1, single buffered']
    #allocation3 [shape = 's32[1]{0}', space=sflag, size = 0x4, scoped, tag = 'scoped memory for fe_nn_forward.1']
    #allocation4 [shape = 's32[1]{0}', space=sflag, size = 0x4, scoped, tag = 'scoped memory for fe_nn_forward.1']
    #allocation5 [shape = 'u8[4096]{0}', space=vmem, size = 0x1000, scoped, tag = 'input window, operand 2, single buffered']
    #allocation6 [shape = 's32[1]{0}', space=sflag, size = 0x4, scoped, tag = 'scoped memory for fe_nn_forward.1']
    #allocation7 [shape = 'u8[2097152]{0}', space=vmem, size = 0x200000, scoped, tag = 'input window, operand 3, single buffered']
    #allocation8 [shape = 'u8[4096]{0}', space=vmem, size = 0x1000, scoped, tag = 'input window, operand 4, single buffered']
    #allocation9 [shape = 's32[1]{0}', space=sflag, size = 0x4, scoped, tag = 'scoped memory for fe_nn_forward.1']
    #allocation10 [shape = 'u8[1048576]{0}', space=vmem, size = 0x100000, scoped, tag = 'input window, operand 5, single buffered']
    #allocation11 [shape = 'u8[2048]{0}', space=vmem, size = 0x800, scoped, tag = 'input window, operand 6, single buffered']
    #allocation12 [shape = 's32[1]{0}', space=sflag, size = 0x4, scoped, tag = 'scoped memory for fe_nn_forward.1']
    #allocation13 [shape = 'u8[512]{0}', space=vmem, size = 0x400, scoped, tag = 'input window, operand 8, single buffered']
    #allocation14 [shape = 'u8[4096]{0}', space=vmem, size = 0x1000, scoped, tag = 'output window, operand 0, single buffered']
    %14 = vsyncpa [#allocation3], 0
    %15 = vsyncpa [#allocation6], 0
    %16 = vsyncpa [#allocation9], 0
    %17 = vsyncpa [#allocation12], 0
    %18 = vsyncpa [#allocation4], 0
    // Predicated region
    $region2: #{fe_nn_forward.1} parent=1 // pred_check
      _
    $region3: #{fe_nn_forward.1} parent=1 // pred_check_branch
      %20 = sbr.rel (0) target = $region5
    $region4: #{fe_nn_forward.1} parent=1 // pred_region
      _
    $region5: #{fe_nn_forward.1} parent=1 // pred_fallthru
      _
    // Predicated region
    $region6: #{fe_nn_forward.1} parent=1 // pred_check
      _
    $region7: #{fe_nn_forward.1} parent=1 // pred_check_branch
      %22 = sbr.rel (0) target = $region9
    $region8: #{fe_nn_forward.1} parent=1 // pred_region
      %s24 = ssub.s32 2048, 2048
      %25 = vsyncadd [#allocation3], %s24
      %s26 = sshll.u32 [#allocation2], 4
      %s27 = int_to_ptr.vmem [resolvable:$true] %s26
      %32 = dma.hbm_to_vmem [thread:$0]  %s1, 2048, %s27, [#allocation3], 512, 512, 32
    $region9: #{fe_nn_forward.1} parent=1 // pred_fallthru
      _
    // Predicated region
    $region10: #{fe_nn_forward.1} parent=1 // pred_check
      _
    $region11: #{fe_nn_forward.1} parent=1 // pred_check_branch
      %34 = sbr.rel (0) target = $region13
    $region12: #{fe_nn_forward.1} parent=1 // pred_region
      %s36 = ssub.s32 128, 128
      %37 = vsyncadd [#allocation6], %s36
      %s39 = sshll.u32 [#allocation5], 4
      %s40 = int_to_ptr.vmem [resolvable:$true] %s39
      %42 = dma.hbm_to_vmem [thread:$0]  %s2, 128, %s40, [#allocation6]
    $region13: #{fe_nn_forward.1} parent=1 // pred_fallthru
      _
    // Predicated region
    $region14: #{fe_nn_forward.1} parent=1 // pred_check
      _
    $region15: #{fe_nn_forward.1} parent=1 // pred_check_branch
      %44 = sbr.rel (0) target = $region17
    $region16: #{fe_nn_forward.1} parent=1 // pred_region
      %s46 = ssub.s32 65536, 65536
      %47 = vsyncadd [#allocation6], %s46
      %s48 = sshll.u32 [#allocation7], 4
      %s49 = int_to_ptr.vmem [resolvable:$true] %s48
      %54 = dma.hbm_to_vmem [thread:$0]  %s3, 65536, %s49, [#allocation6], 512, 512, 32
    $region17: #{fe_nn_forward.1} parent=1 // pred_fallthru
      _
    // Predicated region
    $region18: #{fe_nn_forward.1} parent=1 // pred_check
      _
    $region19: #{fe_nn_forward.1} parent=1 // pred_check_branch
      %56 = sbr.rel (0) target = $region21
    $region20: #{fe_nn_forward.1} parent=1 // pred_region
      %s58 = ssub.s32 128, 128
      %59 = vsyncadd [#allocation9], %s58
      %s61 = sshll.u32 [#allocation8], 4
      %s62 = int_to_ptr.vmem [resolvable:$true] %s61
      %64 = dma.hbm_to_vmem [thread:$0]  %s4, 128, %s62, [#allocation9]
    $region21: #{fe_nn_forward.1} parent=1 // pred_fallthru
      _
    // Predicated region
    $region22: #{fe_nn_forward.1} parent=1 // pred_check
      _
    $region23: #{fe_nn_forward.1} parent=1 // pred_check_branch
      %66 = sbr.rel (0) target = $region25
    $region24: #{fe_nn_forward.1} parent=1 // pred_region
      %s68 = ssub.s32 32768, 32768
      %69 = vsyncadd [#allocation9], %s68
      %s70 = sshll.u32 [#allocation10], 4
      %s71 = int_to_ptr.vmem [resolvable:$true] %s70
      %76 = dma.hbm_to_vmem [thread:$0]  %s5, 32768, %s71, [#allocation9], 256, 256, 16
    $region25: #{fe_nn_forward.1} parent=1 // pred_fallthru
      _
    // Predicated region
    $region26: #{fe_nn_forward.1} parent=1 // pred_check
      _
    $region27: #{fe_nn_forward.1} parent=1 // pred_check_branch
      %78 = sbr.rel (0) target = $region29
    $region28: #{fe_nn_forward.1} parent=1 // pred_region
      %s80 = ssub.s32 64, 64
      %81 = vsyncadd [#allocation12], %s80
      %s83 = sshll.u32 [#allocation11], 4
      %s84 = int_to_ptr.vmem [resolvable:$true] %s83
      %86 = dma.hbm_to_vmem [thread:$0]  %s6, 64, %s84, [#allocation12]
    $region29: #{fe_nn_forward.1} parent=1 // pred_fallthru
      _
    // Predicated region
    $region30: #{fe_nn_forward.1} parent=1 // pred_check
      _
    $region31: #{fe_nn_forward.1} parent=1 // pred_check_branch
      %88 = sbr.rel (0) target = $region33
    $region32: #{fe_nn_forward.1} parent=1 // pred_region
      _
    $region33: #{fe_nn_forward.1} parent=1 // pred_fallthru
      _
    // Predicated region
    $region34: #{fe_nn_forward.1} parent=1 // pred_check
      _
    $region35: #{fe_nn_forward.1} parent=1 // pred_check_branch
      %90 = sbr.rel (0) target = $region37
    $region36: #{fe_nn_forward.1} parent=1 // pred_region
      %s92 = ssub.s32 16, 16
      %93 = vsyncadd [#allocation12], %s92
      %s95 = sshll.u32 [#allocation13], 4
      %s96 = int_to_ptr.vmem [resolvable:$true] %s95
      %98 = dma.hbm_to_vmem [thread:$0]  %s8, 16, %s96, [#allocation12]
    $region37: #{fe_nn_forward.1} parent=1 // pred_fallthru
      _
    // Predicated region
    $region38: #{fe_nn_forward.1} parent=1 // pred_check
      _
    $region39: #{fe_nn_forward.1} parent=1 // pred_check_branch
      %100 = sbr.rel (0) target = $region41
    $region40: #{fe_nn_forward.1} parent=1 // pred_region
      %101 = dma.done [#allocation3], 2048
    $region41: #{fe_nn_forward.1} parent=1 // pred_fallthru
      _
    // Predicated region
    $region42: #{fe_nn_forward.1} parent=1 // pred_check
      _
    $region43: #{fe_nn_forward.1} parent=1 // pred_check_branch
      %103 = sbr.rel (0) target = $region45
    $region44: #{fe_nn_forward.1} parent=1 // pred_region
      %104 = dma.done [#allocation6], 128
    $region45: #{fe_nn_forward.1} parent=1 // pred_fallthru
      _
    // Predicated region
    $region46: #{fe_nn_forward.1} parent=1 // pred_check
      _
    $region47: #{fe_nn_forward.1} parent=1 // pred_check_branch
      %106 = sbr.rel (0) target = $region49
    $region48: #{fe_nn_forward.1} parent=1 // pred_region
      %107 = dma.done [#allocation6], 65536
    $region49: #{fe_nn_forward.1} parent=1 // pred_fallthru
      _
    // Predicated region
    $region50: #{fe_nn_forward.1} parent=1 // pred_check
      _
    $region51: #{fe_nn_forward.1} parent=1 // pred_check_branch
      %109 = sbr.rel (0) target = $region53
    $region52: #{fe_nn_forward.1} parent=1 // pred_region
      %110 = dma.done [#allocation9], 128
    $region53: #{fe_nn_forward.1} parent=1 // pred_fallthru
      _
    // Predicated region
    $region54: #{fe_nn_forward.1} parent=1 // pred_check
      _
    $region55: #{fe_nn_forward.1} parent=1 // pred_check_branch
      %112 = sbr.rel (0) target = $region57
    $region56: #{fe_nn_forward.1} parent=1 // pred_region
      %113 = dma.done [#allocation9], 32768
    $region57: #{fe_nn_forward.1} parent=1 // pred_fallthru
      _
    // Predicated region
    $region58: #{fe_nn_forward.1} parent=1 // pred_check
      _
    $region59: #{fe_nn_forward.1} parent=1 // pred_check_branch
      %115 = sbr.rel (0) target = $region61
    $region60: #{fe_nn_forward.1} parent=1 // pred_region
      %116 = dma.done [#allocation12], 64
    $region61: #{fe_nn_forward.1} parent=1 // pred_fallthru
      _
    // Predicated region
    $region62: #{fe_nn_forward.1} parent=1 // pred_check
      _
    $region63: #{fe_nn_forward.1} parent=1 // pred_check_branch
      %118 = sbr.rel (0) target = $region65
    $region64: #{fe_nn_forward.1} parent=1 // pred_region
      %119 = dma.done [#allocation12], 16
    $region65: #{fe_nn_forward.1} parent=1 // pred_fallthru
      _
    %v121 = vld [vmem:[%s0] sm:$0xf]
    %v122 = vld [vmem:[#allocation2] sm:$0xff]
    %v123 = vld [vmem:[#allocation2 + $0x8] sm:$0xff]
    %v124 = vld [vmem:[#allocation2 + $0x10] sm:$0xff]
    %v125 = vld [vmem:[#allocation2 + $0x18] sm:$0xff]
    %v126 = vld [vmem:[#allocation2 + $0x20] sm:$0xff]
    %v127 = vld [vmem:[#allocation2 + $0x28] sm:$0xff]
    %v128 = vld [vmem:[#allocation2 + $0x30] sm:$0xff]
    %v129 = vld [vmem:[#allocation2 + $0x38] sm:$0xff]
    %v130 = vld [vmem:[#allocation2 + $0x40] sm:$0xff]
    %v131 = vld [vmem:[#allocation2 + $0x48] sm:$0xff]
    %v132 = vld [vmem:[#allocation2 + $0x50] sm:$0xff]
    %v133 = vld [vmem:[#allocation2 + $0x58] sm:$0xff]
    %v134 = vld [vmem:[#allocation2 + $0x60] sm:$0xff]
    %v135 = vld [vmem:[#allocation2 + $0x68] sm:$0xff]
    %v136 = vld [vmem:[#allocation2 + $0x70] sm:$0xff]
    %v137 = vld [vmem:[#allocation2 + $0x78] sm:$0xff]
    %v138 = vld [vmem:[#allocation5] sm:$0xff]
    %v140 = vlaneseq
    %v141 = vshrl.u32 %v140, 7
    %v142 = vsub.s32 0, %v141
    %v143 = vrot.slane %v138, %v142
    %v144 = vlaneseq
    %v145 = vshrl.u32 %v144, 7
    %v146 = vsub.s32 1, %v145
    %v147 = vrot.slane %v138, %v146
    %v148 = vlaneseq
    %v149 = vshrl.u32 %v148, 7
    %v150 = vsub.s32 2, %v149
    %v151 = vrot.slane %v138, %v150
    %v152 = vlaneseq
    %v153 = vshrl.u32 %v152, 7
    %v154 = vsub.s32 3, %v153
    %v155 = vrot.slane %v138, %v154
    %v156 = vlaneseq
    %v157 = vshrl.u32 %v156, 7
    %v158 = vsub.s32 4, %v157
    %v159 = vrot.slane %v138, %v158
    %v160 = vlaneseq
    %v161 = vshrl.u32 %v160, 7
    %v162 = vsub.s32 5, %v161
    %v163 = vrot.slane %v138, %v162
    %v164 = vlaneseq
    %v165 = vshrl.u32 %v164, 7
    %v166 = vsub.s32 6, %v165
    %v167 = vrot.slane %v138, %v166
    %v168 = vlaneseq
    %v169 = vshrl.u32 %v168, 7
    %v170 = vsub.s32 7, %v169
    %v171 = vrot.slane %v138, %v170
    %v196 = vunpack.c.l.b16 %v122
    %v197 = vunpack.c.h.b16 %v122
    %v198 = vunpack.c.l.b16 %v123
    %v199 = vunpack.c.h.b16 %v123
    %v200 = vunpack.c.l.b16 %v124
    %v201 = vunpack.c.h.b16 %v124
    %v202 = vunpack.c.l.b16 %v125
    %v203 = vunpack.c.h.b16 %v125
    %v204 = vunpack.c.l.b16 %v126
    %v205 = vunpack.c.h.b16 %v126
    %v206 = vunpack.c.l.b16 %v127
    %v207 = vunpack.c.h.b16 %v127
    %v208 = vunpack.c.l.b16 %v128
    %v209 = vunpack.c.h.b16 %v128
    %v210 = vunpack.c.l.b16 %v129
    %v211 = vunpack.c.h.b16 %v129
    %v212 = vunpack.c.l.b16 %v130
    %v213 = vunpack.c.h.b16 %v130
    %v214 = vunpack.c.l.b16 %v131
    %v215 = vunpack.c.h.b16 %v131
    %v216 = vunpack.c.l.b16 %v132
    %v217 = vunpack.c.h.b16 %v132
    %v218 = vunpack.c.l.b16 %v133
    %v219 = vunpack.c.h.b16 %v133
    %v220 = vunpack.c.l.b16 %v134
    %v221 = vunpack.c.h.b16 %v134
    %v222 = vunpack.c.l.b16 %v135
    %v223 = vunpack.c.h.b16 %v135
    %v224 = vunpack.c.l.b16 %v136
    %v225 = vunpack.c.h.b16 %v136
    %v226 = vunpack.c.l.b16 %v137
    %v227 = vunpack.c.h.b16 %v137
    %v228 = vpack.c.b16 %v204, %v196
    %v229 = vpack.c.b16 %v205, %v197
    %v230 = vpack.c.b16 %v206, %v198
    %v231 = vpack.c.b16 %v207, %v199
    %v232 = vpack.c.b16 %v208, %v200
    %v233 = vpack.c.b16 %v209, %v201
    %v234 = vpack.c.b16 %v210, %v202
    %v235 = vpack.c.b16 %v211, %v203
    %v236 = vpack.c.b16 %v220, %v212
    %v237 = vpack.c.b16 %v221, %v213
    %v238 = vpack.c.b16 %v222, %v214
    %v239 = vpack.c.b16 %v223, %v215
    %v240 = vpack.c.b16 %v224, %v216
    %v241 = vpack.c.b16 %v225, %v217
    %v242 = vpack.c.b16 %v226, %v218
    %v243 = vpack.c.b16 %v227, %v219
    %vm260 = vcmask 261120
    %v262 = vsel %vm260, %v121, 0
    %264 = vmatprep.subr.bf16.mxu0 0
    %265 = vmatpush1.bf16.msra.mxu0 0
    %266 = vmatprep.subr.bf16.mxu0 0
    %267 = vmatpush1.bf16.msra.mxu0 0
    %268 = vmatprep.subr.bf16.mxu0 0
    %269 = vmatpush1.bf16.msra.mxu0 0
    %270 = vmatprep.subr.bf16.mxu0 0
    %271 = vmatpush1.bf16.msra.mxu0 0
    %272 = vmatprep.subr.bf16.mxu0 0
    %273 = vmatpush1.bf16.msra.mxu0 0
    %274 = vmatprep.subr.bf16.mxu0 0
    %275 = vmatpush1.bf16.msra.mxu0 0
    %276 = vmatprep.subr.bf16.mxu0 %v237
    %277 = vmatpush1.bf16.msra.mxu0 %v236
    %278 = vmatprep.subr.bf16.mxu0 %v229
    %279 = vmatpush1.bf16.msra.mxu0 %v228
    %280 = vmatprep.subr.bf16.mxu0 0
    %281 = vmatpush2.bf16.msra.mxu0 0
    %282 = vmatprep.subr.bf16.mxu0 0
    %283 = vmatpush2.bf16.msra.mxu0 0
    %284 = vmatprep.subr.bf16.mxu0 0
    %285 = vmatpush2.bf16.msra.mxu0 0
    %286 = vmatprep.subr.bf16.mxu0 0
    %287 = vmatpush2.bf16.msra.mxu0 0
    %288 = vmatprep.subr.bf16.mxu0 0
    %289 = vmatpush2.bf16.msra.mxu0 0
    %290 = vmatprep.subr.bf16.mxu0 0
    %291 = vmatpush2.bf16.msra.mxu0 0
    %292 = vmatprep.subr.bf16.mxu0 0
    %293 = vmatpush2.bf16.msra.mxu0 0
    %294 = vmatprep.subr.bf16.mxu0 0
    %295 = vmatpush2.bf16.msra.mxu0 0
    %296 = vmatprep.mubr.bf16.mxu0 0
    %297 = vmatmul.mubr.bf16.gmra.mxu0 %v262
    %v298 = vpop.f32.mrf.mxu0
    %v299 = vadd.f32 %v143, %v298
    %v300 = vpop.f32.mrf.mxu0
    %v301 = vadd.f32 %v147, %v300
    %v302 = vpop.f32.mrf.mxu0
    %v303 = vpop.f32.mrf.mxu0
    %304 = vdwg.mxu0
    %305 = vmatprep.subr.bf16.mxu0 0
    %306 = vmatpush1.bf16.msra.mxu0 0
    %307 = vmatprep.subr.bf16.mxu0 0
    %308 = vmatpush1.bf16.msra.mxu0 0
    %309 = vmatprep.subr.bf16.mxu0 0
    %310 = vmatpush1.bf16.msra.mxu0 0
    %311 = vmatprep.subr.bf16.mxu0 0
    %312 = vmatpush1.bf16.msra.mxu0 0
    %313 = vmatprep.subr.bf16.mxu0 0
    %314 = vmatpush1.bf16.msra.mxu0 0
    %315 = vmatprep.subr.bf16.mxu0 0
    %316 = vmatpush1.bf16.msra.mxu0 0
    %317 = vmatprep.subr.bf16.mxu0 %v239
    %318 = vmatpush1.bf16.msra.mxu0 %v238
    %319 = vmatprep.subr.bf16.mxu0 %v231
    %320 = vmatpush1.bf16.msra.mxu0 %v230
    %321 = vmatprep.subr.bf16.mxu0 0
    %322 = vmatpush2.bf16.msra.mxu0 0
    %323 = vmatprep.subr.bf16.mxu0 0
    %324 = vmatpush2.bf16.msra.mxu0 0
    %325 = vmatprep.subr.bf16.mxu0 0
    %326 = vmatpush2.bf16.msra.mxu0 0
    %327 = vmatprep.subr.bf16.mxu0 0
    %328 = vmatpush2.bf16.msra.mxu0 0
    %329 = vmatprep.subr.bf16.mxu0 0
    %330 = vmatpush2.bf16.msra.mxu0 0
    %331 = vmatprep.subr.bf16.mxu0 0
    %332 = vmatpush2.bf16.msra.mxu0 0
    %333 = vmatprep.subr.bf16.mxu0 0
    %334 = vmatpush2.bf16.msra.mxu0 0
    %335 = vmatprep.subr.bf16.mxu0 0
    %336 = vmatpush2.bf16.msra.mxu0 0
    %337 = vmatprep.mubr.bf16.mxu0 0
    %338 = vmatmul.mubr.bf16.gmra.mxu0 %v262
    %v339 = vpop.f32.mrf.mxu0
    %v340 = vadd.f32 %v151, %v339
    %v341 = vpop.f32.mrf.mxu0
    %v342 = vadd.f32 %v155, %v341
    %v343 = vpop.f32.mrf.mxu0
    %v344 = vpop.f32.mrf.mxu0
    %345 = vdwg.mxu0
    %346 = vmatprep.subr.bf16.mxu0 0
    %347 = vmatpush1.bf16.msra.mxu0 0
    %348 = vmatprep.subr.bf16.mxu0 0
    %349 = vmatpush1.bf16.msra.mxu0 0
    %350 = vmatprep.subr.bf16.mxu0 0
    %351 = vmatpush1.bf16.msra.mxu0 0
    %352 = vmatprep.subr.bf16.mxu0 0
    %353 = vmatpush1.bf16.msra.mxu0 0
    %354 = vmatprep.subr.bf16.mxu0 0
    %355 = vmatpush1.bf16.msra.mxu0 0
    %356 = vmatprep.subr.bf16.mxu0 0
    %357 = vmatpush1.bf16.msra.mxu0 0
    %358 = vmatprep.subr.bf16.mxu0 %v241
    %359 = vmatpush1.bf16.msra.mxu0 %v240
    %360 = vmatprep.subr.bf16.mxu0 %v233
    %361 = vmatpush1.bf16.msra.mxu0 %v232
    %362 = vmatprep.subr.bf16.mxu0 0
    %363 = vmatpush2.bf16.msra.mxu0 0
    %364 = vmatprep.subr.bf16.mxu0 0
    %365 = vmatpush2.bf16.msra.mxu0 0
    %366 = vmatprep.subr.bf16.mxu0 0
    %367 = vmatpush2.bf16.msra.mxu0 0
    %368 = vmatprep.subr.bf16.mxu0 0
    %369 = vmatpush2.bf16.msra.mxu0 0
    %370 = vmatprep.subr.bf16.mxu0 0
    %371 = vmatpush2.bf16.msra.mxu0 0
    %372 = vmatprep.subr.bf16.mxu0 0
    %373 = vmatpush2.bf16.msra.mxu0 0
    %374 = vmatprep.subr.bf16.mxu0 0
    %375 = vmatpush2.bf16.msra.mxu0 0
    %376 = vmatprep.subr.bf16.mxu0 0
    %377 = vmatpush2.bf16.msra.mxu0 0
    %378 = vmatprep.mubr.bf16.mxu0 0
    %379 = vmatmul.mubr.bf16.gmra.mxu0 %v262
    %v380 = vpop.f32.mrf.mxu0
    %v381 = vadd.f32 %v159, %v380
    %v382 = vpop.f32.mrf.mxu0
    %v383 = vadd.f32 %v163, %v382
    %v384 = vpop.f32.mrf.mxu0
    %v385 = vpop.f32.mrf.mxu0
    %386 = vdwg.mxu0
    %387 = vmatprep.subr.bf16.mxu0 0
    %388 = vmatpush1.bf16.msra.mxu0 0
    %389 = vmatprep.subr.bf16.mxu0 0
    %390 = vmatpush1.bf16.msra.mxu0 0
    %391 = vmatprep.subr.bf16.mxu0 0
    %392 = vmatpush1.bf16.msra.mxu0 0
    %393 = vmatprep.subr.bf16.mxu0 0
    %394 = vmatpush1.bf16.msra.mxu0 0
    %395 = vmatprep.subr.bf16.mxu0 0
    %396 = vmatpush1.bf16.msra.mxu0 0
    %397 = vmatprep.subr.bf16.mxu0 0
    %398 = vmatpush1.bf16.msra.mxu0 0
    %399 = vmatprep.subr.bf16.mxu0 %v243
    %400 = vmatpush1.bf16.msra.mxu0 %v242
    %401 = vmatprep.subr.bf16.mxu0 %v235
    %402 = vmatpush1.bf16.msra.mxu0 %v234
    %403 = vmatprep.subr.bf16.mxu0 0
    %404 = vmatpush2.bf16.msra.mxu0 0
    %405 = vmatprep.subr.bf16.mxu0 0
    %406 = vmatpush2.bf16.msra.mxu0 0
    %407 = vmatprep.subr.bf16.mxu0 0
    %408 = vmatpush2.bf16.msra.mxu0 0
    %409 = vmatprep.subr.bf16.mxu0 0
    %410 = vmatpush2.bf16.msra.mxu0 0
    %411 = vmatprep.subr.bf16.mxu0 0
    %412 = vmatpush2.bf16.msra.mxu0 0
    %413 = vmatprep.subr.bf16.mxu0 0
    %414 = vmatpush2.bf16.msra.mxu0 0
    %415 = vmatprep.subr.bf16.mxu0 0
    %416 = vmatpush2.bf16.msra.mxu0 0
    %417 = vmatprep.subr.bf16.mxu0 0
    %418 = vmatpush2.bf16.msra.mxu0 0
    %419 = vmatprep.mubr.bf16.mxu0 0
    %420 = vmatmul.mubr.bf16.gmra.mxu0 %v262
    %v421 = vpop.f32.mrf.mxu0
    %v422 = vadd.f32 %v167, %v421
    %v423 = vpop.f32.mrf.mxu0
    %v424 = vadd.f32 %v171, %v423
    %v425 = vpop.f32.mrf.mxu0
    %v426 = vpop.f32.mrf.mxu0
    %427 = vdwg.mxu0
    %vm428 = vcmp.gt.f32.partialorder %v299, 0.0
    %vm429 = vcmp.gt.f32.partialorder %v301, 0.0
    %vm430 = vcmp.gt.f32.partialorder %v340, 0.0
    %vm431 = vcmp.gt.f32.partialorder %v342, 0.0
    %vm432 = vcmp.gt.f32.partialorder %v381, 0.0
    %vm433 = vcmp.gt.f32.partialorder %v383, 0.0
    %vm434 = vcmp.gt.f32.partialorder %v422, 0.0
    %vm435 = vcmp.gt.f32.partialorder %v424, 0.0
    %v436 = vmul.f32 %v299, 1.442695
    %v437 = vpow.pop %v436
    %v438 = vmul.f32 %v301, 1.442695
    %v439 = vpow.pop %v438
    %v440 = vmul.f32 %v340, 1.442695
    %v441 = vpow.pop %v440
    %v442 = vmul.f32 %v342, 1.442695
    %v443 = vpow.pop %v442
    %v444 = vmul.f32 %v381, 1.442695
    %v445 = vpow.pop %v444
    %v446 = vmul.f32 %v383, 1.442695
    %v447 = vpow.pop %v446
    %v448 = vmul.f32 %v422, 1.442695
    %v449 = vpow.pop %v448
    %v450 = vmul.f32 %v424, 1.442695
    %v451 = vpow.pop %v450
    %v452 = vsub.f32 %v437, 1.0
    %v453 = vsub.f32 %v439, 1.0
    %v454 = vsub.f32 %v441, 1.0
    %v455 = vsub.f32 %v443, 1.0
    %v456 = vsub.f32 %v445, 1.0
    %v457 = vsub.f32 %v447, 1.0
    %v458 = vsub.f32 %v449, 1.0
    %v459 = vsub.f32 %v451, 1.0
    %v460 = vmul.f32 %v452, 1.6732632
    %v461 = vmul.f32 %v453, 1.6732632
    %v462 = vmul.f32 %v454, 1.6732632
    %v463 = vmul.f32 %v455, 1.6732632
    %v464 = vmul.f32 %v456, 1.6732632
    %v465 = vmul.f32 %v457, 1.6732632
    %v466 = vmul.f32 %v458, 1.6732632
    %v467 = vmul.f32 %v459, 1.6732632
    %v468 = vsel %vm428, %v299, %v460
    %v469 = vsel %vm429, %v301, %v461
    %v470 = vsel %vm430, %v340, %v462
    %v471 = vsel %vm431, %v342, %v463
    %v472 = vsel %vm432, %v381, %v464
    %v473 = vsel %vm433, %v383, %v465
    %v474 = vsel %vm434, %v422, %v466
    %v475 = vsel %vm435, %v424, %v467
    %v476 = vmul.f32 %v468, 1.050701
    %v477 = vmul.f32 %v469, 1.050701
    %v478 = vmul.f32 %v470, 1.050701
    %v479 = vmul.f32 %v471, 1.050701
    %v480 = vmul.f32 %v472, 1.050701
    %v481 = vmul.f32 %v473, 1.050701
    %v482 = vmul.f32 %v474, 1.050701
    %v483 = vmul.f32 %v475, 1.050701
    %v484 = vpack.c.bf16 %v476, %v476
    %v485 = vpack.c.bf16 %v477, %v477
    %v486 = vpack.c.bf16 %v478, %v478
    %v487 = vpack.c.bf16 %v479, %v479
    %v488 = vpack.c.bf16 %v480, %v480
    %v489 = vpack.c.bf16 %v481, %v481
    %v490 = vpack.c.bf16 %v482, %v482
    %v491 = vpack.c.bf16 %v483, %v483
    %v492 = vld [vmem:[#allocation7] sm:$0xff]
    %v493 = vld [vmem:[#allocation7 + $0x8] sm:$0xff]
    %v494 = vld [vmem:[#allocation7 + $0x10] sm:$0xff]
    %v495 = vld [vmem:[#allocation7 + $0x18] sm:$0xff]
    %v496 = vld [vmem:[#allocation7 + $0x20] sm:$0xff]
    %v497 = vld [vmem:[#allocation7 + $0x28] sm:$0xff]
    %v498 = vld [vmem:[#allocation7 + $0x30] sm:$0xff]
    %v499 = vld [vmem:[#allocation7 + $0x38] sm:$0xff]
    %v500 = vld [vmem:[#allocation7 + $0x40] sm:$0xff]
    %v501 = vld [vmem:[#allocation7 + $0x48] sm:$0xff]
    %v502 = vld [vmem:[#allocation7 + $0x50] sm:$0xff]
    %v503 = vld [vmem:[#allocation7 + $0x58] sm:$0xff]
    %v504 = vld [vmem:[#allocation7 + $0x60] sm:$0xff]
    %v505 = vld [vmem:[#allocation7 + $0x68] sm:$0xff]
    %v506 = vld [vmem:[#allocation7 + $0x70] sm:$0xff]
    %v507 = vld [vmem:[#allocation7 + $0x78] sm:$0xff]
    %v508 = vld [vmem:[#allocation7 + $0x80] sm:$0xff]
    %v509 = vld [vmem:[#allocation7 + $0x88] sm:$0xff]
    %v510 = vld [vmem:[#allocation7 + $0x90] sm:$0xff]
    %v511 = vld [vmem:[#allocation7 + $0x98] sm:$0xff]
    %v512 = vld [vmem:[#allocation7 + $0xa0] sm:$0xff]
    %v513 = vld [vmem:[#allocation7 + $0xa8] sm:$0xff]
    %v514 = vld [vmem:[#allocation7 + $0xb0] sm:$0xff]
    %v515 = vld [vmem:[#allocation7 + $0xb8] sm:$0xff]
    %v516 = vld [vmem:[#allocation7 + $0xc0] sm:$0xff]
    %v517 = vld [vmem:[#allocation7 + $0xc8] sm:$0xff]
    %v518 = vld [vmem:[#allocation7 + $0xd0] sm:$0xff]
    %v519 = vld [vmem:[#allocation7 + $0xd8] sm:$0xff]
    %v520 = vld [vmem:[#allocation7 + $0xe0] sm:$0xff]
    %v521 = vld [vmem:[#allocation7 + $0xe8] sm:$0xff]
    %v522 = vld [vmem:[#allocation7 + $0xf0] sm:$0xff]
    %v523 = vld [vmem:[#allocation7 + $0xf8] sm:$0xff]
    %v524 = vld [vmem:[#allocation7 + $0x100] sm:$0xff]
    %v525 = vld [vmem:[#allocation7 + $0x108] sm:$0xff]
    %v526 = vld [vmem:[#allocation7 + $0x110] sm:$0xff]
    %v527 = vld [vmem:[#allocation7 + $0x118] sm:$0xff]
    %v528 = vld [vmem:[#allocation7 + $0x120] sm:$0xff]
    %v529 = vld [vmem:[#allocation7 + $0x128] sm:$0xff]
    %v530 = vld [vmem:[#allocation7 + $0x130] sm:$0xff]
    %v531 = vld [vmem:[#allocation7 + $0x138] sm:$0xff]
    %v532 = vld [vmem:[#allocation7 + $0x140] sm:$0xff]
    %v533 = vld [vmem:[#allocation7 + $0x148] sm:$0xff]
    %v534 = vld [vmem:[#allocation7 + $0x150] sm:$0xff]
    %v535 = vld [vmem:[#allocation7 + $0x158] sm:$0xff]
    %v536 = vld [vmem:[#allocation7 + $0x160] sm:$0xff]
    %v537 = vld [vmem:[#allocation7 + $0x168] sm:$0xff]
    %v538 = vld [vmem:[#allocation7 + $0x170] sm:$0xff]
    %v539 = vld [vmem:[#allocation7 + $0x178] sm:$0xff]
    %v540 = vld [vmem:[#allocation7 + $0x180] sm:$0xff]
    %v541 = vld [vmem:[#allocation7 + $0x188] sm:$0xff]
    %v542 = vld [vmem:[#allocation7 + $0x190] sm:$0xff]
    %v543 = vld [vmem:[#allocation7 + $0x198] sm:$0xff]
    %v544 = vld [vmem:[#allocation7 + $0x1a0] sm:$0xff]
    %v545 = vld [vmem:[#allocation7 + $0x1a8] sm:$0xff]
    %v546 = vld [vmem:[#allocation7 + $0x1b0] sm:$0xff]
    %v547 = vld [vmem:[#allocation7 + $0x1b8] sm:$0xff]
    %v548 = vld [vmem:[#allocation7 + $0x1c0] sm:$0xff]
    %v549 = vld [vmem:[#allocation7 + $0x1c8] sm:$0xff]
    %v550 = vld [vmem:[#allocation7 + $0x1d0] sm:$0xff]
    %v551 = vld [vmem:[#allocation7 + $0x1d8] sm:$0xff]
    %v552 = vld [vmem:[#allocation7 + $0x1e0] sm:$0xff]
    %v553 = vld [vmem:[#allocation7 + $0x1e8] sm:$0xff]
    %v554 = vld [vmem:[#allocation7 + $0x1f0] sm:$0xff]
    %v555 = vld [vmem:[#allocation7 + $0x1f8] sm:$0xff]
    %v556 = vld [vmem:[#allocation7 + $0x200] sm:$0xff]
    %v557 = vld [vmem:[#allocation7 + $0x208] sm:$0xff]
    %v558 = vld [vmem:[#allocation7 + $0x210] sm:$0xff]
    %v559 = vld [vmem:[#allocation7 + $0x218] sm:$0xff]
    %v560 = vld [vmem:[#allocation7 + $0x220] sm:$0xff]
    %v561 = vld [vmem:[#allocation7 + $0x228] sm:$0xff]
    %v562 = vld [vmem:[#allocation7 + $0x230] sm:$0xff]
    %v563 = vld [vmem:[#allocation7 + $0x238] sm:$0xff]
    %v564 = vld [vmem:[#allocation7 + $0x240] sm:$0xff]
    %v565 = vld [vmem:[#allocation7 + $0x248] sm:$0xff]
    %v566 = vld [vmem:[#allocation7 + $0x250] sm:$0xff]
    %v567 = vld [vmem:[#allocation7 + $0x258] sm:$0xff]
    %v568 = vld [vmem:[#allocation7 + $0x260] sm:$0xff]
    %v569 = vld [vmem:[#allocation7 + $0x268] sm:$0xff]
    %v570 = vld [vmem:[#allocation7 + $0x270] sm:$0xff]
    %v571 = vld [vmem:[#allocation7 + $0x278] sm:$0xff]
    %v572 = vld [vmem:[#allocation7 + $0x280] sm:$0xff]
    %v573 = vld [vmem:[#allocation7 + $0x288] sm:$0xff]
    %v574 = vld [vmem:[#allocation7 + $0x290] sm:$0xff]
    %v575 = vld [vmem:[#allocation7 + $0x298] sm:$0xff]
    %v576 = vld [vmem:[#allocation7 + $0x2a0] sm:$0xff]
    %v577 = vld [vmem:[#allocation7 + $0x2a8] sm:$0xff]
    %v578 = vld [vmem:[#allocation7 + $0x2b0] sm:$0xff]
    %v579 = vld [vmem:[#allocation7 + $0x2b8] sm:$0xff]
    %v580 = vld [vmem:[#allocation7 + $0x2c0] sm:$0xff]
    %v581 = vld [vmem:[#allocation7 + $0x2c8] sm:$0xff]
    %v582 = vld [vmem:[#allocation7 + $0x2d0] sm:$0xff]
    %v583 = vld [vmem:[#allocation7 + $0x2d8] sm:$0xff]
    %v584 = vld [vmem:[#allocation7 + $0x2e0] sm:$0xff]
    %v585 = vld [vmem:[#allocation7 + $0x2e8] sm:$0xff]
    %v586 = vld [vmem:[#allocation7 + $0x2f0] sm:$0xff]
    %v587 = vld [vmem:[#allocation7 + $0x2f8] sm:$0xff]
    %v588 = vld [vmem:[#allocation7 + $0x300] sm:$0xff]
    %v589 = vld [vmem:[#allocation7 + $0x308] sm:$0xff]
    %v590 = vld [vmem:[#allocation7 + $0x310] sm:$0xff]
    %v591 = vld [vmem:[#allocation7 + $0x318] sm:$0xff]
    %v592 = vld [vmem:[#allocation7 + $0x320] sm:$0xff]
    %v593 = vld [vmem:[#allocation7 + $0x328] sm:$0xff]
    %v594 = vld [vmem:[#allocation7 + $0x330] sm:$0xff]
    %v595 = vld [vmem:[#allocation7 + $0x338] sm:$0xff]
    %v596 = vld [vmem:[#allocation7 + $0x340] sm:$0xff]
    %v597 = vld [vmem:[#allocation7 + $0x348] sm:$0xff]
    %v598 = vld [vmem:[#allocation7 + $0x350] sm:$0xff]
    %v599 = vld [vmem:[#allocation7 + $0x358] sm:$0xff]
    %v600 = vld [vmem:[#allocation7 + $0x360] sm:$0xff]
    %v601 = vld [vmem:[#allocation7 + $0x368] sm:$0xff]
    %v602 = vld [vmem:[#allocation7 + $0x370] sm:$0xff]
    %v603 = vld [vmem:[#allocation7 + $0x378] sm:$0xff]
    %v604 = vld [vmem:[#allocation7 + $0x380] sm:$0xff]
    %v605 = vld [vmem:[#allocation7 + $0x388] sm:$0xff]
    %v606 = vld [vmem:[#allocation7 + $0x390] sm:$0xff]
    %v607 = vld [vmem:[#allocation7 + $0x398] sm:$0xff]
    %v608 = vld [vmem:[#allocation7 + $0x3a0] sm:$0xff]
    %v609 = vld [vmem:[#allocation7 + $0x3a8] sm:$0xff]
    %v610 = vld [vmem:[#allocation7 + $0x3b0] sm:$0xff]
    %v611 = vld [vmem:[#allocation7 + $0x3b8] sm:$0xff]
    %v612 = vld [vmem:[#allocation7 + $0x3c0] sm:$0xff]
    %v613 = vld [vmem:[#allocation7 + $0x3c8] sm:$0xff]
    %v614 = vld [vmem:[#allocation7 + $0x3d0] sm:$0xff]
    %v615 = vld [vmem:[#allocation7 + $0x3d8] sm:$0xff]
    %v616 = vld [vmem:[#allocation7 + $0x3e0] sm:$0xff]
    %v617 = vld [vmem:[#allocation7 + $0x3e8] sm:$0xff]
    %v618 = vld [vmem:[#allocation7 + $0x3f0] sm:$0xff]
    %v619 = vld [vmem:[#allocation7 + $0x3f8] sm:$0xff]
    %v620 = vld [vmem:[#allocation7 + $0x400] sm:$0xff]
    %v621 = vld [vmem:[#allocation7 + $0x408] sm:$0xff]
    %v622 = vld [vmem:[#allocation7 + $0x410] sm:$0xff]
    %v623 = vld [vmem:[#allocation7 + $0x418] sm:$0xff]
    %v624 = vld [vmem:[#allocation7 + $0x420] sm:$0xff]
    %v625 = vld [vmem:[#allocation7 + $0x428] sm:$0xff]
    %v626 = vld [vmem:[#allocation7 + $0x430] sm:$0xff]
    %v627 = vld [vmem:[#allocation7 + $0x438] sm:$0xff]
    %v628 = vld [vmem:[#allocation7 + $0x440] sm:$0xff]
    %v629 = vld [vmem:[#allocation7 + $0x448] sm:$0xff]
    %v630 = vld [vmem:[#allocation7 + $0x450] sm:$0xff]
    %v631 = vld [vmem:[#allocation7 + $0x458] sm:$0xff]
    %v632 = vld [vmem:[#allocation7 + $0x460] sm:$0xff]
    %v633 = vld [vmem:[#allocation7 + $0x468] sm:$0xff]
    %v634 = vld [vmem:[#allocation7 + $0x470] sm:$0xff]
    %v635 = vld [vmem:[#allocation7 + $0x478] sm:$0xff]
    %v636 = vld [vmem:[#allocation7 + $0x480] sm:$0xff]
    %v637 = vld [vmem:[#allocation7 + $0x488] sm:$0xff]
    %v638 = vld [vmem:[#allocation7 + $0x490] sm:$0xff]
    %v639 = vld [vmem:[#allocation7 + $0x498] sm:$0xff]
    %v640 = vld [vmem:[#allocation7 + $0x4a0] sm:$0xff]
    %v641 = vld [vmem:[#allocation7 + $0x4a8] sm:$0xff]
    %v642 = vld [vmem:[#allocation7 + $0x4b0] sm:$0xff]
    %v643 = vld [vmem:[#allocation7 + $0x4b8] sm:$0xff]
    %v644 = vld [vmem:[#allocation7 + $0x4c0] sm:$0xff]
    %v645 = vld [vmem:[#allocation7 + $0x4c8] sm:$0xff]
    %v646 = vld [vmem:[#allocation7 + $0x4d0] sm:$0xff]
    %v647 = vld [vmem:[#allocation7 + $0x4d8] sm:$0xff]
    %v648 = vld [vmem:[#allocation7 + $0x4e0] sm:$0xff]
    %v649 = vld [vmem:[#allocation7 + $0x4e8] sm:$0xff]
    %v650 = vld [vmem:[#allocation7 + $0x4f0] sm:$0xff]
    %v651 = vld [vmem:[#allocation7 + $0x4f8] sm:$0xff]
    %v652 = vld [vmem:[#allocation7 + $0x500] sm:$0xff]
    %v653 = vld [vmem:[#allocation7 + $0x508] sm:$0xff]
    %v654 = vld [vmem:[#allocation7 + $0x510] sm:$0xff]
    %v655 = vld [vmem:[#allocation7 + $0x518] sm:$0xff]
    %v656 = vld [vmem:[#allocation7 + $0x520] sm:$0xff]
    %v657 = vld [vmem:[#allocation7 + $0x528] sm:$0xff]
    %v658 = vld [vmem:[#allocation7 + $0x530] sm:$0xff]
    %v659 = vld [vmem:[#allocation7 + $0x538] sm:$0xff]
    %v660 = vld [vmem:[#allocation7 + $0x540] sm:$0xff]
    %v661 = vld [vmem:[#allocation7 + $0x548] sm:$0xff]
    %v662 = vld [vmem:[#allocation7 + $0x550] sm:$0xff]
    %v663 = vld [vmem:[#allocation7 + $0x558] sm:$0xff]
    %v664 = vld [vmem:[#allocation7 + $0x560] sm:$0xff]
    %v665 = vld [vmem:[#allocation7 + $0x568] sm:$0xff]
    %v666 = vld [vmem:[#allocation7 + $0x570] sm:$0xff]
    %v667 = vld [vmem:[#allocation7 + $0x578] sm:$0xff]
    %v668 = vld [vmem:[#allocation7 + $0x580] sm:$0xff]
    %v669 = vld [vmem:[#allocation7 + $0x588] sm:$0xff]
    %v670 = vld [vmem:[#allocation7 + $0x590] sm:$0xff]
    %v671 = vld [vmem:[#allocation7 + $0x598] sm:$0xff]
    %v672 = vld [vmem:[#allocation7 + $0x5a0] sm:$0xff]
    %v673 = vld [vmem:[#allocation7 + $0x5a8] sm:$0xff]
    %v674 = vld [vmem:[#allocation7 + $0x5b0] sm:$0xff]
    %v675 = vld [vmem:[#allocation7 + $0x5b8] sm:$0xff]
    %v676 = vld [vmem:[#allocation7 + $0x5c0] sm:$0xff]
    %v677 = vld [vmem:[#allocation7 + $0x5c8] sm:$0xff]
    %v678 = vld [vmem:[#allocation7 + $0x5d0] sm:$0xff]
    %v679 = vld [vmem:[#allocation7 + $0x5d8] sm:$0xff]
    %v680 = vld [vmem:[#allocation7 + $0x5e0] sm:$0xff]
    %v681 = vld [vmem:[#allocation7 + $0x5e8] sm:$0xff]
    %v682 = vld [vmem:[#allocation7 + $0x5f0] sm:$0xff]
    %v683 = vld [vmem:[#allocation7 + $0x5f8] sm:$0xff]
    %v684 = vld [vmem:[#allocation7 + $0x600] sm:$0xff]
    %v685 = vld [vmem:[#allocation7 + $0x608] sm:$0xff]
    %v686 = vld [vmem:[#allocation7 + $0x610] sm:$0xff]
    %v687 = vld [vmem:[#allocation7 + $0x618] sm:$0xff]
    %v688 = vld [vmem:[#allocation7 + $0x620] sm:$0xff]
    %v689 = vld [vmem:[#allocation7 + $0x628] sm:$0xff]
    %v690 = vld [vmem:[#allocation7 + $0x630] sm:$0xff]
    %v691 = vld [vmem:[#allocation7 + $0x638] sm:$0xff]
    %v692 = vld [vmem:[#allocation7 + $0x640] sm:$0xff]
    %v693 = vld [vmem:[#allocation7 + $0x648] sm:$0xff]
    %v694 = vld [vmem:[#allocation7 + $0x650] sm:$0xff]
    %v695 = vld [vmem:[#allocation7 + $0x658] sm:$0xff]
    %v696 = vld [vmem:[#allocation7 + $0x660] sm:$0xff]
    %v697 = vld [vmem:[#allocation7 + $0x668] sm:$0xff]
    %v698 = vld [vmem:[#allocation7 + $0x670] sm:$0xff]
    %v699 = vld [vmem:[#allocation7 + $0x678] sm:$0xff]
    %v700 = vld [vmem:[#allocation7 + $0x680] sm:$0xff]
    %v701 = vld [vmem:[#allocation7 + $0x688] sm:$0xff]
    %v702 = vld [vmem:[#allocation7 + $0x690] sm:$0xff]
    %v703 = vld [vmem:[#allocation7 + $0x698] sm:$0xff]
    %v704 = vld [vmem:[#allocation7 + $0x6a0] sm:$0xff]
    %v705 = vld [vmem:[#allocation7 + $0x6a8] sm:$0xff]
    %v706 = vld [vmem:[#allocation7 + $0x6b0] sm:$0xff]
    %v707 = vld [vmem:[#allocation7 + $0x6b8] sm:$0xff]
    %v708 = vld [vmem:[#allocation7 + $0x6c0] sm:$0xff]
    %v709 = vld [vmem:[#allocation7 + $0x6c8] sm:$0xff]
    %v710 = vld [vmem:[#allocation7 + $0x6d0] sm:$0xff]
    %v711 = vld [vmem:[#allocation7 + $0x6d8] sm:$0xff]
    %v712 = vld [vmem:[#allocation7 + $0x6e0] sm:$0xff]
    %v713 = vld [vmem:[#allocation7 + $0x6e8] sm:$0xff]
    %v714 = vld [vmem:[#allocation7 + $0x6f0] sm:$0xff]
    %v715 = vld [vmem:[#allocation7 + $0x6f8] sm:$0xff]
    %v716 = vld [vmem:[#allocation7 + $0x700] sm:$0xff]
    %v717 = vld [vmem:[#allocation7 + $0x708] sm:$0xff]
    %v718 = vld [vmem:[#allocation7 + $0x710] sm:$0xff]
    %v719 = vld [vmem:[#allocation7 + $0x718] sm:$0xff]
    %v720 = vld [vmem:[#allocation7 + $0x720] sm:$0xff]
    %v721 = vld [vmem:[#allocation7 + $0x728] sm:$0xff]
    %v722 = vld [vmem:[#allocation7 + $0x730] sm:$0xff]
    %v723 = vld [vmem:[#allocation7 + $0x738] sm:$0xff]
    %v724 = vld [vmem:[#allocation7 + $0x740] sm:$0xff]
    %v725 = vld [vmem:[#allocation7 + $0x748] sm:$0xff]
    %v726 = vld [vmem:[#allocation7 + $0x750] sm:$0xff]
    %v727 = vld [vmem:[#allocation7 + $0x758] sm:$0xff]
    %v728 = vld [vmem:[#allocation7 + $0x760] sm:$0xff]
    %v729 = vld [vmem:[#allocation7 + $0x768] sm:$0xff]
    %v730 = vld [vmem:[#allocation7 + $0x770] sm:$0xff]
    %v731 = vld [vmem:[#allocation7 + $0x778] sm:$0xff]
    %v732 = vld [vmem:[#allocation7 + $0x780] sm:$0xff]
    %v733 = vld [vmem:[#allocation7 + $0x788] sm:$0xff]
    %v734 = vld [vmem:[#allocation7 + $0x790] sm:$0xff]
    %v735 = vld [vmem:[#allocation7 + $0x798] sm:$0xff]
    %v736 = vld [vmem:[#allocation7 + $0x7a0] sm:$0xff]
    %v737 = vld [vmem:[#allocation7 + $0x7a8] sm:$0xff]
    %v738 = vld [vmem:[#allocation7 + $0x7b0] sm:$0xff]
    %v739 = vld [vmem:[#allocation7 + $0x7b8] sm:$0xff]
    %v740 = vld [vmem:[#allocation7 + $0x7c0] sm:$0xff]
    %v741 = vld [vmem:[#allocation7 + $0x7c8] sm:$0xff]
    %v742 = vld [vmem:[#allocation7 + $0x7d0] sm:$0xff]
    %v743 = vld [vmem:[#allocation7 + $0x7d8] sm:$0xff]
    %v744 = vld [vmem:[#allocation7 + $0x7e0] sm:$0xff]
    %v745 = vld [vmem:[#allocation7 + $0x7e8] sm:$0xff]
    %v746 = vld [vmem:[#allocation7 + $0x7f0] sm:$0xff]
    %v747 = vld [vmem:[#allocation7 + $0x7f8] sm:$0xff]
    %v748 = vld [vmem:[#allocation7 + $0x800] sm:$0xff]
    %v749 = vld [vmem:[#allocation7 + $0x808] sm:$0xff]
    %v750 = vld [vmem:[#allocation7 + $0x810] sm:$0xff]
    %v751 = vld [vmem:[#allocation7 + $0x818] sm:$0xff]
    %v752 = vld [vmem:[#allocation7 + $0x820] sm:$0xff]
    %v753 = vld [vmem:[#allocation7 + $0x828] sm:$0xff]
    %v754 = vld [vmem:[#allocation7 + $0x830] sm:$0xff]
    %v755 = vld [vmem:[#allocation7 + $0x838] sm:$0xff]
    %v756 = vld [vmem:[#allocation7 + $0x840] sm:$0xff]
    %v757 = vld [vmem:[#allocation7 + $0x848] sm:$0xff]
    %v758 = vld [vmem:[#allocation7 + $0x850] sm:$0xff]
    %v759 = vld [vmem:[#allocation7 + $0x858] sm:$0xff]
    %v760 = vld [vmem:[#allocation7 + $0x860] sm:$0xff]
    %v761 = vld [vmem:[#allocation7 + $0x868] sm:$0xff]
    %v762 = vld [vmem:[#allocation7 + $0x870] sm:$0xff]
    %v763 = vld [vmem:[#allocation7 + $0x878] sm:$0xff]
    %v764 = vld [vmem:[#allocation7 + $0x880] sm:$0xff]
    %v765 = vld [vmem:[#allocation7 + $0x888] sm:$0xff]
    %v766 = vld [vmem:[#allocation7 + $0x890] sm:$0xff]
    %v767 = vld [vmem:[#allocation7 + $0x898] sm:$0xff]
    %v768 = vld [vmem:[#allocation7 + $0x8a0] sm:$0xff]
    %v769 = vld [vmem:[#allocation7 + $0x8a8] sm:$0xff]
    %v770 = vld [vmem:[#allocation7 + $0x8b0] sm:$0xff]
    %v771 = vld [vmem:[#allocation7 + $0x8b8] sm:$0xff]
    %v772 = vld [vmem:[#allocation7 + $0x8c0] sm:$0xff]
    %v773 = vld [vmem:[#allocation7 + $0x8c8] sm:$0xff]
    %v774 = vld [vmem:[#allocation7 + $0x8d0] sm:$0xff]
    %v775 = vld [vmem:[#allocation7 + $0x8d8] sm:$0xff]
    %v776 = vld [vmem:[#allocation7 + $0x8e0] sm:$0xff]
    %v777 = vld [vmem:[#allocation7 + $0x8e8] sm:$0xff]
    %v778 = vld [vmem:[#allocation7 + $0x8f0] sm:$0xff]
    %v779 = vld [vmem:[#allocation7 + $0x8f8] sm:$0xff]
    %v780 = vld [vmem:[#allocation7 + $0x900] sm:$0xff]
    %v781 = vld [vmem:[#allocation7 + $0x908] sm:$0xff]
    %v782 = vld [vmem:[#allocation7 + $0x910] sm:$0xff]
    %v783 = vld [vmem:[#allocation7 + $0x918] sm:$0xff]
    %v784 = vld [vmem:[#allocation7 + $0x920] sm:$0xff]
    %v785 = vld [vmem:[#allocation7 + $0x928] sm:$0xff]
    %v786 = vld [vmem:[#allocation7 + $0x930] sm:$0xff]
    %v787 = vld [vmem:[#allocation7 + $0x938] sm:$0xff]
    %v788 = vld [vmem:[#allocation7 + $0x940] sm:$0xff]
    %v789 = vld [vmem:[#allocation7 + $0x948] sm:$0xff]
    %v790 = vld [vmem:[#allocation7 + $0x950] sm:$0xff]
    %v791 = vld [vmem:[#allocation7 + $0x958] sm:$0xff]
    %v792 = vld [vmem:[#allocation7 + $0x960] sm:$0xff]
    %v793 = vld [vmem:[#allocation7 + $0x968] sm:$0xff]
    %v794 = vld [vmem:[#allocation7 + $0x970] sm:$0xff]
    %v795 = vld [vmem:[#allocation7 + $0x978] sm:$0xff]
    %v796 = vld [vmem:[#allocation7 + $0x980] sm:$0xff]
    %v797 = vld [vmem:[#allocation7 + $0x988] sm:$0xff]
    %v798 = vld [vmem:[#allocation7 + $0x990] sm:$0xff]
    %v799 = vld [vmem:[#allocation7 + $0x998] sm:$0xff]
    %v800 = vld [vmem:[#allocation7 + $0x9a0] sm:$0xff]
    %v801 = vld [vmem:[#allocation7 + $0x9a8] sm:$0xff]
    %v802 = vld [vmem:[#allocation7 + $0x9b0] sm:$0xff]
    %v803 = vld [vmem:[#allocation7 + $0x9b8] sm:$0xff]
    %v804 = vld [vmem:[#allocation7 + $0x9c0] sm:$0xff]
    %v805 = vld [vmem:[#allocation7 + $0x9c8] sm:$0xff]
    %v806 = vld [vmem:[#allocation7 + $0x9d0] sm:$0xff]
    %v807 = vld [vmem:[#allocation7 + $0x9d8] sm:$0xff]
    %v808 = vld [vmem:[#allocation7 + $0x9e0] sm:$0xff]
    %v809 = vld [vmem:[#allocation7 + $0x9e8] sm:$0xff]
    %v810 = vld [vmem:[#allocation7 + $0x9f0] sm:$0xff]
    %v811 = vld [vmem:[#allocation7 + $0x9f8] sm:$0xff]
    %v812 = vld [vmem:[#allocation7 + $0xa00] sm:$0xff]
    %v813 = vld [vmem:[#allocation7 + $0xa08] sm:$0xff]
    %v814 = vld [vmem:[#allocation7 + $0xa10] sm:$0xff]
    %v815 = vld [vmem:[#allocation7 + $0xa18] sm:$0xff]
    %v816 = vld [vmem:[#allocation7 + $0xa20] sm:$0xff]
    %v817 = vld [vmem:[#allocation7 + $0xa28] sm:$0xff]
    %v818 = vld [vmem:[#allocation7 + $0xa30] sm:$0xff]
    %v819 = vld [vmem:[#allocation7 + $0xa38] sm:$0xff]
    %v820 = vld [vmem:[#allocation7 + $0xa40] sm:$0xff]
    %v821 = vld [vmem:[#allocation7 + $0xa48] sm:$0xff]
    %v822 = vld [vmem:[#allocation7 + $0xa50] sm:$0xff]
    %v823 = vld [vmem:[#allocation7 + $0xa58] sm:$0xff]
    %v824 = vld [vmem:[#allocation7 + $0xa60] sm:$0xff]
    %v825 = vld [vmem:[#allocation7 + $0xa68] sm:$0xff]
    %v826 = vld [vmem:[#allocation7 + $0xa70] sm:$0xff]
    %v827 = vld [vmem:[#allocation7 + $0xa78] sm:$0xff]
    %v828 = vld [vmem:[#allocation7 + $0xa80] sm:$0xff]
    %v829 = vld [vmem:[#allocation7 + $0xa88] sm:$0xff]
    %v830 = vld [vmem:[#allocation7 + $0xa90] sm:$0xff]
    %v831 = vld [vmem:[#allocation7 + $0xa98] sm:$0xff]
    %v832 = vld [vmem:[#allocation7 + $0xaa0] sm:$0xff]
    %v833 = vld [vmem:[#allocation7 + $0xaa8] sm:$0xff]
    %v834 = vld [vmem:[#allocation7 + $0xab0] sm:$0xff]
    %v835 = vld [vmem:[#allocation7 + $0xab8] sm:$0xff]
    %v836 = vld [vmem:[#allocation7 + $0xac0] sm:$0xff]
    %v837 = vld [vmem:[#allocation7 + $0xac8] sm:$0xff]
    %v838 = vld [vmem:[#allocation7 + $0xad0] sm:$0xff]
    %v839 = vld [vmem:[#allocation7 + $0xad8] sm:$0xff]
    %v840 = vld [vmem:[#allocation7 + $0xae0] sm:$0xff]
    %v841 = vld [vmem:[#allocation7 + $0xae8] sm:$0xff]
    %v842 = vld [vmem:[#allocation7 + $0xaf0] sm:$0xff]
    %v843 = vld [vmem:[#allocation7 + $0xaf8] sm:$0xff]
    %v844 = vld [vmem:[#allocation7 + $0xb00] sm:$0xff]
    %v845 = vld [vmem:[#allocation7 + $0xb08] sm:$0xff]
    %v846 = vld [vmem:[#allocation7 + $0xb10] sm:$0xff]
    %v847 = vld [vmem:[#allocation7 + $0xb18] sm:$0xff]
    %v848 = vld [vmem:[#allocation7 + $0xb20] sm:$0xff]
    %v849 = vld [vmem:[#allocation7 + $0xb28] sm:$0xff]
    %v850 = vld [vmem:[#allocation7 + $0xb30] sm:$0xff]
    %v851 = vld [vmem:[#allocation7 + $0xb38] sm:$0xff]
    %v852 = vld [vmem:[#allocation7 + $0xb40] sm:$0xff]
    %v853 = vld [vmem:[#allocation7 + $0xb48] sm:$0xff]
    %v854 = vld [vmem:[#allocation7 + $0xb50] sm:$0xff]
    %v855 = vld [vmem:[#allocation7 + $0xb58] sm:$0xff]
    %v856 = vld [vmem:[#allocation7 + $0xb60] sm:$0xff]
    %v857 = vld [vmem:[#allocation7 + $0xb68] sm:$0xff]
    %v858 = vld [vmem:[#allocation7 + $0xb70] sm:$0xff]
    %v859 = vld [vmem:[#allocation7 + $0xb78] sm:$0xff]
    %v860 = vld [vmem:[#allocation7 + $0xb80] sm:$0xff]
    %v861 = vld [vmem:[#allocation7 + $0xb88] sm:$0xff]
    %v862 = vld [vmem:[#allocation7 + $0xb90] sm:$0xff]
    %v863 = vld [vmem:[#allocation7 + $0xb98] sm:$0xff]
    %v864 = vld [vmem:[#allocation7 + $0xba0] sm:$0xff]
    %v865 = vld [vmem:[#allocation7 + $0xba8] sm:$0xff]
    %v866 = vld [vmem:[#allocation7 + $0xbb0] sm:$0xff]
    %v867 = vld [vmem:[#allocation7 + $0xbb8] sm:$0xff]
    %v868 = vld [vmem:[#allocation7 + $0xbc0] sm:$0xff]
    %v869 = vld [vmem:[#allocation7 + $0xbc8] sm:$0xff]
    %v870 = vld [vmem:[#allocation7 + $0xbd0] sm:$0xff]
    %v871 = vld [vmem:[#allocation7 + $0xbd8] sm:$0xff]
    %v872 = vld [vmem:[#allocation7 + $0xbe0] sm:$0xff]
    %v873 = vld [vmem:[#allocation7 + $0xbe8] sm:$0xff]
    %v874 = vld [vmem:[#allocation7 + $0xbf0] sm:$0xff]
    %v875 = vld [vmem:[#allocation7 + $0xbf8] sm:$0xff]
    %v876 = vld [vmem:[#allocation7 + $0xc00] sm:$0xff]
    %v877 = vld [vmem:[#allocation7 + $0xc08] sm:$0xff]
    %v878 = vld [vmem:[#allocation7 + $0xc10] sm:$0xff]
    %v879 = vld [vmem:[#allocation7 + $0xc18] sm:$0xff]
    %v880 = vld [vmem:[#allocation7 + $0xc20] sm:$0xff]
    %v881 = vld [vmem:[#allocation7 + $0xc28] sm:$0xff]
    %v882 = vld [vmem:[#allocation7 + $0xc30] sm:$0xff]
    %v883 = vld [vmem:[#allocation7 + $0xc38] sm:$0xff]
    %v884 = vld [vmem:[#allocation7 + $0xc40] sm:$0xff]
    %v885 = vld [vmem:[#allocation7 + $0xc48] sm:$0xff]
    %v886 = vld [vmem:[#allocation7 + $0xc50] sm:$0xff]
    %v887 = vld [vmem:[#allocation7 + $0xc58] sm:$0xff]
    %v888 = vld [vmem:[#allocation7 + $0xc60] sm:$0xff]
    %v889 = vld [vmem:[#allocation7 + $0xc68] sm:$0xff]
    %v890 = vld [vmem:[#allocation7 + $0xc70] sm:$0xff]
    %v891 = vld [vmem:[#allocation7 + $0xc78] sm:$0xff]
    %v892 = vld [vmem:[#allocation7 + $0xc80] sm:$0xff]
    %v893 = vld [vmem:[#allocation7 + $0xc88] sm:$0xff]
    %v894 = vld [vmem:[#allocation7 + $0xc90] sm:$0xff]
    %v895 = vld [vmem:[#allocation7 + $0xc98] sm:$0xff]
    %v896 = vld [vmem:[#allocation7 + $0xca0] sm:$0xff]
    %v897 = vld [vmem:[#allocation7 + $0xca8] sm:$0xff]
    %v898 = vld [vmem:[#allocation7 + $0xcb0] sm:$0xff]
    %v899 = vld [vmem:[#allocation7 + $0xcb8] sm:$0xff]
    %v900 = vld [vmem:[#allocation7 + $0xcc0] sm:$0xff]
    %v901 = vld [vmem:[#allocation7 + $0xcc8] sm:$0xff]
    %v902 = vld [vmem:[#allocation7 + $0xcd0] sm:$0xff]
    %v903 = vld [vmem:[#allocation7 + $0xcd8] sm:$0xff]
    %v904 = vld [vmem:[#allocation7 + $0xce0] sm:$0xff]
    %v905 = vld [vmem:[#allocation7 + $0xce8] sm:$0xff]
    %v906 = vld [vmem:[#allocation7 + $0xcf0] sm:$0xff]
    %v907 = vld [vmem:[#allocation7 + $0xcf8] sm:$0xff]
    %v908 = vld [vmem:[#allocation7 + $0xd00] sm:$0xff]
    %v909 = vld [vmem:[#allocation7 + $0xd08] sm:$0xff]
    %v910 = vld [vmem:[#allocation7 + $0xd10] sm:$0xff]
    %v911 = vld [vmem:[#allocation7 + $0xd18] sm:$0xff]
    %v912 = vld [vmem:[#allocation7 + $0xd20] sm:$0xff]
    %v913 = vld [vmem:[#allocation7 + $0xd28] sm:$0xff]
    %v914 = vld [vmem:[#allocation7 + $0xd30] sm:$0xff]
    %v915 = vld [vmem:[#allocation7 + $0xd38] sm:$0xff]
    %v916 = vld [vmem:[#allocation7 + $0xd40] sm:$0xff]
    %v917 = vld [vmem:[#allocation7 + $0xd48] sm:$0xff]
    %v918 = vld [vmem:[#allocation7 + $0xd50] sm:$0xff]
    %v919 = vld [vmem:[#allocation7 + $0xd58] sm:$0xff]
    %v920 = vld [vmem:[#allocation7 + $0xd60] sm:$0xff]
    %v921 = vld [vmem:[#allocation7 + $0xd68] sm:$0xff]
    %v922 = vld [vmem:[#allocation7 + $0xd70] sm:$0xff]
    %v923 = vld [vmem:[#allocation7 + $0xd78] sm:$0xff]
    %v924 = vld [vmem:[#allocation7 + $0xd80] sm:$0xff]
    %v925 = vld [vmem:[#allocation7 + $0xd88] sm:$0xff]
    %v926 = vld [vmem:[#allocation7 + $0xd90] sm:$0xff]
    %v927 = vld [vmem:[#allocation7 + $0xd98] sm:$0xff]
    %v928 = vld [vmem:[#allocation7 + $0xda0] sm:$0xff]
    %v929 = vld [vmem:[#allocation7 + $0xda8] sm:$0xff]
    %v930 = vld [vmem:[#allocation7 + $0xdb0] sm:$0xff]
    %v931 = vld [vmem:[#allocation7 + $0xdb8] sm:$0xff]
    %v932 = vld [vmem:[#allocation7 + $0xdc0] sm:$0xff]
    %v933 = vld [vmem:[#allocation7 + $0xdc8] sm:$0xff]
    %v934 = vld [vmem:[#allocation7 + $0xdd0] sm:$0xff]
    %v935 = vld [vmem:[#allocation7 + $0xdd8] sm:$0xff]
    %v936 = vld [vmem:[#allocation7 + $0xde0] sm:$0xff]
    %v937 = vld [vmem:[#allocation7 + $0xde8] sm:$0xff]
    %v938 = vld [vmem:[#allocation7 + $0xdf0] sm:$0xff]
    %v939 = vld [vmem:[#allocation7 + $0xdf8] sm:$0xff]
    %v940 = vld [vmem:[#allocation7 + $0xe00] sm:$0xff]
    %v941 = vld [vmem:[#allocation7 + $0xe08] sm:$0xff]
    %v942 = vld [vmem:[#allocation7 + $0xe10] sm:$0xff]
    %v943 = vld [vmem:[#allocation7 + $0xe18] sm:$0xff]
    %v944 = vld [vmem:[#allocation7 + $0xe20] sm:$0xff]
    %v945 = vld [vmem:[#allocation7 + $0xe28] sm:$0xff]
    %v946 = vld [vmem:[#allocation7 + $0xe30] sm:$0xff]
    %v947 = vld [vmem:[#allocation7 + $0xe38] sm:$0xff]
    %v948 = vld [vmem:[#allocation7 + $0xe40] sm:$0xff]
    %v949 = vld [vmem:[#allocation7 + $0xe48] sm:$0xff]
    %v950 = vld [vmem:[#allocation7 + $0xe50] sm:$0xff]
    %v951 = vld [vmem:[#allocation7 + $0xe58] sm:$0xff]
    %v952 = vld [vmem:[#allocation7 + $0xe60] sm:$0xff]
    %v953 = vld [vmem:[#allocation7 + $0xe68] sm:$0xff]
    %v954 = vld [vmem:[#allocation7 + $0xe70] sm:$0xff]
    %v955 = vld [vmem:[#allocation7 + $0xe78] sm:$0xff]
    %v956 = vld [vmem:[#allocation7 + $0xe80] sm:$0xff]
    %v957 = vld [vmem:[#allocation7 + $0xe88] sm:$0xff]
    %v958 = vld [vmem:[#allocation7 + $0xe90] sm:$0xff]
    %v959 = vld [vmem:[#allocation7 + $0xe98] sm:$0xff]
    %v960 = vld [vmem:[#allocation7 + $0xea0] sm:$0xff]
    %v961 = vld [vmem:[#allocation7 + $0xea8] sm:$0xff]
    %v962 = vld [vmem:[#allocation7 + $0xeb0] sm:$0xff]
    %v963 = vld [vmem:[#allocation7 + $0xeb8] sm:$0xff]
    %v964 = vld [vmem:[#allocation7 + $0xec0] sm:$0xff]
    %v965 = vld [vmem:[#allocation7 + $0xec8] sm:$0xff]
    %v966 = vld [vmem:[#allocation7 + $0xed0] sm:$0xff]
    %v967 = vld [vmem:[#allocation7 + $0xed8] sm:$0xff]
    %v968 = vld [vmem:[#allocation7 + $0xee0] sm:$0xff]
    %v969 = vld [vmem:[#allocation7 + $0xee8] sm:$0xff]
    %v970 = vld [vmem:[#allocation7 + $0xef0] sm:$0xff]
    %v971 = vld [vmem:[#allocation7 + $0xef8] sm:$0xff]
    %v972 = vld [vmem:[#allocation7 + $0xf00] sm:$0xff]
    %v973 = vld [vmem:[#allocation7 + $0xf08] sm:$0xff]
    %v974 = vld [vmem:[#allocation7 + $0xf10] sm:$0xff]
    %v975 = vld [vmem:[#allocation7 + $0xf18] sm:$0xff]
    %v976 = vld [vmem:[#allocation7 + $0xf20] sm:$0xff]
    %v977 = vld [vmem:[#allocation7 + $0xf28] sm:$0xff]
    %v978 = vld [vmem:[#allocation7 + $0xf30] sm:$0xff]
    %v979 = vld [vmem:[#allocation7 + $0xf38] sm:$0xff]
    %v980 = vld [vmem:[#allocation7 + $0xf40] sm:$0xff]
    %v981 = vld [vmem:[#allocation7 + $0xf48] sm:$0xff]
    %v982 = vld [vmem:[#allocation7 + $0xf50] sm:$0xff]
    %v983 = vld [vmem:[#allocation7 + $0xf58] sm:$0xff]
    %v984 = vld [vmem:[#allocation7 + $0xf60] sm:$0xff]
    %v985 = vld [vmem:[#allocation7 + $0xf68] sm:$0xff]
    %v986 = vld [vmem:[#allocation7 + $0xf70] sm:$0xff]
    %v987 = vld [vmem:[#allocation7 + $0xf78] sm:$0xff]
    %v988 = vld [vmem:[#allocation7 + $0xf80] sm:$0xff]
    %v989 = vld [vmem:[#allocation7 + $0xf88] sm:$0xff]
    %v990 = vld [vmem:[#allocation7 + $0xf90] sm:$0xff]
    %v991 = vld [vmem:[#allocation7 + $0xf98] sm:$0xff]
    %v992 = vld [vmem:[#allocation7 + $0xfa0] sm:$0xff]
    %v993 = vld [vmem:[#allocation7 + $0xfa8] sm:$0xff]
    %v994 = vld [vmem:[#allocation7 + $0xfb0] sm:$0xff]
    %v995 = vld [vmem:[#allocation7 + $0xfb8] sm:$0xff]
    %v996 = vld [vmem:[#allocation7 + $0xfc0] sm:$0xff]
    %v997 = vld [vmem:[#allocation7 + $0xfc8] sm:$0xff]
    %v998 = vld [vmem:[#allocation7 + $0xfd0] sm:$0xff]
    %v999 = vld [vmem:[#allocation7 + $0xfd8] sm:$0xff]
    %v1000 = vld [vmem:[#allocation7 + $0xfe0] sm:$0xff]
    %v1001 = vld [vmem:[#allocation7 + $0xfe8] sm:$0xff]
    %v1002 = vld [vmem:[#allocation7 + $0xff0] sm:$0xff]
    %v1003 = vld [vmem:[#allocation7 + $0xff8] sm:$0xff]
    %v1004 = vld [vmem:[#allocation8] sm:$0xff]
    %v1006 = vlaneseq
    %v1007 = vshrl.u32 %v1006, 7
    %v1008 = vsub.s32 0, %v1007
    %v1009 = vrot.slane %v1004, %v1008
    %v1010 = vlaneseq
    %v1011 = vshrl.u32 %v1010, 7
    %v1012 = vsub.s32 1, %v1011
    %v1013 = vrot.slane %v1004, %v1012
    %v1014 = vlaneseq
    %v1015 = vshrl.u32 %v1014, 7
    %v1016 = vsub.s32 2, %v1015
    %v1017 = vrot.slane %v1004, %v1016
    %v1018 = vlaneseq
    %v1019 = vshrl.u32 %v1018, 7
    %v1020 = vsub.s32 3, %v1019
    %v1021 = vrot.slane %v1004, %v1020
    %v1022 = vlaneseq
    %v1023 = vshrl.u32 %v1022, 7
    %v1024 = vsub.s32 4, %v1023
    %v1025 = vrot.slane %v1004, %v1024
    %v1026 = vlaneseq
    %v1027 = vshrl.u32 %v1026, 7
    %v1028 = vsub.s32 5, %v1027
    %v1029 = vrot.slane %v1004, %v1028
    %v1030 = vlaneseq
    %v1031 = vshrl.u32 %v1030, 7
    %v1032 = vsub.s32 6, %v1031
    %v1033 = vrot.slane %v1004, %v1032
    %v1034 = vlaneseq
    %v1035 = vshrl.u32 %v1034, 7
    %v1036 = vsub.s32 7, %v1035
    %v1037 = vrot.slane %v1004, %v1036
    %v1558 = vunpack.c.l.b16 %v492
    %v1559 = vunpack.c.h.b16 %v492
    %v1560 = vunpack.c.l.b16 %v493
    %v1561 = vunpack.c.h.b16 %v493
    %v1562 = vunpack.c.l.b16 %v494
    %v1563 = vunpack.c.h.b16 %v494
    %v1564 = vunpack.c.l.b16 %v495
    %v1565 = vunpack.c.h.b16 %v495
    %v1566 = vunpack.c.l.b16 %v496
    %v1567 = vunpack.c.h.b16 %v496
    %v1568 = vunpack.c.l.b16 %v497
    %v1569 = vunpack.c.h.b16 %v497
    %v1570 = vunpack.c.l.b16 %v498
    %v1571 = vunpack.c.h.b16 %v498
    %v1572 = vunpack.c.l.b16 %v499
    %v1573 = vunpack.c.h.b16 %v499
    %v1574 = vunpack.c.l.b16 %v500
    %v1575 = vunpack.c.h.b16 %v500
    %v1576 = vunpack.c.l.b16 %v501
    %v1577 = vunpack.c.h.b16 %v501
    %v1578 = vunpack.c.l.b16 %v502
    %v1579 = vunpack.c.h.b16 %v502
    %v1580 = vunpack.c.l.b16 %v503
    %v1581 = vunpack.c.h.b16 %v503
    %v1582 = vunpack.c.l.b16 %v504
    %v1583 = vunpack.c.h.b16 %v504
    %v1584 = vunpack.c.l.b16 %v505
    %v1585 = vunpack.c.h.b16 %v505
    %v1586 = vunpack.c.l.b16 %v506
    %v1587 = vunpack.c.h.b16 %v506
    %v1588 = vunpack.c.l.b16 %v507
    %v1589 = vunpack.c.h.b16 %v507
    %v1590 = vunpack.c.l.b16 %v508
    %v1591 = vunpack.c.h.b16 %v508
    %v1592 = vunpack.c.l.b16 %v509
    %v1593 = vunpack.c.h.b16 %v509
    %v1594 = vunpack.c.l.b16 %v510
    %v1595 = vunpack.c.h.b16 %v510
    %v1596 = vunpack.c.l.b16 %v511
    %v1597 = vunpack.c.h.b16 %v511
    %v1598 = vunpack.c.l.b16 %v512
    %v1599 = vunpack.c.h.b16 %v512
    %v1600 = vunpack.c.l.b16 %v513
    %v1601 = vunpack.c.h.b16 %v513
    %v1602 = vunpack.c.l.b16 %v514
    %v1603 = vunpack.c.h.b16 %v514
    %v1604 = vunpack.c.l.b16 %v515
    %v1605 = vunpack.c.h.b16 %v515
    %v1606 = vunpack.c.l.b16 %v516
    %v1607 = vunpack.c.h.b16 %v516
    %v1608 = vunpack.c.l.b16 %v517
    %v1609 = vunpack.c.h.b16 %v517
    %v1610 = vunpack.c.l.b16 %v518
    %v1611 = vunpack.c.h.b16 %v518
    %v1612 = vunpack.c.l.b16 %v519
    %v1613 = vunpack.c.h.b16 %v519
    %v1614 = vunpack.c.l.b16 %v520
    %v1615 = vunpack.c.h.b16 %v520
    %v1616 = vunpack.c.l.b16 %v521
    %v1617 = vunpack.c.h.b16 %v521
    %v1618 = vunpack.c.l.b16 %v522
    %v1619 = vunpack.c.h.b16 %v522
    %v1620 = vunpack.c.l.b16 %v523
    %v1621 = vunpack.c.h.b16 %v523
    %v1622 = vunpack.c.l.b16 %v524
    %v1623 = vunpack.c.h.b16 %v524
    %v1624 = vunpack.c.l.b16 %v525
    %v1625 = vunpack.c.h.b16 %v525
    %v1626 = vunpack.c.l.b16 %v526
    %v1627 = vunpack.c.h.b16 %v526
    %v1628 = vunpack.c.l.b16 %v527
    %v1629 = vunpack.c.h.b16 %v527
    %v1630 = vunpack.c.l.b16 %v528
    %v1631 = vunpack.c.h.b16 %v528
    %v1632 = vunpack.c.l.b16 %v529
    %v1633 = vunpack.c.h.b16 %v529
    %v1634 = vunpack.c.l.b16 %v530
    %v1635 = vunpack.c.h.b16 %v530
    %v1636 = vunpack.c.l.b16 %v531
    %v1637 = vunpack.c.h.b16 %v531
    %v1638 = vunpack.c.l.b16 %v532
    %v1639 = vunpack.c.h.b16 %v532
    %v1640 = vunpack.c.l.b16 %v533
    %v1641 = vunpack.c.h.b16 %v533
    %v1642 = vunpack.c.l.b16 %v534
    %v1643 = vunpack.c.h.b16 %v534
    %v1644 = vunpack.c.l.b16 %v535
    %v1645 = vunpack.c.h.b16 %v535
    %v1646 = vunpack.c.l.b16 %v536
    %v1647 = vunpack.c.h.b16 %v536
    %v1648 = vunpack.c.l.b16 %v537
    %v1649 = vunpack.c.h.b16 %v537
    %v1650 = vunpack.c.l.b16 %v538
    %v1651 = vunpack.c.h.b16 %v538
    %v1652 = vunpack.c.l.b16 %v539
    %v1653 = vunpack.c.h.b16 %v539
    %v1654 = vunpack.c.l.b16 %v540
    %v1655 = vunpack.c.h.b16 %v540
    %v1656 = vunpack.c.l.b16 %v541
    %v1657 = vunpack.c.h.b16 %v541
    %v1658 = vunpack.c.l.b16 %v542
    %v1659 = vunpack.c.h.b16 %v542
    %v1660 = vunpack.c.l.b16 %v543
    %v1661 = vunpack.c.h.b16 %v543
    %v1662 = vunpack.c.l.b16 %v544
    %v1663 = vunpack.c.h.b16 %v544
    %v1664 = vunpack.c.l.b16 %v545
    %v1665 = vunpack.c.h.b16 %v545
    %v1666 = vunpack.c.l.b16 %v546
    %v1667 = vunpack.c.h.b16 %v546
    %v1668 = vunpack.c.l.b16 %v547
    %v1669 = vunpack.c.h.b16 %v547
    %v1670 = vunpack.c.l.b16 %v548
    %v1671 = vunpack.c.h.b16 %v548
    %v1672 = vunpack.c.l.b16 %v549
    %v1673 = vunpack.c.h.b16 %v549
    %v1674 = vunpack.c.l.b16 %v550
    %v1675 = vunpack.c.h.b16 %v550
    %v1676 = vunpack.c.l.b16 %v551
    %v1677 = vunpack.c.h.b16 %v551
    %v1678 = vunpack.c.l.b16 %v552
    %v1679 = vunpack.c.h.b16 %v552
    %v1680 = vunpack.c.l.b16 %v553
    %v1681 = vunpack.c.h.b16 %v553
    %v1682 = vunpack.c.l.b16 %v554
    %v1683 = vunpack.c.h.b16 %v554
    %v1684 = vunpack.c.l.b16 %v555
    %v1685 = vunpack.c.h.b16 %v555
    %v1686 = vunpack.c.l.b16 %v556
    %v1687 = vunpack.c.h.b16 %v556
    %v1688 = vunpack.c.l.b16 %v557
    %v1689 = vunpack.c.h.b16 %v557
    %v1690 = vunpack.c.l.b16 %v558
    %v1691 = vunpack.c.h.b16 %v558
    %v1692 = vunpack.c.l.b16 %v559
    %v1693 = vunpack.c.h.b16 %v559
    %v1694 = vunpack.c.l.b16 %v560
    %v1695 = vunpack.c.h.b16 %v560
    %v1696 = vunpack.c.l.b16 %v561
    %v1697 = vunpack.c.h.b16 %v561
    %v1698 = vunpack.c.l.b16 %v562
    %v1699 = vunpack.c.h.b16 %v562
    %v1700 = vunpack.c.l.b16 %v563
    %v1701 = vunpack.c.h.b16 %v563
    %v1702 = vunpack.c.l.b16 %v564
    %v1703 = vunpack.c.h.b16 %v564
    %v1704 = vunpack.c.l.b16 %v565
    %v1705 = vunpack.c.h.b16 %v565
    %v1706 = vunpack.c.l.b16 %v566
    %v1707 = vunpack.c.h.b16 %v566
    %v1708 = vunpack.c.l.b16 %v567
    %v1709 = vunpack.c.h.b16 %v567
    %v1710 = vunpack.c.l.b16 %v568
    %v1711 = vunpack.c.h.b16 %v568
    %v1712 = vunpack.c.l.b16 %v569
    %v1713 = vunpack.c.h.b16 %v569
    %v1714 = vunpack.c.l.b16 %v570
    %v1715 = vunpack.c.h.b16 %v570
    %v1716 = vunpack.c.l.b16 %v571
    %v1717 = vunpack.c.h.b16 %v571
    %v1718 = vunpack.c.l.b16 %v572
    %v1719 = vunpack.c.h.b16 %v572
    %v1720 = vunpack.c.l.b16 %v573
    %v1721 = vunpack.c.h.b16 %v573
    %v1722 = vunpack.c.l.b16 %v574
    %v1723 = vunpack.c.h.b16 %v574
    %v1724 = vunpack.c.l.b16 %v575
    %v1725 = vunpack.c.h.b16 %v575
    %v1726 = vunpack.c.l.b16 %v576
    %v1727 = vunpack.c.h.b16 %v576
    %v1728 = vunpack.c.l.b16 %v577
    %v1729 = vunpack.c.h.b16 %v577
    %v1730 = vunpack.c.l.b16 %v578
    %v1731 = vunpack.c.h.b16 %v578
    %v1732 = vunpack.c.l.b16 %v579
    %v1733 = vunpack.c.h.b16 %v579
    %v1734 = vunpack.c.l.b16 %v580
    %v1735 = vunpack.c.h.b16 %v580
    %v1736 = vunpack.c.l.b16 %v581
    %v1737 = vunpack.c.h.b16 %v581
    %v1738 = vunpack.c.l.b16 %v582
    %v1739 = vunpack.c.h.b16 %v582
    %v1740 = vunpack.c.l.b16 %v583
    %v1741 = vunpack.c.h.b16 %v583
    %v1742 = vunpack.c.l.b16 %v584
    %v1743 = vunpack.c.h.b16 %v584
    %v1744 = vunpack.c.l.b16 %v585
    %v1745 = vunpack.c.h.b16 %v585
    %v1746 = vunpack.c.l.b16 %v586
    %v1747 = vunpack.c.h.b16 %v586
    %v1748 = vunpack.c.l.b16 %v587
    %v1749 = vunpack.c.h.b16 %v587
    %v1750 = vunpack.c.l.b16 %v588
    %v1751 = vunpack.c.h.b16 %v588
    %v1752 = vunpack.c.l.b16 %v589
    %v1753 = vunpack.c.h.b16 %v589
    %v1754 = vunpack.c.l.b16 %v590
    %v1755 = vunpack.c.h.b16 %v590
    %v1756 = vunpack.c.l.b16 %v591
    %v1757 = vunpack.c.h.b16 %v591
    %v1758 = vunpack.c.l.b16 %v592
    %v1759 = vunpack.c.h.b16 %v592
    %v1760 = vunpack.c.l.b16 %v593
    %v1761 = vunpack.c.h.b16 %v593
    %v1762 = vunpack.c.l.b16 %v594
    %v1763 = vunpack.c.h.b16 %v594
    %v1764 = vunpack.c.l.b16 %v595
    %v1765 = vunpack.c.h.b16 %v595
    %v1766 = vunpack.c.l.b16 %v596
    %v1767 = vunpack.c.h.b16 %v596
    %v1768 = vunpack.c.l.b16 %v597
    %v1769 = vunpack.c.h.b16 %v597
    %v1770 = vunpack.c.l.b16 %v598
    %v1771 = vunpack.c.h.b16 %v598
    %v1772 = vunpack.c.l.b16 %v599
    %v1773 = vunpack.c.h.b16 %v599
    %v1774 = vunpack.c.l.b16 %v600
    %v1775 = vunpack.c.h.b16 %v600
    %v1776 = vunpack.c.l.b16 %v601
    %v1777 = vunpack.c.h.b16 %v601
    %v1778 = vunpack.c.l.b16 %v602
    %v1779 = vunpack.c.h.b16 %v602
    %v1780 = vunpack.c.l.b16 %v603
    %v1781 = vunpack.c.h.b16 %v603
    %v1782 = vunpack.c.l.b16 %v604
    %v1783 = vunpack.c.h.b16 %v604
    %v1784 = vunpack.c.l.b16 %v605
    %v1785 = vunpack.c.h.b16 %v605
    %v1786 = vunpack.c.l.b16 %v606
    %v1787 = vunpack.c.h.b16 %v606
    %v1788 = vunpack.c.l.b16 %v607
    %v1789 = vunpack.c.h.b16 %v607
    %v1790 = vunpack.c.l.b16 %v608
    %v1791 = vunpack.c.h.b16 %v608
    %v1792 = vunpack.c.l.b16 %v609
    %v1793 = vunpack.c.h.b16 %v609
    %v1794 = vunpack.c.l.b16 %v610
    %v1795 = vunpack.c.h.b16 %v610
    %v1796 = vunpack.c.l.b16 %v611
    %v1797 = vunpack.c.h.b16 %v611
    %v1798 = vunpack.c.l.b16 %v612
    %v1799 = vunpack.c.h.b16 %v612
    %v1800 = vunpack.c.l.b16 %v613
    %v1801 = vunpack.c.h.b16 %v613
    %v1802 = vunpack.c.l.b16 %v614
    %v1803 = vunpack.c.h.b16 %v614
    %v1804 = vunpack.c.l.b16 %v615
    %v1805 = vunpack.c.h.b16 %v615
    %v1806 = vunpack.c.l.b16 %v616
    %v1807 = vunpack.c.h.b16 %v616
    %v1808 = vunpack.c.l.b16 %v617
    %v1809 = vunpack.c.h.b16 %v617
    %v1810 = vunpack.c.l.b16 %v618
    %v1811 = vunpack.c.h.b16 %v618
    %v1812 = vunpack.c.l.b16 %v619
    %v1813 = vunpack.c.h.b16 %v619
    %v1814 = vunpack.c.l.b16 %v620
    %v1815 = vunpack.c.h.b16 %v620
    %v1816 = vunpack.c.l.b16 %v621
    %v1817 = vunpack.c.h.b16 %v621
    %v1818 = vunpack.c.l.b16 %v622
    %v1819 = vunpack.c.h.b16 %v622
    %v1820 = vunpack.c.l.b16 %v623
    %v1821 = vunpack.c.h.b16 %v623
    %v1822 = vunpack.c.l.b16 %v624
    %v1823 = vunpack.c.h.b16 %v624
    %v1824 = vunpack.c.l.b16 %v625
    %v1825 = vunpack.c.h.b16 %v625
    %v1826 = vunpack.c.l.b16 %v626
    %v1827 = vunpack.c.h.b16 %v626
    %v1828 = vunpack.c.l.b16 %v627
    %v1829 = vunpack.c.h.b16 %v627
    %v1830 = vunpack.c.l.b16 %v628
    %v1831 = vunpack.c.h.b16 %v628
    %v1832 = vunpack.c.l.b16 %v629
    %v1833 = vunpack.c.h.b16 %v629
    %v1834 = vunpack.c.l.b16 %v630
    %v1835 = vunpack.c.h.b16 %v630
    %v1836 = vunpack.c.l.b16 %v631
    %v1837 = vunpack.c.h.b16 %v631
    %v1838 = vunpack.c.l.b16 %v632
    %v1839 = vunpack.c.h.b16 %v632
    %v1840 = vunpack.c.l.b16 %v633
    %v1841 = vunpack.c.h.b16 %v633
    %v1842 = vunpack.c.l.b16 %v634
    %v1843 = vunpack.c.h.b16 %v634
    %v1844 = vunpack.c.l.b16 %v635
    %v1845 = vunpack.c.h.b16 %v635
    %v1846 = vunpack.c.l.b16 %v636
    %v1847 = vunpack.c.h.b16 %v636
    %v1848 = vunpack.c.l.b16 %v637
    %v1849 = vunpack.c.h.b16 %v637
    %v1850 = vunpack.c.l.b16 %v638
    %v1851 = vunpack.c.h.b16 %v638
    %v1852 = vunpack.c.l.b16 %v639
    %v1853 = vunpack.c.h.b16 %v639
    %v1854 = vunpack.c.l.b16 %v640
    %v1855 = vunpack.c.h.b16 %v640
    %v1856 = vunpack.c.l.b16 %v641
    %v1857 = vunpack.c.h.b16 %v641
    %v1858 = vunpack.c.l.b16 %v642
    %v1859 = vunpack.c.h.b16 %v642
    %v1860 = vunpack.c.l.b16 %v643
    %v1861 = vunpack.c.h.b16 %v643
    %v1862 = vunpack.c.l.b16 %v644
    %v1863 = vunpack.c.h.b16 %v644
    %v1864 = vunpack.c.l.b16 %v645
    %v1865 = vunpack.c.h.b16 %v645
    %v1866 = vunpack.c.l.b16 %v646
    %v1867 = vunpack.c.h.b16 %v646
    %v1868 = vunpack.c.l.b16 %v647
    %v1869 = vunpack.c.h.b16 %v647
    %v1870 = vunpack.c.l.b16 %v648
    %v1871 = vunpack.c.h.b16 %v648
    %v1872 = vunpack.c.l.b16 %v649
    %v1873 = vunpack.c.h.b16 %v649
    %v1874 = vunpack.c.l.b16 %v650
    %v1875 = vunpack.c.h.b16 %v650
    %v1876 = vunpack.c.l.b16 %v651
    %v1877 = vunpack.c.h.b16 %v651
    %v1878 = vunpack.c.l.b16 %v652
    %v1879 = vunpack.c.h.b16 %v652
    %v1880 = vunpack.c.l.b16 %v653
    %v1881 = vunpack.c.h.b16 %v653
    %v1882 = vunpack.c.l.b16 %v654
    %v1883 = vunpack.c.h.b16 %v654
    %v1884 = vunpack.c.l.b16 %v655
    %v1885 = vunpack.c.h.b16 %v655
    %v1886 = vunpack.c.l.b16 %v656
    %v1887 = vunpack.c.h.b16 %v656
    %v1888 = vunpack.c.l.b16 %v657
    %v1889 = vunpack.c.h.b16 %v657
    %v1890 = vunpack.c.l.b16 %v658
    %v1891 = vunpack.c.h.b16 %v658
    %v1892 = vunpack.c.l.b16 %v659
    %v1893 = vunpack.c.h.b16 %v659
    %v1894 = vunpack.c.l.b16 %v660
    %v1895 = vunpack.c.h.b16 %v660
    %v1896 = vunpack.c.l.b16 %v661
    %v1897 = vunpack.c.h.b16 %v661
    %v1898 = vunpack.c.l.b16 %v662
    %v1899 = vunpack.c.h.b16 %v662
    %v1900 = vunpack.c.l.b16 %v663
    %v1901 = vunpack.c.h.b16 %v663
    %v1902 = vunpack.c.l.b16 %v664
    %v1903 = vunpack.c.h.b16 %v664
    %v1904 = vunpack.c.l.b16 %v665
    %v1905 = vunpack.c.h.b16 %v665
    %v1906 = vunpack.c.l.b16 %v666
    %v1907 = vunpack.c.h.b16 %v666
    %v1908 = vunpack.c.l.b16 %v667
    %v1909 = vunpack.c.h.b16 %v667
    %v1910 = vunpack.c.l.b16 %v668
    %v1911 = vunpack.c.h.b16 %v668
    %v1912 = vunpack.c.l.b16 %v669
    %v1913 = vunpack.c.h.b16 %v669
    %v1914 = vunpack.c.l.b16 %v670
    %v1915 = vunpack.c.h.b16 %v670
    %v1916 = vunpack.c.l.b16 %v671
    %v1917 = vunpack.c.h.b16 %v671
    %v1918 = vunpack.c.l.b16 %v672
    %v1919 = vunpack.c.h.b16 %v672
    %v1920 = vunpack.c.l.b16 %v673
    %v1921 = vunpack.c.h.b16 %v673
    %v1922 = vunpack.c.l.b16 %v674
    %v1923 = vunpack.c.h.b16 %v674
    %v1924 = vunpack.c.l.b16 %v675
    %v1925 = vunpack.c.h.b16 %v675
    %v1926 = vunpack.c.l.b16 %v676
    %v1927 = vunpack.c.h.b16 %v676
    %v1928 = vunpack.c.l.b16 %v677
    %v1929 = vunpack.c.h.b16 %v677
    %v1930 = vunpack.c.l.b16 %v678
    %v1931 = vunpack.c.h.b16 %v678
    %v1932 = vunpack.c.l.b16 %v679
    %v1933 = vunpack.c.h.b16 %v679
    %v1934 = vunpack.c.l.b16 %v680
    %v1935 = vunpack.c.h.b16 %v680
    %v1936 = vunpack.c.l.b16 %v681
    %v1937 = vunpack.c.h.b16 %v681
    %v1938 = vunpack.c.l.b16 %v682
    %v1939 = vunpack.c.h.b16 %v682
    %v1940 = vunpack.c.l.b16 %v683
    %v1941 = vunpack.c.h.b16 %v683
    %v1942 = vunpack.c.l.b16 %v684
    %v1943 = vunpack.c.h.b16 %v684
    %v1944 = vunpack.c.l.b16 %v685
    %v1945 = vunpack.c.h.b16 %v685
    %v1946 = vunpack.c.l.b16 %v686
    %v1947 = vunpack.c.h.b16 %v686
    %v1948 = vunpack.c.l.b16 %v687
    %v1949 = vunpack.c.h.b16 %v687
    %v1950 = vunpack.c.l.b16 %v688
    %v1951 = vunpack.c.h.b16 %v688
    %v1952 = vunpack.c.l.b16 %v689
    %v1953 = vunpack.c.h.b16 %v689
    %v1954 = vunpack.c.l.b16 %v690
    %v1955 = vunpack.c.h.b16 %v690
    %v1956 = vunpack.c.l.b16 %v691
    %v1957 = vunpack.c.h.b16 %v691
    %v1958 = vunpack.c.l.b16 %v692
    %v1959 = vunpack.c.h.b16 %v692
    %v1960 = vunpack.c.l.b16 %v693
    %v1961 = vunpack.c.h.b16 %v693
    %v1962 = vunpack.c.l.b16 %v694
    %v1963 = vunpack.c.h.b16 %v694
    %v1964 = vunpack.c.l.b16 %v695
    %v1965 = vunpack.c.h.b16 %v695
    %v1966 = vunpack.c.l.b16 %v696
    %v1967 = vunpack.c.h.b16 %v696
    %v1968 = vunpack.c.l.b16 %v697
    %v1969 = vunpack.c.h.b16 %v697
    %v1970 = vunpack.c.l.b16 %v698
    %v1971 = vunpack.c.h.b16 %v698
    %v1972 = vunpack.c.l.b16 %v699
    %v1973 = vunpack.c.h.b16 %v699
    %v1974 = vunpack.c.l.b16 %v700
    %v1975 = vunpack.c.h.b16 %v700
    %v1976 = vunpack.c.l.b16 %v701
    %v1977 = vunpack.c.h.b16 %v701
    %v1978 = vunpack.c.l.b16 %v702
    %v1979 = vunpack.c.h.b16 %v702
    %v1980 = vunpack.c.l.b16 %v703
    %v1981 = vunpack.c.h.b16 %v703
    %v1982 = vunpack.c.l.b16 %v704
    %v1983 = vunpack.c.h.b16 %v704
    %v1984 = vunpack.c.l.b16 %v705
    %v1985 = vunpack.c.h.b16 %v705
    %v1986 = vunpack.c.l.b16 %v706
    %v1987 = vunpack.c.h.b16 %v706
    %v1988 = vunpack.c.l.b16 %v707
    %v1989 = vunpack.c.h.b16 %v707
    %v1990 = vunpack.c.l.b16 %v708
    %v1991 = vunpack.c.h.b16 %v708
    %v1992 = vunpack.c.l.b16 %v709
    %v1993 = vunpack.c.h.b16 %v709
    %v1994 = vunpack.c.l.b16 %v710
    %v1995 = vunpack.c.h.b16 %v710
    %v1996 = vunpack.c.l.b16 %v711
    %v1997 = vunpack.c.h.b16 %v711
    %v1998 = vunpack.c.l.b16 %v712
    %v1999 = vunpack.c.h.b16 %v712
    %v2000 = vunpack.c.l.b16 %v713
    %v2001 = vunpack.c.h.b16 %v713
    %v2002 = vunpack.c.l.b16 %v714
    %v2003 = vunpack.c.h.b16 %v714
    %v2004 = vunpack.c.l.b16 %v715
    %v2005 = vunpack.c.h.b16 %v715
    %v2006 = vunpack.c.l.b16 %v716
    %v2007 = vunpack.c.h.b16 %v716
    %v2008 = vunpack.c.l.b16 %v717
    %v2009 = vunpack.c.h.b16 %v717
    %v2010 = vunpack.c.l.b16 %v718
    %v2011 = vunpack.c.h.b16 %v718
    %v2012 = vunpack.c.l.b16 %v719
    %v2013 = vunpack.c.h.b16 %v719
    %v2014 = vunpack.c.l.b16 %v720
    %v2015 = vunpack.c.h.b16 %v720
    %v2016 = vunpack.c.l.b16 %v721
    %v2017 = vunpack.c.h.b16 %v721
    %v2018 = vunpack.c.l.b16 %v722
    %v2019 = vunpack.c.h.b16 %v722
    %v2020 = vunpack.c.l.b16 %v723
    %v2021 = vunpack.c.h.b16 %v723
    %v2022 = vunpack.c.l.b16 %v724
    %v2023 = vunpack.c.h.b16 %v724
    %v2024 = vunpack.c.l.b16 %v725
    %v2025 = vunpack.c.h.b16 %v725
    %v2026 = vunpack.c.l.b16 %v726
    %v2027 = vunpack.c.h.b16 %v726
    %v2028 = vunpack.c.l.b16 %v727
    %v2029 = vunpack.c.h.b16 %v727
    %v2030 = vunpack.c.l.b16 %v728
    %v2031 = vunpack.c.h.b16 %v728
    %v2032 = vunpack.c.l.b16 %v729
    %v2033 = vunpack.c.h.b16 %v729
    %v2034 = vunpack.c.l.b16 %v730
    %v2035 = vunpack.c.h.b16 %v730
    %v2036 = vunpack.c.l.b16 %v731
    %v2037 = vunpack.c.h.b16 %v731
    %v2038 = vunpack.c.l.b16 %v732
    %v2039 = vunpack.c.h.b16 %v732
    %v2040 = vunpack.c.l.b16 %v733
    %v2041 = vunpack.c.h.b16 %v733
    %v2042 = vunpack.c.l.b16 %v734
    %v2043 = vunpack.c.h.b16 %v734
    %v2044 = vunpack.c.l.b16 %v735
    %v2045 = vunpack.c.h.b16 %v735
    %v2046 = vunpack.c.l.b16 %v736
    %v2047 = vunpack.c.h.b16 %v736
    %v2048 = vunpack.c.l.b16 %v737
    %v2049 = vunpack.c.h.b16 %v737
    %v2050 = vunpack.c.l.b16 %v738
    %v2051 = vunpack.c.h.b16 %v738
    %v2052 = vunpack.c.l.b16 %v739
    %v2053 = vunpack.c.h.b16 %v739
    %v2054 = vunpack.c.l.b16 %v740
    %v2055 = vunpack.c.h.b16 %v740
    %v2056 = vunpack.c.l.b16 %v741
    %v2057 = vunpack.c.h.b16 %v741
    %v2058 = vunpack.c.l.b16 %v742
    %v2059 = vunpack.c.h.b16 %v742
    %v2060 = vunpack.c.l.b16 %v743
    %v2061 = vunpack.c.h.b16 %v743
    %v2062 = vunpack.c.l.b16 %v744
    %v2063 = vunpack.c.h.b16 %v744
    %v2064 = vunpack.c.l.b16 %v745
    %v2065 = vunpack.c.h.b16 %v745
    %v2066 = vunpack.c.l.b16 %v746
    %v2067 = vunpack.c.h.b16 %v746
    %v2068 = vunpack.c.l.b16 %v747
    %v2069 = vunpack.c.h.b16 %v747
    %v2070 = vunpack.c.l.b16 %v748
    %v2071 = vunpack.c.h.b16 %v748
    %v2072 = vunpack.c.l.b16 %v749
    %v2073 = vunpack.c.h.b16 %v749
    %v2074 = vunpack.c.l.b16 %v750
    %v2075 = vunpack.c.h.b16 %v750
    %v2076 = vunpack.c.l.b16 %v751
    %v2077 = vunpack.c.h.b16 %v751
    %v2078 = vunpack.c.l.b16 %v752
    %v2079 = vunpack.c.h.b16 %v752
    %v2080 = vunpack.c.l.b16 %v753
    %v2081 = vunpack.c.h.b16 %v753
    %v2082 = vunpack.c.l.b16 %v754
    %v2083 = vunpack.c.h.b16 %v754
    %v2084 = vunpack.c.l.b16 %v755
    %v2085 = vunpack.c.h.b16 %v755
    %v2086 = vunpack.c.l.b16 %v756
    %v2087 = vunpack.c.h.b16 %v756
    %v2088 = vunpack.c.l.b16 %v757
    %v2089 = vunpack.c.h.b16 %v757
    %v2090 = vunpack.c.l.b16 %v758
    %v2091 = vunpack.c.h.b16 %v758
    %v2092 = vunpack.c.l.b16 %v759
    %v2093 = vunpack.c.h.b16 %v759
    %v2094 = vunpack.c.l.b16 %v760
    %v2095 = vunpack.c.h.b16 %v760
    %v2096 = vunpack.c.l.b16 %v761
    %v2097 = vunpack.c.h.b16 %v761
    %v2098 = vunpack.c.l.b16 %v762
    %v2099 = vunpack.c.h.b16 %v762
    %v2100 = vunpack.c.l.b16 %v763
    %v2101 = vunpack.c.h.b16 %v763
    %v2102 = vunpack.c.l.b16 %v764
    %v2103 = vunpack.c.h.b16 %v764
    %v2104 = vunpack.c.l.b16 %v765
    %v2105 = vunpack.c.h.b16 %v765
    %v2106 = vunpack.c.l.b16 %v766
    %v2107 = vunpack.c.h.b16 %v766
    %v2108 = vunpack.c.l.b16 %v767
    %v2109 = vunpack.c.h.b16 %v767
    %v2110 = vunpack.c.l.b16 %v768
    %v2111 = vunpack.c.h.b16 %v768
    %v2112 = vunpack.c.l.b16 %v769
    %v2113 = vunpack.c.h.b16 %v769
    %v2114 = vunpack.c.l.b16 %v770
    %v2115 = vunpack.c.h.b16 %v770
    %v2116 = vunpack.c.l.b16 %v771
    %v2117 = vunpack.c.h.b16 %v771
    %v2118 = vunpack.c.l.b16 %v772
    %v2119 = vunpack.c.h.b16 %v772
    %v2120 = vunpack.c.l.b16 %v773
    %v2121 = vunpack.c.h.b16 %v773
    %v2122 = vunpack.c.l.b16 %v774
    %v2123 = vunpack.c.h.b16 %v774
    %v2124 = vunpack.c.l.b16 %v775
    %v2125 = vunpack.c.h.b16 %v775
    %v2126 = vunpack.c.l.b16 %v776
    %v2127 = vunpack.c.h.b16 %v776
    %v2128 = vunpack.c.l.b16 %v777
    %v2129 = vunpack.c.h.b16 %v777
    %v2130 = vunpack.c.l.b16 %v778
    %v2131 = vunpack.c.h.b16 %v778
    %v2132 = vunpack.c.l.b16 %v779
    %v2133 = vunpack.c.h.b16 %v779
    %v2134 = vunpack.c.l.b16 %v780
    %v2135 = vunpack.c.h.b16 %v780
    %v2136 = vunpack.c.l.b16 %v781
    %v2137 = vunpack.c.h.b16 %v781
    %v2138 = vunpack.c.l.b16 %v782
    %v2139 = vunpack.c.h.b16 %v782
    %v2140 = vunpack.c.l.b16 %v783
    %v2141 = vunpack.c.h.b16 %v783
    %v2142 = vunpack.c.l.b16 %v784
    %v2143 = vunpack.c.h.b16 %v784
    %v2144 = vunpack.c.l.b16 %v785
    %v2145 = vunpack.c.h.b16 %v785
    %v2146 = vunpack.c.l.b16 %v786
    %v2147 = vunpack.c.h.b16 %v786
    %v2148 = vunpack.c.l.b16 %v787
    %v2149 = vunpack.c.h.b16 %v787
    %v2150 = vunpack.c.l.b16 %v788
    %v2151 = vunpack.c.h.b16 %v788
    %v2152 = vunpack.c.l.b16 %v789
    %v2153 = vunpack.c.h.b16 %v789
    %v2154 = vunpack.c.l.b16 %v790
    %v2155 = vunpack.c.h.b16 %v790
    %v2156 = vunpack.c.l.b16 %v791
    %v2157 = vunpack.c.h.b16 %v791
    %v2158 = vunpack.c.l.b16 %v792
    %v2159 = vunpack.c.h.b16 %v792
    %v2160 = vunpack.c.l.b16 %v793
    %v2161 = vunpack.c.h.b16 %v793
    %v2162 = vunpack.c.l.b16 %v794
    %v2163 = vunpack.c.h.b16 %v794
    %v2164 = vunpack.c.l.b16 %v795
    %v2165 = vunpack.c.h.b16 %v795
    %v2166 = vunpack.c.l.b16 %v796
    %v2167 = vunpack.c.h.b16 %v796
    %v2168 = vunpack.c.l.b16 %v797
    %v2169 = vunpack.c.h.b16 %v797
    %v2170 = vunpack.c.l.b16 %v798
    %v2171 = vunpack.c.h.b16 %v798
    %v2172 = vunpack.c.l.b16 %v799
    %v2173 = vunpack.c.h.b16 %v799
    %v2174 = vunpack.c.l.b16 %v800
    %v2175 = vunpack.c.h.b16 %v800
    %v2176 = vunpack.c.l.b16 %v801
    %v2177 = vunpack.c.h.b16 %v801
    %v2178 = vunpack.c.l.b16 %v802
    %v2179 = vunpack.c.h.b16 %v802
    %v2180 = vunpack.c.l.b16 %v803
    %v2181 = vunpack.c.h.b16 %v803
    %v2182 = vunpack.c.l.b16 %v804
    %v2183 = vunpack.c.h.b16 %v804
    %v2184 = vunpack.c.l.b16 %v805
    %v2185 = vunpack.c.h.b16 %v805
    %v2186 = vunpack.c.l.b16 %v806
    %v2187 = vunpack.c.h.b16 %v806
    %v2188 = vunpack.c.l.b16 %v807
    %v2189 = vunpack.c.h.b16 %v807
    %v2190 = vunpack.c.l.b16 %v808
    %v2191 = vunpack.c.h.b16 %v808
    %v2192 = vunpack.c.l.b16 %v809
    %v2193 = vunpack.c.h.b16 %v809
    %v2194 = vunpack.c.l.b16 %v810
    %v2195 = vunpack.c.h.b16 %v810
    %v2196 = vunpack.c.l.b16 %v811
    %v2197 = vunpack.c.h.b16 %v811
    %v2198 = vunpack.c.l.b16 %v812
    %v2199 = vunpack.c.h.b16 %v812
    %v2200 = vunpack.c.l.b16 %v813
    %v2201 = vunpack.c.h.b16 %v813
    %v2202 = vunpack.c.l.b16 %v814
    %v2203 = vunpack.c.h.b16 %v814
    %v2204 = vunpack.c.l.b16 %v815
    %v2205 = vunpack.c.h.b16 %v815
    %v2206 = vunpack.c.l.b16 %v816
    %v2207 = vunpack.c.h.b16 %v816
    %v2208 = vunpack.c.l.b16 %v817
    %v2209 = vunpack.c.h.b16 %v817
    %v2210 = vunpack.c.l.b16 %v818
    %v2211 = vunpack.c.h.b16 %v818
    %v2212 = vunpack.c.l.b16 %v819
    %v2213 = vunpack.c.h.b16 %v819
    %v2214 = vunpack.c.l.b16 %v820
    %v2215 = vunpack.c.h.b16 %v820
    %v2216 = vunpack.c.l.b16 %v821
    %v2217 = vunpack.c.h.b16 %v821
    %v2218 = vunpack.c.l.b16 %v822
    %v2219 = vunpack.c.h.b16 %v822
    %v2220 = vunpack.c.l.b16 %v823
    %v2221 = vunpack.c.h.b16 %v823
    %v2222 = vunpack.c.l.b16 %v824
    %v2223 = vunpack.c.h.b16 %v824
    %v2224 = vunpack.c.l.b16 %v825
    %v2225 = vunpack.c.h.b16 %v825
    %v2226 = vunpack.c.l.b16 %v826
    %v2227 = vunpack.c.h.b16 %v826
    %v2228 = vunpack.c.l.b16 %v827
    %v2229 = vunpack.c.h.b16 %v827
    %v2230 = vunpack.c.l.b16 %v828
    %v2231 = vunpack.c.h.b16 %v828
    %v2232 = vunpack.c.l.b16 %v829
    %v2233 = vunpack.c.h.b16 %v829
    %v2234 = vunpack.c.l.b16 %v830
    %v2235 = vunpack.c.h.b16 %v830
    %v2236 = vunpack.c.l.b16 %v831
    %v2237 = vunpack.c.h.b16 %v831
    %v2238 = vunpack.c.l.b16 %v832
    %v2239 = vunpack.c.h.b16 %v832
    %v2240 = vunpack.c.l.b16 %v833
    %v2241 = vunpack.c.h.b16 %v833
    %v2242 = vunpack.c.l.b16 %v834
    %v2243 = vunpack.c.h.b16 %v834
    %v2244 = vunpack.c.l.b16 %v835
    %v2245 = vunpack.c.h.b16 %v835
    %v2246 = vunpack.c.l.b16 %v836
    %v2247 = vunpack.c.h.b16 %v836
    %v2248 = vunpack.c.l.b16 %v837
    %v2249 = vunpack.c.h.b16 %v837
    %v2250 = vunpack.c.l.b16 %v838
    %v2251 = vunpack.c.h.b16 %v838
    %v2252 = vunpack.c.l.b16 %v839
    %v2253 = vunpack.c.h.b16 %v839
    %v2254 = vunpack.c.l.b16 %v840
    %v2255 = vunpack.c.h.b16 %v840
    %v2256 = vunpack.c.l.b16 %v841
    %v2257 = vunpack.c.h.b16 %v841
    %v2258 = vunpack.c.l.b16 %v842
    %v2259 = vunpack.c.h.b16 %v842
    %v2260 = vunpack.c.l.b16 %v843
    %v2261 = vunpack.c.h.b16 %v843
    %v2262 = vunpack.c.l.b16 %v844
    %v2263 = vunpack.c.h.b16 %v844
    %v2264 = vunpack.c.l.b16 %v845
    %v2265 = vunpack.c.h.b16 %v845
    %v2266 = vunpack.c.l.b16 %v846
    %v2267 = vunpack.c.h.b16 %v846
    %v2268 = vunpack.c.l.b16 %v847
    %v2269 = vunpack.c.h.b16 %v847
    %v2270 = vunpack.c.l.b16 %v848
    %v2271 = vunpack.c.h.b16 %v848
    %v2272 = vunpack.c.l.b16 %v849
    %v2273 = vunpack.c.h.b16 %v849
    %v2274 = vunpack.c.l.b16 %v850
    %v2275 = vunpack.c.h.b16 %v850
    %v2276 = vunpack.c.l.b16 %v851
    %v2277 = vunpack.c.h.b16 %v851
    %v2278 = vunpack.c.l.b16 %v852
    %v2279 = vunpack.c.h.b16 %v852
    %v2280 = vunpack.c.l.b16 %v853
    %v2281 = vunpack.c.h.b16 %v853
    %v2282 = vunpack.c.l.b16 %v854
    %v2283 = vunpack.c.h.b16 %v854
    %v2284 = vunpack.c.l.b16 %v855
    %v2285 = vunpack.c.h.b16 %v855
    %v2286 = vunpack.c.l.b16 %v856
    %v2287 = vunpack.c.h.b16 %v856
    %v2288 = vunpack.c.l.b16 %v857
    %v2289 = vunpack.c.h.b16 %v857
    %v2290 = vunpack.c.l.b16 %v858
    %v2291 = vunpack.c.h.b16 %v858
    %v2292 = vunpack.c.l.b16 %v859
    %v2293 = vunpack.c.h.b16 %v859
    %v2294 = vunpack.c.l.b16 %v860
    %v2295 = vunpack.c.h.b16 %v860
    %v2296 = vunpack.c.l.b16 %v861
    %v2297 = vunpack.c.h.b16 %v861
    %v2298 = vunpack.c.l.b16 %v862
    %v2299 = vunpack.c.h.b16 %v862
    %v2300 = vunpack.c.l.b16 %v863
    %v2301 = vunpack.c.h.b16 %v863
    %v2302 = vunpack.c.l.b16 %v864
    %v2303 = vunpack.c.h.b16 %v864
    %v2304 = vunpack.c.l.b16 %v865
    %v2305 = vunpack.c.h.b16 %v865
    %v2306 = vunpack.c.l.b16 %v866
    %v2307 = vunpack.c.h.b16 %v866
    %v2308 = vunpack.c.l.b16 %v867
    %v2309 = vunpack.c.h.b16 %v867
    %v2310 = vunpack.c.l.b16 %v868
    %v2311 = vunpack.c.h.b16 %v868
    %v2312 = vunpack.c.l.b16 %v869
    %v2313 = vunpack.c.h.b16 %v869
    %v2314 = vunpack.c.l.b16 %v870
    %v2315 = vunpack.c.h.b16 %v870
    %v2316 = vunpack.c.l.b16 %v871
    %v2317 = vunpack.c.h.b16 %v871
    %v2318 = vunpack.c.l.b16 %v872
    %v2319 = vunpack.c.h.b16 %v872
    %v2320 = vunpack.c.l.b16 %v873
    %v2321 = vunpack.c.h.b16 %v873
    %v2322 = vunpack.c.l.b16 %v874
    %v2323 = vunpack.c.h.b16 %v874
    %v2324 = vunpack.c.l.b16 %v875
    %v2325 = vunpack.c.h.b16 %v875
    %v2326 = vunpack.c.l.b16 %v876
    %v2327 = vunpack.c.h.b16 %v876
    %v2328 = vunpack.c.l.b16 %v877
    %v2329 = vunpack.c.h.b16 %v877
    %v2330 = vunpack.c.l.b16 %v878
    %v2331 = vunpack.c.h.b16 %v878
    %v2332 = vunpack.c.l.b16 %v879
    %v2333 = vunpack.c.h.b16 %v879
    %v2334 = vunpack.c.l.b16 %v880
    %v2335 = vunpack.c.h.b16 %v880
    %v2336 = vunpack.c.l.b16 %v881
    %v2337 = vunpack.c.h.b16 %v881
    %v2338 = vunpack.c.l.b16 %v882
    %v2339 = vunpack.c.h.b16 %v882
    %v2340 = vunpack.c.l.b16 %v883
    %v2341 = vunpack.c.h.b16 %v883
    %v2342 = vunpack.c.l.b16 %v884
    %v2343 = vunpack.c.h.b16 %v884
    %v2344 = vunpack.c.l.b16 %v885
    %v2345 = vunpack.c.h.b16 %v885
    %v2346 = vunpack.c.l.b16 %v886
    %v2347 = vunpack.c.h.b16 %v886
    %v2348 = vunpack.c.l.b16 %v887
    %v2349 = vunpack.c.h.b16 %v887
    %v2350 = vunpack.c.l.b16 %v888
    %v2351 = vunpack.c.h.b16 %v888
    %v2352 = vunpack.c.l.b16 %v889
    %v2353 = vunpack.c.h.b16 %v889
    %v2354 = vunpack.c.l.b16 %v890
    %v2355 = vunpack.c.h.b16 %v890
    %v2356 = vunpack.c.l.b16 %v891
    %v2357 = vunpack.c.h.b16 %v891
    %v2358 = vunpack.c.l.b16 %v892
    %v2359 = vunpack.c.h.b16 %v892
    %v2360 = vunpack.c.l.b16 %v893
    %v2361 = vunpack.c.h.b16 %v893
    %v2362 = vunpack.c.l.b16 %v894
    %v2363 = vunpack.c.h.b16 %v894
    %v2364 = vunpack.c.l.b16 %v895
    %v2365 = vunpack.c.h.b16 %v895
    %v2366 = vunpack.c.l.b16 %v896
    %v2367 = vunpack.c.h.b16 %v896
    %v2368 = vunpack.c.l.b16 %v897
    %v2369 = vunpack.c.h.b16 %v897
    %v2370 = vunpack.c.l.b16 %v898
    %v2371 = vunpack.c.h.b16 %v898
    %v2372 = vunpack.c.l.b16 %v899
    %v2373 = vunpack.c.h.b16 %v899
    %v2374 = vunpack.c.l.b16 %v900
    %v2375 = vunpack.c.h.b16 %v900
    %v2376 = vunpack.c.l.b16 %v901
    %v2377 = vunpack.c.h.b16 %v901
    %v2378 = vunpack.c.l.b16 %v902
    %v2379 = vunpack.c.h.b16 %v902
    %v2380 = vunpack.c.l.b16 %v903
    %v2381 = vunpack.c.h.b16 %v903
    %v2382 = vunpack.c.l.b16 %v904
    %v2383 = vunpack.c.h.b16 %v904
    %v2384 = vunpack.c.l.b16 %v905
    %v2385 = vunpack.c.h.b16 %v905
    %v2386 = vunpack.c.l.b16 %v906
    %v2387 = vunpack.c.h.b16 %v906
    %v2388 = vunpack.c.l.b16 %v907
    %v2389 = vunpack.c.h.b16 %v907
    %v2390 = vunpack.c.l.b16 %v908
    %v2391 = vunpack.c.h.b16 %v908
    %v2392 = vunpack.c.l.b16 %v909
    %v2393 = vunpack.c.h.b16 %v909
    %v2394 = vunpack.c.l.b16 %v910
    %v2395 = vunpack.c.h.b16 %v910
    %v2396 = vunpack.c.l.b16 %v911
    %v2397 = vunpack.c.h.b16 %v911
    %v2398 = vunpack.c.l.b16 %v912
    %v2399 = vunpack.c.h.b16 %v912
    %v2400 = vunpack.c.l.b16 %v913
    %v2401 = vunpack.c.h.b16 %v913
    %v2402 = vunpack.c.l.b16 %v914
    %v2403 = vunpack.c.h.b16 %v914
    %v2404 = vunpack.c.l.b16 %v915
    %v2405 = vunpack.c.h.b16 %v915
    %v2406 = vunpack.c.l.b16 %v916
    %v2407 = vunpack.c.h.b16 %v916
    %v2408 = vunpack.c.l.b16 %v917
    %v2409 = vunpack.c.h.b16 %v917
    %v2410 = vunpack.c.l.b16 %v918
    %v2411 = vunpack.c.h.b16 %v918
    %v2412 = vunpack.c.l.b16 %v919
    %v2413 = vunpack.c.h.b16 %v919
    %v2414 = vunpack.c.l.b16 %v920
    %v2415 = vunpack.c.h.b16 %v920
    %v2416 = vunpack.c.l.b16 %v921
    %v2417 = vunpack.c.h.b16 %v921
    %v2418 = vunpack.c.l.b16 %v922
    %v2419 = vunpack.c.h.b16 %v922
    %v2420 = vunpack.c.l.b16 %v923
    %v2421 = vunpack.c.h.b16 %v923
    %v2422 = vunpack.c.l.b16 %v924
    %v2423 = vunpack.c.h.b16 %v924
    %v2424 = vunpack.c.l.b16 %v925
    %v2425 = vunpack.c.h.b16 %v925
    %v2426 = vunpack.c.l.b16 %v926
    %v2427 = vunpack.c.h.b16 %v926
    %v2428 = vunpack.c.l.b16 %v927
    %v2429 = vunpack.c.h.b16 %v927
    %v2430 = vunpack.c.l.b16 %v928
    %v2431 = vunpack.c.h.b16 %v928
    %v2432 = vunpack.c.l.b16 %v929
    %v2433 = vunpack.c.h.b16 %v929
    %v2434 = vunpack.c.l.b16 %v930
    %v2435 = vunpack.c.h.b16 %v930
    %v2436 = vunpack.c.l.b16 %v931
    %v2437 = vunpack.c.h.b16 %v931
    %v2438 = vunpack.c.l.b16 %v932
    %v2439 = vunpack.c.h.b16 %v932
    %v2440 = vunpack.c.l.b16 %v933
    %v2441 = vunpack.c.h.b16 %v933
    %v2442 = vunpack.c.l.b16 %v934
    %v2443 = vunpack.c.h.b16 %v934
    %v2444 = vunpack.c.l.b16 %v935
    %v2445 = vunpack.c.h.b16 %v935
    %v2446 = vunpack.c.l.b16 %v936
    %v2447 = vunpack.c.h.b16 %v936
    %v2448 = vunpack.c.l.b16 %v937
    %v2449 = vunpack.c.h.b16 %v937
    %v2450 = vunpack.c.l.b16 %v938
    %v2451 = vunpack.c.h.b16 %v938
    %v2452 = vunpack.c.l.b16 %v939
    %v2453 = vunpack.c.h.b16 %v939
    %v2454 = vunpack.c.l.b16 %v940
    %v2455 = vunpack.c.h.b16 %v940
    %v2456 = vunpack.c.l.b16 %v941
    %v2457 = vunpack.c.h.b16 %v941
    %v2458 = vunpack.c.l.b16 %v942
    %v2459 = vunpack.c.h.b16 %v942
    %v2460 = vunpack.c.l.b16 %v943
    %v2461 = vunpack.c.h.b16 %v943
    %v2462 = vunpack.c.l.b16 %v944
    %v2463 = vunpack.c.h.b16 %v944
    %v2464 = vunpack.c.l.b16 %v945
    %v2465 = vunpack.c.h.b16 %v945
    %v2466 = vunpack.c.l.b16 %v946
    %v2467 = vunpack.c.h.b16 %v946
    %v2468 = vunpack.c.l.b16 %v947
    %v2469 = vunpack.c.h.b16 %v947
    %v2470 = vunpack.c.l.b16 %v948
    %v2471 = vunpack.c.h.b16 %v948
    %v2472 = vunpack.c.l.b16 %v949
    %v2473 = vunpack.c.h.b16 %v949
    %v2474 = vunpack.c.l.b16 %v950
    %v2475 = vunpack.c.h.b16 %v950
    %v2476 = vunpack.c.l.b16 %v951
    %v2477 = vunpack.c.h.b16 %v951
    %v2478 = vunpack.c.l.b16 %v952
    %v2479 = vunpack.c.h.b16 %v952
    %v2480 = vunpack.c.l.b16 %v953
    %v2481 = vunpack.c.h.b16 %v953
    %v2482 = vunpack.c.l.b16 %v954
    %v2483 = vunpack.c.h.b16 %v954
    %v2484 = vunpack.c.l.b16 %v955
    %v2485 = vunpack.c.h.b16 %v955
    %v2486 = vunpack.c.l.b16 %v956
    %v2487 = vunpack.c.h.b16 %v956
    %v2488 = vunpack.c.l.b16 %v957
    %v2489 = vunpack.c.h.b16 %v957
    %v2490 = vunpack.c.l.b16 %v958
    %v2491 = vunpack.c.h.b16 %v958
    %v2492 = vunpack.c.l.b16 %v959
    %v2493 = vunpack.c.h.b16 %v959
    %v2494 = vunpack.c.l.b16 %v960
    %v2495 = vunpack.c.h.b16 %v960
    %v2496 = vunpack.c.l.b16 %v961
    %v2497 = vunpack.c.h.b16 %v961
    %v2498 = vunpack.c.l.b16 %v962
    %v2499 = vunpack.c.h.b16 %v962
    %v2500 = vunpack.c.l.b16 %v963
    %v2501 = vunpack.c.h.b16 %v963
    %v2502 = vunpack.c.l.b16 %v964
    %v2503 = vunpack.c.h.b16 %v964
    %v2504 = vunpack.c.l.b16 %v965
    %v2505 = vunpack.c.h.b16 %v965
    %v2506 = vunpack.c.l.b16 %v966
    %v2507 = vunpack.c.h.b16 %v966
    %v2508 = vunpack.c.l.b16 %v967
    %v2509 = vunpack.c.h.b16 %v967
    %v2510 = vunpack.c.l.b16 %v968
    %v2511 = vunpack.c.h.b16 %v968
    %v2512 = vunpack.c.l.b16 %v969
    %v2513 = vunpack.c.h.b16 %v969
    %v2514 = vunpack.c.l.b16 %v970
    %v2515 = vunpack.c.h.b16 %v970
    %v2516 = vunpack.c.l.b16 %v971
    %v2517 = vunpack.c.h.b16 %v971
    %v2518 = vunpack.c.l.b16 %v972
    %v2519 = vunpack.c.h.b16 %v972
    %v2520 = vunpack.c.l.b16 %v973
    %v2521 = vunpack.c.h.b16 %v973
    %v2522 = vunpack.c.l.b16 %v974
    %v2523 = vunpack.c.h.b16 %v974
    %v2524 = vunpack.c.l.b16 %v975
    %v2525 = vunpack.c.h.b16 %v975
    %v2526 = vunpack.c.l.b16 %v976
    %v2527 = vunpack.c.h.b16 %v976
    %v2528 = vunpack.c.l.b16 %v977
    %v2529 = vunpack.c.h.b16 %v977
    %v2530 = vunpack.c.l.b16 %v978
    %v2531 = vunpack.c.h.b16 %v978
    %v2532 = vunpack.c.l.b16 %v979
    %v2533 = vunpack.c.h.b16 %v979
    %v2534 = vunpack.c.l.b16 %v980
    %v2535 = vunpack.c.h.b16 %v980
    %v2536 = vunpack.c.l.b16 %v981
    %v2537 = vunpack.c.h.b16 %v981
    %v2538 = vunpack.c.l.b16 %v982
    %v2539 = vunpack.c.h.b16 %v982
    %v2540 = vunpack.c.l.b16 %v983
    %v2541 = vunpack.c.h.b16 %v983
    %v2542 = vunpack.c.l.b16 %v984
    %v2543 = vunpack.c.h.b16 %v984
    %v2544 = vunpack.c.l.b16 %v985
    %v2545 = vunpack.c.h.b16 %v985
    %v2546 = vunpack.c.l.b16 %v986
    %v2547 = vunpack.c.h.b16 %v986
    %v2548 = vunpack.c.l.b16 %v987
    %v2549 = vunpack.c.h.b16 %v987
    %v2550 = vunpack.c.l.b16 %v988
    %v2551 = vunpack.c.h.b16 %v988
    %v2552 = vunpack.c.l.b16 %v989
    %v2553 = vunpack.c.h.b16 %v989
    %v2554 = vunpack.c.l.b16 %v990
    %v2555 = vunpack.c.h.b16 %v990
    %v2556 = vunpack.c.l.b16 %v991
    %v2557 = vunpack.c.h.b16 %v991
    %v2558 = vunpack.c.l.b16 %v992
    %v2559 = vunpack.c.h.b16 %v992
    %v2560 = vunpack.c.l.b16 %v993
    %v2561 = vunpack.c.h.b16 %v993
    %v2562 = vunpack.c.l.b16 %v994
    %v2563 = vunpack.c.h.b16 %v994
    %v2564 = vunpack.c.l.b16 %v995
    %v2565 = vunpack.c.h.b16 %v995
    %v2566 = vunpack.c.l.b16 %v996
    %v2567 = vunpack.c.h.b16 %v996
    %v2568 = vunpack.c.l.b16 %v997
    %v2569 = vunpack.c.h.b16 %v997
    %v2570 = vunpack.c.l.b16 %v998
    %v2571 = vunpack.c.h.b16 %v998
    %v2572 = vunpack.c.l.b16 %v999
    %v2573 = vunpack.c.h.b16 %v999
    %v2574 = vunpack.c.l.b16 %v1000
    %v2575 = vunpack.c.h.b16 %v1000
    %v2576 = vunpack.c.l.b16 %v1001
    %v2577 = vunpack.c.h.b16 %v1001
    %v2578 = vunpack.c.l.b16 %v1002
    %v2579 = vunpack.c.h.b16 %v1002
    %v2580 = vunpack.c.l.b16 %v1003
    %v2581 = vunpack.c.h.b16 %v1003
    %v2582 = vpack.c.b16 %v1566, %v1558
    %v2583 = vpack.c.b16 %v1567, %v1559
    %v2584 = vpack.c.b16 %v1568, %v1560
    %v2585 = vpack.c.b16 %v1569, %v1561
    %v2586 = vpack.c.b16 %v1570, %v1562
    %v2587 = vpack.c.b16 %v1571, %v1563
    %v2588 = vpack.c.b16 %v1572, %v1564
    %v2589 = vpack.c.b16 %v1573, %v1565
    %v2590 = vpack.c.b16 %v1582, %v1574
    %v2591 = vpack.c.b16 %v1583, %v1575
    %v2592 = vpack.c.b16 %v1584, %v1576
    %v2593 = vpack.c.b16 %v1585, %v1577
    %v2594 = vpack.c.b16 %v1586, %v1578
    %v2595 = vpack.c.b16 %v1587, %v1579
    %v2596 = vpack.c.b16 %v1588, %v1580
    %v2597 = vpack.c.b16 %v1589, %v1581
    %v2598 = vpack.c.b16 %v1598, %v1590
    %v2599 = vpack.c.b16 %v1599, %v1591
    %v2600 = vpack.c.b16 %v1600, %v1592
    %v2601 = vpack.c.b16 %v1601, %v1593
    %v2602 = vpack.c.b16 %v1602, %v1594
    %v2603 = vpack.c.b16 %v1603, %v1595
    %v2604 = vpack.c.b16 %v1604, %v1596
    %v2605 = vpack.c.b16 %v1605, %v1597
    %v2606 = vpack.c.b16 %v1614, %v1606
    %v2607 = vpack.c.b16 %v1615, %v1607
    %v2608 = vpack.c.b16 %v1616, %v1608
    %v2609 = vpack.c.b16 %v1617, %v1609
    %v2610 = vpack.c.b16 %v1618, %v1610
    %v2611 = vpack.c.b16 %v1619, %v1611
    %v2612 = vpack.c.b16 %v1620, %v1612
    %v2613 = vpack.c.b16 %v1621, %v1613
    %v2614 = vpack.c.b16 %v1630, %v1622
    %v2615 = vpack.c.b16 %v1631, %v1623
    %v2616 = vpack.c.b16 %v1632, %v1624
    %v2617 = vpack.c.b16 %v1633, %v1625
    %v2618 = vpack.c.b16 %v1634, %v1626
    %v2619 = vpack.c.b16 %v1635, %v1627
    %v2620 = vpack.c.b16 %v1636, %v1628
    %v2621 = vpack.c.b16 %v1637, %v1629
    %v2622 = vpack.c.b16 %v1646, %v1638
    %v2623 = vpack.c.b16 %v1647, %v1639
    %v2624 = vpack.c.b16 %v1648, %v1640
    %v2625 = vpack.c.b16 %v1649, %v1641
    %v2626 = vpack.c.b16 %v1650, %v1642
    %v2627 = vpack.c.b16 %v1651, %v1643
    %v2628 = vpack.c.b16 %v1652, %v1644
    %v2629 = vpack.c.b16 %v1653, %v1645
    %v2630 = vpack.c.b16 %v1662, %v1654
    %v2631 = vpack.c.b16 %v1663, %v1655
    %v2632 = vpack.c.b16 %v1664, %v1656
    %v2633 = vpack.c.b16 %v1665, %v1657
    %v2634 = vpack.c.b16 %v1666, %v1658
    %v2635 = vpack.c.b16 %v1667, %v1659
    %v2636 = vpack.c.b16 %v1668, %v1660
    %v2637 = vpack.c.b16 %v1669, %v1661
    %v2638 = vpack.c.b16 %v1678, %v1670
    %v2639 = vpack.c.b16 %v1679, %v1671
    %v2640 = vpack.c.b16 %v1680, %v1672
    %v2641 = vpack.c.b16 %v1681, %v1673
    %v2642 = vpack.c.b16 %v1682, %v1674
    %v2643 = vpack.c.b16 %v1683, %v1675
    %v2644 = vpack.c.b16 %v1684, %v1676
    %v2645 = vpack.c.b16 %v1685, %v1677
    %v2646 = vpack.c.b16 %v1694, %v1686
    %v2647 = vpack.c.b16 %v1695, %v1687
    %v2648 = vpack.c.b16 %v1696, %v1688
    %v2649 = vpack.c.b16 %v1697, %v1689
    %v2650 = vpack.c.b16 %v1698, %v1690
    %v2651 = vpack.c.b16 %v1699, %v1691
    %v2652 = vpack.c.b16 %v1700, %v1692
    %v2653 = vpack.c.b16 %v1701, %v1693
    %v2654 = vpack.c.b16 %v1710, %v1702
    %v2655 = vpack.c.b16 %v1711, %v1703
    %v2656 = vpack.c.b16 %v1712, %v1704
    %v2657 = vpack.c.b16 %v1713, %v1705
    %v2658 = vpack.c.b16 %v1714, %v1706
    %v2659 = vpack.c.b16 %v1715, %v1707
    %v2660 = vpack.c.b16 %v1716, %v1708
    %v2661 = vpack.c.b16 %v1717, %v1709
    %v2662 = vpack.c.b16 %v1726, %v1718
    %v2663 = vpack.c.b16 %v1727, %v1719
    %v2664 = vpack.c.b16 %v1728, %v1720
    %v2665 = vpack.c.b16 %v1729, %v1721
    %v2666 = vpack.c.b16 %v1730, %v1722
    %v2667 = vpack.c.b16 %v1731, %v1723
    %v2668 = vpack.c.b16 %v1732, %v1724
    %v2669 = vpack.c.b16 %v1733, %v1725
    %v2670 = vpack.c.b16 %v1742, %v1734
    %v2671 = vpack.c.b16 %v1743, %v1735
    %v2672 = vpack.c.b16 %v1744, %v1736
    %v2673 = vpack.c.b16 %v1745, %v1737
    %v2674 = vpack.c.b16 %v1746, %v1738
    %v2675 = vpack.c.b16 %v1747, %v1739
    %v2676 = vpack.c.b16 %v1748, %v1740
    %v2677 = vpack.c.b16 %v1749, %v1741
    %v2678 = vpack.c.b16 %v1758, %v1750
    %v2679 = vpack.c.b16 %v1759, %v1751
    %v2680 = vpack.c.b16 %v1760, %v1752
    %v2681 = vpack.c.b16 %v1761, %v1753
    %v2682 = vpack.c.b16 %v1762, %v1754
    %v2683 = vpack.c.b16 %v1763, %v1755
    %v2684 = vpack.c.b16 %v1764, %v1756
    %v2685 = vpack.c.b16 %v1765, %v1757
    %v2686 = vpack.c.b16 %v1774, %v1766
    %v2687 = vpack.c.b16 %v1775, %v1767
    %v2688 = vpack.c.b16 %v1776, %v1768
    %v2689 = vpack.c.b16 %v1777, %v1769
    %v2690 = vpack.c.b16 %v1778, %v1770
    %v2691 = vpack.c.b16 %v1779, %v1771
    %v2692 = vpack.c.b16 %v1780, %v1772
    %v2693 = vpack.c.b16 %v1781, %v1773
    %v2694 = vpack.c.b16 %v1790, %v1782
    %v2695 = vpack.c.b16 %v1791, %v1783
    %v2696 = vpack.c.b16 %v1792, %v1784
    %v2697 = vpack.c.b16 %v1793, %v1785
    %v2698 = vpack.c.b16 %v1794, %v1786
    %v2699 = vpack.c.b16 %v1795, %v1787
    %v2700 = vpack.c.b16 %v1796, %v1788
    %v2701 = vpack.c.b16 %v1797, %v1789
    %v2702 = vpack.c.b16 %v1806, %v1798
    %v2703 = vpack.c.b16 %v1807, %v1799
    %v2704 = vpack.c.b16 %v1808, %v1800
    %v2705 = vpack.c.b16 %v1809, %v1801
    %v2706 = vpack.c.b16 %v1810, %v1802
    %v2707 = vpack.c.b16 %v1811, %v1803
    %v2708 = vpack.c.b16 %v1812, %v1804
    %v2709 = vpack.c.b16 %v1813, %v1805
    %v2710 = vpack.c.b16 %v1822, %v1814
    %v2711 = vpack.c.b16 %v1823, %v1815
    %v2712 = vpack.c.b16 %v1824, %v1816
    %v2713 = vpack.c.b16 %v1825, %v1817
    %v2714 = vpack.c.b16 %v1826, %v1818
    %v2715 = vpack.c.b16 %v1827, %v1819
    %v2716 = vpack.c.b16 %v1828, %v1820
    %v2717 = vpack.c.b16 %v1829, %v1821
    %v2718 = vpack.c.b16 %v1838, %v1830
    %v2719 = vpack.c.b16 %v1839, %v1831
    %v2720 = vpack.c.b16 %v1840, %v1832
    %v2721 = vpack.c.b16 %v1841, %v1833
    %v2722 = vpack.c.b16 %v1842, %v1834
    %v2723 = vpack.c.b16 %v1843, %v1835
    %v2724 = vpack.c.b16 %v1844, %v1836
    %v2725 = vpack.c.b16 %v1845, %v1837
    %v2726 = vpack.c.b16 %v1854, %v1846
    %v2727 = vpack.c.b16 %v1855, %v1847
    %v2728 = vpack.c.b16 %v1856, %v1848
    %v2729 = vpack.c.b16 %v1857, %v1849
    %v2730 = vpack.c.b16 %v1858, %v1850
    %v2731 = vpack.c.b16 %v1859, %v1851
    %v2732 = vpack.c.b16 %v1860, %v1852
    %v2733 = vpack.c.b16 %v1861, %v1853
    %v2734 = vpack.c.b16 %v1870, %v1862
    %v2735 = vpack.c.b16 %v1871, %v1863
    %v2736 = vpack.c.b16 %v1872, %v1864
    %v2737 = vpack.c.b16 %v1873, %v1865
    %v2738 = vpack.c.b16 %v1874, %v1866
    %v2739 = vpack.c.b16 %v1875, %v1867
    %v2740 = vpack.c.b16 %v1876, %v1868
    %v2741 = vpack.c.b16 %v1877, %v1869
    %v2742 = vpack.c.b16 %v1886, %v1878
    %v2743 = vpack.c.b16 %v1887, %v1879
    %v2744 = vpack.c.b16 %v1888, %v1880
    %v2745 = vpack.c.b16 %v1889, %v1881
    %v2746 = vpack.c.b16 %v1890, %v1882
    %v2747 = vpack.c.b16 %v1891, %v1883
    %v2748 = vpack.c.b16 %v1892, %v1884
    %v2749 = vpack.c.b16 %v1893, %v1885
    %v2750 = vpack.c.b16 %v1902, %v1894
    %v2751 = vpack.c.b16 %v1903, %v1895
    %v2752 = vpack.c.b16 %v1904, %v1896
    %v2753 = vpack.c.b16 %v1905, %v1897
    %v2754 = vpack.c.b16 %v1906, %v1898
    %v2755 = vpack.c.b16 %v1907, %v1899
    %v2756 = vpack.c.b16 %v1908, %v1900
    %v2757 = vpack.c.b16 %v1909, %v1901
    %v2758 = vpack.c.b16 %v1918, %v1910
    %v2759 = vpack.c.b16 %v1919, %v1911
    %v2760 = vpack.c.b16 %v1920, %v1912
    %v2761 = vpack.c.b16 %v1921, %v1913
    %v2762 = vpack.c.b16 %v1922, %v1914
    %v2763 = vpack.c.b16 %v1923, %v1915
    %v2764 = vpack.c.b16 %v1924, %v1916
    %v2765 = vpack.c.b16 %v1925, %v1917
    %v2766 = vpack.c.b16 %v1934, %v1926
    %v2767 = vpack.c.b16 %v1935, %v1927
    %v2768 = vpack.c.b16 %v1936, %v1928
    %v2769 = vpack.c.b16 %v1937, %v1929
    %v2770 = vpack.c.b16 %v1938, %v1930
    %v2771 = vpack.c.b16 %v1939, %v1931
    %v2772 = vpack.c.b16 %v1940, %v1932
    %v2773 = vpack.c.b16 %v1941, %v1933
    %v2774 = vpack.c.b16 %v1950, %v1942
    %v2775 = vpack.c.b16 %v1951, %v1943
    %v2776 = vpack.c.b16 %v1952, %v1944
    %v2777 = vpack.c.b16 %v1953, %v1945
    %v2778 = vpack.c.b16 %v1954, %v1946
    %v2779 = vpack.c.b16 %v1955, %v1947
    %v2780 = vpack.c.b16 %v1956, %v1948
    %v2781 = vpack.c.b16 %v1957, %v1949
    %v2782 = vpack.c.b16 %v1966, %v1958
    %v2783 = vpack.c.b16 %v1967, %v1959
    %v2784 = vpack.c.b16 %v1968, %v1960
    %v2785 = vpack.c.b16 %v1969, %v1961
    %v2786 = vpack.c.b16 %v1970, %v1962
    %v2787 = vpack.c.b16 %v1971, %v1963
    %v2788 = vpack.c.b16 %v1972, %v1964
    %v2789 = vpack.c.b16 %v1973, %v1965
    %v2790 = vpack.c.b16 %v1982, %v1974
    %v2791 = vpack.c.b16 %v1983, %v1975
    %v2792 = vpack.c.b16 %v1984, %v1976
    %v2793 = vpack.c.b16 %v1985, %v1977
    %v2794 = vpack.c.b16 %v1986, %v1978
    %v2795 = vpack.c.b16 %v1987, %v1979
    %v2796 = vpack.c.b16 %v1988, %v1980
    %v2797 = vpack.c.b16 %v1989, %v1981
    %v2798 = vpack.c.b16 %v1998, %v1990
    %v2799 = vpack.c.b16 %v1999, %v1991
    %v2800 = vpack.c.b16 %v2000, %v1992
    %v2801 = vpack.c.b16 %v2001, %v1993
    %v2802 = vpack.c.b16 %v2002, %v1994
    %v2803 = vpack.c.b16 %v2003, %v1995
    %v2804 = vpack.c.b16 %v2004, %v1996
    %v2805 = vpack.c.b16 %v2005, %v1997
    %v2806 = vpack.c.b16 %v2014, %v2006
    %v2807 = vpack.c.b16 %v2015, %v2007
    %v2808 = vpack.c.b16 %v2016, %v2008
    %v2809 = vpack.c.b16 %v2017, %v2009
    %v2810 = vpack.c.b16 %v2018, %v2010
    %v2811 = vpack.c.b16 %v2019, %v2011
    %v2812 = vpack.c.b16 %v2020, %v2012
    %v2813 = vpack.c.b16 %v2021, %v2013
    %v2814 = vpack.c.b16 %v2030, %v2022
    %v2815 = vpack.c.b16 %v2031, %v2023
    %v2816 = vpack.c.b16 %v2032, %v2024
    %v2817 = vpack.c.b16 %v2033, %v2025
    %v2818 = vpack.c.b16 %v2034, %v2026
    %v2819 = vpack.c.b16 %v2035, %v2027
    %v2820 = vpack.c.b16 %v2036, %v2028
    %v2821 = vpack.c.b16 %v2037, %v2029
    %v2822 = vpack.c.b16 %v2046, %v2038
    %v2823 = vpack.c.b16 %v2047, %v2039
    %v2824 = vpack.c.b16 %v2048, %v2040
    %v2825 = vpack.c.b16 %v2049, %v2041
    %v2826 = vpack.c.b16 %v2050, %v2042
    %v2827 = vpack.c.b16 %v2051, %v2043
    %v2828 = vpack.c.b16 %v2052, %v2044
    %v2829 = vpack.c.b16 %v2053, %v2045
    %v2830 = vpack.c.b16 %v2062, %v2054
    %v2831 = vpack.c.b16 %v2063, %v2055
    %v2832 = vpack.c.b16 %v2064, %v2056
    %v2833 = vpack.c.b16 %v2065, %v2057
    %v2834 = vpack.c.b16 %v2066, %v2058
    %v2835 = vpack.c.b16 %v2067, %v2059
    %v2836 = vpack.c.b16 %v2068, %v2060
    %v2837 = vpack.c.b16 %v2069, %v2061
    %v2838 = vpack.c.b16 %v2078, %v2070
    %v2839 = vpack.c.b16 %v2079, %v2071
    %v2840 = vpack.c.b16 %v2080, %v2072
    %v2841 = vpack.c.b16 %v2081, %v2073
    %v2842 = vpack.c.b16 %v2082, %v2074
    %v2843 = vpack.c.b16 %v2083, %v2075
    %v2844 = vpack.c.b16 %v2084, %v2076
    %v2845 = vpack.c.b16 %v2085, %v2077
    %v2846 = vpack.c.b16 %v2094, %v2086
    %v2847 = vpack.c.b16 %v2095, %v2087
    %v2848 = vpack.c.b16 %v2096, %v2088
    %v2849 = vpack.c.b16 %v2097, %v2089
    %v2850 = vpack.c.b16 %v2098, %v2090
    %v2851 = vpack.c.b16 %v2099, %v2091
    %v2852 = vpack.c.b16 %v2100, %v2092
    %v2853 = vpack.c.b16 %v2101, %v2093
    %v2854 = vpack.c.b16 %v2110, %v2102
    %v2855 = vpack.c.b16 %v2111, %v2103
    %v2856 = vpack.c.b16 %v2112, %v2104
    %v2857 = vpack.c.b16 %v2113, %v2105
    %v2858 = vpack.c.b16 %v2114, %v2106
    %v2859 = vpack.c.b16 %v2115, %v2107
    %v2860 = vpack.c.b16 %v2116, %v2108
    %v2861 = vpack.c.b16 %v2117, %v2109
    %v2862 = vpack.c.b16 %v2126, %v2118
    %v2863 = vpack.c.b16 %v2127, %v2119
    %v2864 = vpack.c.b16 %v2128, %v2120
    %v2865 = vpack.c.b16 %v2129, %v2121
    %v2866 = vpack.c.b16 %v2130, %v2122
    %v2867 = vpack.c.b16 %v2131, %v2123
    %v2868 = vpack.c.b16 %v2132, %v2124
    %v2869 = vpack.c.b16 %v2133, %v2125
    %v2870 = vpack.c.b16 %v2142, %v2134
    %v2871 = vpack.c.b16 %v2143, %v2135
    %v2872 = vpack.c.b16 %v2144, %v2136
    %v2873 = vpack.c.b16 %v2145, %v2137
    %v2874 = vpack.c.b16 %v2146, %v2138
    %v2875 = vpack.c.b16 %v2147, %v2139
    %v2876 = vpack.c.b16 %v2148, %v2140
    %v2877 = vpack.c.b16 %v2149, %v2141
    %v2878 = vpack.c.b16 %v2158, %v2150
    %v2879 = vpack.c.b16 %v2159, %v2151
    %v2880 = vpack.c.b16 %v2160, %v2152
    %v2881 = vpack.c.b16 %v2161, %v2153
    %v2882 = vpack.c.b16 %v2162, %v2154
    %v2883 = vpack.c.b16 %v2163, %v2155
    %v2884 = vpack.c.b16 %v2164, %v2156
    %v2885 = vpack.c.b16 %v2165, %v2157
    %v2886 = vpack.c.b16 %v2174, %v2166
    %v2887 = vpack.c.b16 %v2175, %v2167
    %v2888 = vpack.c.b16 %v2176, %v2168
    %v2889 = vpack.c.b16 %v2177, %v2169
    %v2890 = vpack.c.b16 %v2178, %v2170
    %v2891 = vpack.c.b16 %v2179, %v2171
    %v2892 = vpack.c.b16 %v2180, %v2172
    %v2893 = vpack.c.b16 %v2181, %v2173
    %v2894 = vpack.c.b16 %v2190, %v2182
    %v2895 = vpack.c.b16 %v2191, %v2183
    %v2896 = vpack.c.b16 %v2192, %v2184
    %v2897 = vpack.c.b16 %v2193, %v2185
    %v2898 = vpack.c.b16 %v2194, %v2186
    %v2899 = vpack.c.b16 %v2195, %v2187
    %v2900 = vpack.c.b16 %v2196, %v2188
    %v2901 = vpack.c.b16 %v2197, %v2189
    %v2902 = vpack.c.b16 %v2206, %v2198
    %v2903 = vpack.c.b16 %v2207, %v2199
    %v2904 = vpack.c.b16 %v2208, %v2200
    %v2905 = vpack.c.b16 %v2209, %v2201
    %v2906 = vpack.c.b16 %v2210, %v2202
    %v2907 = vpack.c.b16 %v2211, %v2203
    %v2908 = vpack.c.b16 %v2212, %v2204
    %v2909 = vpack.c.b16 %v2213, %v2205
    %v2910 = vpack.c.b16 %v2222, %v2214
    %v2911 = vpack.c.b16 %v2223, %v2215
    %v2912 = vpack.c.b16 %v2224, %v2216
    %v2913 = vpack.c.b16 %v2225, %v2217
    %v2914 = vpack.c.b16 %v2226, %v2218
    %v2915 = vpack.c.b16 %v2227, %v2219
    %v2916 = vpack.c.b16 %v2228, %v2220
    %v2917 = vpack.c.b16 %v2229, %v2221
    %v2918 = vpack.c.b16 %v2238, %v2230
    %v2919 = vpack.c.b16 %v2239, %v2231
    %v2920 = vpack.c.b16 %v2240, %v2232
    %v2921 = vpack.c.b16 %v2241, %v2233
    %v2922 = vpack.c.b16 %v2242, %v2234
    %v2923 = vpack.c.b16 %v2243, %v2235
    %v2924 = vpack.c.b16 %v2244, %v2236
    %v2925 = vpack.c.b16 %v2245, %v2237
    %v2926 = vpack.c.b16 %v2254, %v2246
    %v2927 = vpack.c.b16 %v2255, %v2247
    %v2928 = vpack.c.b16 %v2256, %v2248
    %v2929 = vpack.c.b16 %v2257, %v2249
    %v2930 = vpack.c.b16 %v2258, %v2250
    %v2931 = vpack.c.b16 %v2259, %v2251
    %v2932 = vpack.c.b16 %v2260, %v2252
    %v2933 = vpack.c.b16 %v2261, %v2253
    %v2934 = vpack.c.b16 %v2270, %v2262
    %v2935 = vpack.c.b16 %v2271, %v2263
    %v2936 = vpack.c.b16 %v2272, %v2264
    %v2937 = vpack.c.b16 %v2273, %v2265
    %v2938 = vpack.c.b16 %v2274, %v2266
    %v2939 = vpack.c.b16 %v2275, %v2267
    %v2940 = vpack.c.b16 %v2276, %v2268
    %v2941 = vpack.c.b16 %v2277, %v2269
    %v2942 = vpack.c.b16 %v2286, %v2278
    %v2943 = vpack.c.b16 %v2287, %v2279
    %v2944 = vpack.c.b16 %v2288, %v2280
    %v2945 = vpack.c.b16 %v2289, %v2281
    %v2946 = vpack.c.b16 %v2290, %v2282
    %v2947 = vpack.c.b16 %v2291, %v2283
    %v2948 = vpack.c.b16 %v2292, %v2284
    %v2949 = vpack.c.b16 %v2293, %v2285
    %v2950 = vpack.c.b16 %v2302, %v2294
    %v2951 = vpack.c.b16 %v2303, %v2295
    %v2952 = vpack.c.b16 %v2304, %v2296
    %v2953 = vpack.c.b16 %v2305, %v2297
    %v2954 = vpack.c.b16 %v2306, %v2298
    %v2955 = vpack.c.b16 %v2307, %v2299
    %v2956 = vpack.c.b16 %v2308, %v2300
    %v2957 = vpack.c.b16 %v2309, %v2301
    %v2958 = vpack.c.b16 %v2318, %v2310
    %v2959 = vpack.c.b16 %v2319, %v2311
    %v2960 = vpack.c.b16 %v2320, %v2312
    %v2961 = vpack.c.b16 %v2321, %v2313
    %v2962 = vpack.c.b16 %v2322, %v2314
    %v2963 = vpack.c.b16 %v2323, %v2315
    %v2964 = vpack.c.b16 %v2324, %v2316
    %v2965 = vpack.c.b16 %v2325, %v2317
    %v2966 = vpack.c.b16 %v2334, %v2326
    %v2967 = vpack.c.b16 %v2335, %v2327
    %v2968 = vpack.c.b16 %v2336, %v2328
    %v2969 = vpack.c.b16 %v2337, %v2329
    %v2970 = vpack.c.b16 %v2338, %v2330
    %v2971 = vpack.c.b16 %v2339, %v2331
    %v2972 = vpack.c.b16 %v2340, %v2332
    %v2973 = vpack.c.b16 %v2341, %v2333
    %v2974 = vpack.c.b16 %v2350, %v2342
    %v2975 = vpack.c.b16 %v2351, %v2343
    %v2976 = vpack.c.b16 %v2352, %v2344
    %v2977 = vpack.c.b16 %v2353, %v2345
    %v2978 = vpack.c.b16 %v2354, %v2346
    %v2979 = vpack.c.b16 %v2355, %v2347
    %v2980 = vpack.c.b16 %v2356, %v2348
    %v2981 = vpack.c.b16 %v2357, %v2349
    %v2982 = vpack.c.b16 %v2366, %v2358
    %v2983 = vpack.c.b16 %v2367, %v2359
    %v2984 = vpack.c.b16 %v2368, %v2360
    %v2985 = vpack.c.b16 %v2369, %v2361
    %v2986 = vpack.c.b16 %v2370, %v2362
    %v2987 = vpack.c.b16 %v2371, %v2363
    %v2988 = vpack.c.b16 %v2372, %v2364
    %v2989 = vpack.c.b16 %v2373, %v2365
    %v2990 = vpack.c.b16 %v2382, %v2374
    %v2991 = vpack.c.b16 %v2383, %v2375
    %v2992 = vpack.c.b16 %v2384, %v2376
    %v2993 = vpack.c.b16 %v2385, %v2377
    %v2994 = vpack.c.b16 %v2386, %v2378
    %v2995 = vpack.c.b16 %v2387, %v2379
    %v2996 = vpack.c.b16 %v2388, %v2380
    %v2997 = vpack.c.b16 %v2389, %v2381
    %v2998 = vpack.c.b16 %v2398, %v2390
    %v2999 = vpack.c.b16 %v2399, %v2391
    %v3000 = vpack.c.b16 %v2400, %v2392
    %v3001 = vpack.c.b16 %v2401, %v2393
    %v3002 = vpack.c.b16 %v2402, %v2394
    %v3003 = vpack.c.b16 %v2403, %v2395
    %v3004 = vpack.c.b16 %v2404, %v2396
    %v3005 = vpack.c.b16 %v2405, %v2397
    %v3006 = vpack.c.b16 %v2414, %v2406
    %v3007 = vpack.c.b16 %v2415, %v2407
    %v3008 = vpack.c.b16 %v2416, %v2408
    %v3009 = vpack.c.b16 %v2417, %v2409
    %v3010 = vpack.c.b16 %v2418, %v2410
    %v3011 = vpack.c.b16 %v2419, %v2411
    %v3012 = vpack.c.b16 %v2420, %v2412
    %v3013 = vpack.c.b16 %v2421, %v2413
    %v3014 = vpack.c.b16 %v2430, %v2422
    %v3015 = vpack.c.b16 %v2431, %v2423
    %v3016 = vpack.c.b16 %v2432, %v2424
    %v3017 = vpack.c.b16 %v2433, %v2425
    %v3018 = vpack.c.b16 %v2434, %v2426
    %v3019 = vpack.c.b16 %v2435, %v2427
    %v3020 = vpack.c.b16 %v2436, %v2428
    %v3021 = vpack.c.b16 %v2437, %v2429
    %v3022 = vpack.c.b16 %v2446, %v2438
    %v3023 = vpack.c.b16 %v2447, %v2439
    %v3024 = vpack.c.b16 %v2448, %v2440
    %v3025 = vpack.c.b16 %v2449, %v2441
    %v3026 = vpack.c.b16 %v2450, %v2442
    %v3027 = vpack.c.b16 %v2451, %v2443
    %v3028 = vpack.c.b16 %v2452, %v2444
    %v3029 = vpack.c.b16 %v2453, %v2445
    %v3030 = vpack.c.b16 %v2462, %v2454
    %v3031 = vpack.c.b16 %v2463, %v2455
    %v3032 = vpack.c.b16 %v2464, %v2456
    %v3033 = vpack.c.b16 %v2465, %v2457
    %v3034 = vpack.c.b16 %v2466, %v2458
    %v3035 = vpack.c.b16 %v2467, %v2459
    %v3036 = vpack.c.b16 %v2468, %v2460
    %v3037 = vpack.c.b16 %v2469, %v2461
    %v3038 = vpack.c.b16 %v2478, %v2470
    %v3039 = vpack.c.b16 %v2479, %v2471
    %v3040 = vpack.c.b16 %v2480, %v2472
    %v3041 = vpack.c.b16 %v2481, %v2473
    %v3042 = vpack.c.b16 %v2482, %v2474
    %v3043 = vpack.c.b16 %v2483, %v2475
    %v3044 = vpack.c.b16 %v2484, %v2476
    %v3045 = vpack.c.b16 %v2485, %v2477
    %v3046 = vpack.c.b16 %v2494, %v2486
    %v3047 = vpack.c.b16 %v2495, %v2487
    %v3048 = vpack.c.b16 %v2496, %v2488
    %v3049 = vpack.c.b16 %v2497, %v2489
    %v3050 = vpack.c.b16 %v2498, %v2490
    %v3051 = vpack.c.b16 %v2499, %v2491
    %v3052 = vpack.c.b16 %v2500, %v2492
    %v3053 = vpack.c.b16 %v2501, %v2493
    %v3054 = vpack.c.b16 %v2510, %v2502
    %v3055 = vpack.c.b16 %v2511, %v2503
    %v3056 = vpack.c.b16 %v2512, %v2504
    %v3057 = vpack.c.b16 %v2513, %v2505
    %v3058 = vpack.c.b16 %v2514, %v2506
    %v3059 = vpack.c.b16 %v2515, %v2507
    %v3060 = vpack.c.b16 %v2516, %v2508
    %v3061 = vpack.c.b16 %v2517, %v2509
    %v3062 = vpack.c.b16 %v2526, %v2518
    %v3063 = vpack.c.b16 %v2527, %v2519
    %v3064 = vpack.c.b16 %v2528, %v2520
    %v3065 = vpack.c.b16 %v2529, %v2521
    %v3066 = vpack.c.b16 %v2530, %v2522
    %v3067 = vpack.c.b16 %v2531, %v2523
    %v3068 = vpack.c.b16 %v2532, %v2524
    %v3069 = vpack.c.b16 %v2533, %v2525
    %v3070 = vpack.c.b16 %v2542, %v2534
    %v3071 = vpack.c.b16 %v2543, %v2535
    %v3072 = vpack.c.b16 %v2544, %v2536
    %v3073 = vpack.c.b16 %v2545, %v2537
    %v3074 = vpack.c.b16 %v2546, %v2538
    %v3075 = vpack.c.b16 %v2547, %v2539
    %v3076 = vpack.c.b16 %v2548, %v2540
    %v3077 = vpack.c.b16 %v2549, %v2541
    %v3078 = vpack.c.b16 %v2558, %v2550
    %v3079 = vpack.c.b16 %v2559, %v2551
    %v3080 = vpack.c.b16 %v2560, %v2552
    %v3081 = vpack.c.b16 %v2561, %v2553
    %v3082 = vpack.c.b16 %v2562, %v2554
    %v3083 = vpack.c.b16 %v2563, %v2555
    %v3084 = vpack.c.b16 %v2564, %v2556
    %v3085 = vpack.c.b16 %v2565, %v2557
    %v3086 = vpack.c.b16 %v2574, %v2566
    %v3087 = vpack.c.b16 %v2575, %v2567
    %v3088 = vpack.c.b16 %v2576, %v2568
    %v3089 = vpack.c.b16 %v2577, %v2569
    %v3090 = vpack.c.b16 %v2578, %v2570
    %v3091 = vpack.c.b16 %v2579, %v2571
    %v3092 = vpack.c.b16 %v2580, %v2572
    %v3093 = vpack.c.b16 %v2581, %v2573
    %3606 = vmatprep.subr.bf16.mxu0 %v2639
    %3607 = vmatpush1.bf16.msra.mxu0 %v2638
    %3608 = vmatprep.subr.bf16.mxu0 %v2631
    %3609 = vmatpush1.bf16.msra.mxu0 %v2630
    %3610 = vmatprep.subr.bf16.mxu0 %v2623
    %3611 = vmatpush1.bf16.msra.mxu0 %v2622
    %3612 = vmatprep.subr.bf16.mxu0 %v2615
    %3613 = vmatpush1.bf16.msra.mxu0 %v2614
    %3614 = vmatprep.subr.bf16.mxu0 %v2607
    %3615 = vmatpush1.bf16.msra.mxu0 %v2606
    %3616 = vmatprep.subr.bf16.mxu0 %v2599
    %3617 = vmatpush1.bf16.msra.mxu0 %v2598
    %3618 = vmatprep.subr.bf16.mxu0 %v2591
    %3619 = vmatpush1.bf16.msra.mxu0 %v2590
    %3620 = vmatprep.subr.bf16.mxu0 %v2583
    %3621 = vmatpush1.bf16.msra.mxu0 %v2582
    %3622 = vmatprep.subr.bf16.mxu0 %v2703
    %3623 = vmatpush2.bf16.msra.mxu0 %v2702
    %3624 = vmatprep.subr.bf16.mxu0 %v2695
    %3625 = vmatpush2.bf16.msra.mxu0 %v2694
    %3626 = vmatprep.subr.bf16.mxu0 %v2687
    %3627 = vmatpush2.bf16.msra.mxu0 %v2686
    %3628 = vmatprep.subr.bf16.mxu0 %v2679
    %3629 = vmatpush2.bf16.msra.mxu0 %v2678
    %3630 = vmatprep.subr.bf16.mxu0 %v2671
    %3631 = vmatpush2.bf16.msra.mxu0 %v2670
    %3632 = vmatprep.subr.bf16.mxu0 %v2663
    %3633 = vmatpush2.bf16.msra.mxu0 %v2662
    %3634 = vmatprep.subr.bf16.mxu0 %v2655
    %3635 = vmatpush2.bf16.msra.mxu0 %v2654
    %3636 = vmatprep.subr.bf16.mxu0 %v2647
    %3637 = vmatpush2.bf16.msra.mxu0 %v2646
    %3638 = vmatprep.mubr.bf16.mxu0 %v485
    %3639 = vmatmul.mubr.bf16.gmra.mxu0 %v484
    %v3640 = vpop.f32.mrf.mxu0
    %v3641 = vadd.f32 %v1009, %v3640
    %v3642 = vpop.f32.mrf.mxu0
    %v3643 = vadd.f32 %v1013, %v3642
    %v3644 = vpop.f32.mrf.mxu0
    %v3645 = vpop.f32.mrf.mxu0
    %3646 = vdwg.mxu0
    %3647 = vmatprep.subr.bf16.mxu0 %v2767
    %3648 = vmatpush1.bf16.msra.mxu0 %v2766
    %3649 = vmatprep.subr.bf16.mxu0 %v2759
    %3650 = vmatpush1.bf16.msra.mxu0 %v2758
    %3651 = vmatprep.subr.bf16.mxu0 %v2751
    %3652 = vmatpush1.bf16.msra.mxu0 %v2750
    %3653 = vmatprep.subr.bf16.mxu0 %v2743
    %3654 = vmatpush1.bf16.msra.mxu0 %v2742
    %3655 = vmatprep.subr.bf16.mxu0 %v2735
    %3656 = vmatpush1.bf16.msra.mxu0 %v2734
    %3657 = vmatprep.subr.bf16.mxu0 %v2727
    %3658 = vmatpush1.bf16.msra.mxu0 %v2726
    %3659 = vmatprep.subr.bf16.mxu0 %v2719
    %3660 = vmatpush1.bf16.msra.mxu0 %v2718
    %3661 = vmatprep.subr.bf16.mxu0 %v2711
    %3662 = vmatpush1.bf16.msra.mxu0 %v2710
    %3663 = vmatprep.subr.bf16.mxu0 %v2831
    %3664 = vmatpush2.bf16.msra.mxu0 %v2830
    %3665 = vmatprep.subr.bf16.mxu0 %v2823
    %3666 = vmatpush2.bf16.msra.mxu0 %v2822
    %3667 = vmatprep.subr.bf16.mxu0 %v2815
    %3668 = vmatpush2.bf16.msra.mxu0 %v2814
    %3669 = vmatprep.subr.bf16.mxu0 %v2807
    %3670 = vmatpush2.bf16.msra.mxu0 %v2806
    %3671 = vmatprep.subr.bf16.mxu0 %v2799
    %3672 = vmatpush2.bf16.msra.mxu0 %v2798
    %3673 = vmatprep.subr.bf16.mxu0 %v2791
    %3674 = vmatpush2.bf16.msra.mxu0 %v2790
    %3675 = vmatprep.subr.bf16.mxu0 %v2783
    %3676 = vmatpush2.bf16.msra.mxu0 %v2782
    %3677 = vmatprep.subr.bf16.mxu0 %v2775
    %3678 = vmatpush2.bf16.msra.mxu0 %v2774
    %3679 = vmatprep.mubr.bf16.mxu0 %v487
    %3680 = vmatmul.mubr.bf16.gmra.mxu0 %v486
    %v3681 = vpop.f32.mrf.mxu0
    %v3682 = vadd.f32 %v3641, %v3681
    %v3683 = vpop.f32.mrf.mxu0
    %v3684 = vadd.f32 %v3643, %v3683
    %v3685 = vpop.f32.mrf.mxu0
    %v3686 = vpop.f32.mrf.mxu0
    %3687 = vdwg.mxu0
    %3688 = vmatprep.subr.bf16.mxu0 %v2895
    %3689 = vmatpush1.bf16.msra.mxu0 %v2894
    %3690 = vmatprep.subr.bf16.mxu0 %v2887
    %3691 = vmatpush1.bf16.msra.mxu0 %v2886
    %3692 = vmatprep.subr.bf16.mxu0 %v2879
    %3693 = vmatpush1.bf16.msra.mxu0 %v2878
    %3694 = vmatprep.subr.bf16.mxu0 %v2871
    %3695 = vmatpush1.bf16.msra.mxu0 %v2870
    %3696 = vmatprep.subr.bf16.mxu0 %v2863
    %3697 = vmatpush1.bf16.msra.mxu0 %v2862
    %3698 = vmatprep.subr.bf16.mxu0 %v2855
    %3699 = vmatpush1.bf16.msra.mxu0 %v2854
    %3700 = vmatprep.subr.bf16.mxu0 %v2847
    %3701 = vmatpush1.bf16.msra.mxu0 %v2846
    %3702 = vmatprep.subr.bf16.mxu0 %v2839
    %3703 = vmatpush1.bf16.msra.mxu0 %v2838
    %3704 = vmatprep.subr.bf16.mxu0 %v2959
    %3705 = vmatpush2.bf16.msra.mxu0 %v2958
    %3706 = vmatprep.subr.bf16.mxu0 %v2951
    %3707 = vmatpush2.bf16.msra.mxu0 %v2950
    %3708 = vmatprep.subr.bf16.mxu0 %v2943
    %3709 = vmatpush2.bf16.msra.mxu0 %v2942
    %3710 = vmatprep.subr.bf16.mxu0 %v2935
    %3711 = vmatpush2.bf16.msra.mxu0 %v2934
    %3712 = vmatprep.subr.bf16.mxu0 %v2927
    %3713 = vmatpush2.bf16.msra.mxu0 %v2926
    %3714 = vmatprep.subr.bf16.mxu0 %v2919
    %3715 = vmatpush2.bf16.msra.mxu0 %v2918
    %3716 = vmatprep.subr.bf16.mxu0 %v2911
    %3717 = vmatpush2.bf16.msra.mxu0 %v2910
    %3718 = vmatprep.subr.bf16.mxu0 %v2903
    %3719 = vmatpush2.bf16.msra.mxu0 %v2902
    %3720 = vmatprep.mubr.bf16.mxu0 %v489
    %3721 = vmatmul.mubr.bf16.gmra.mxu0 %v488
    %v3722 = vpop.f32.mrf.mxu0
    %v3723 = vadd.f32 %v3682, %v3722
    %v3724 = vpop.f32.mrf.mxu0
    %v3725 = vadd.f32 %v3684, %v3724
    %v3726 = vpop.f32.mrf.mxu0
    %v3727 = vpop.f32.mrf.mxu0
    %3728 = vdwg.mxu0
    %3729 = vmatprep.subr.bf16.mxu0 %v3023
    %3730 = vmatpush1.bf16.msra.mxu0 %v3022
    %3731 = vmatprep.subr.bf16.mxu0 %v3015
    %3732 = vmatpush1.bf16.msra.mxu0 %v3014
    %3733 = vmatprep.subr.bf16.mxu0 %v3007
    %3734 = vmatpush1.bf16.msra.mxu0 %v3006
    %3735 = vmatprep.subr.bf16.mxu0 %v2999
    %3736 = vmatpush1.bf16.msra.mxu0 %v2998
    %3737 = vmatprep.subr.bf16.mxu0 %v2991
    %3738 = vmatpush1.bf16.msra.mxu0 %v2990
    %3739 = vmatprep.subr.bf16.mxu0 %v2983
    %3740 = vmatpush1.bf16.msra.mxu0 %v2982
    %3741 = vmatprep.subr.bf16.mxu0 %v2975
    %3742 = vmatpush1.bf16.msra.mxu0 %v2974
    %3743 = vmatprep.subr.bf16.mxu0 %v2967
    %3744 = vmatpush1.bf16.msra.mxu0 %v2966
    %3745 = vmatprep.subr.bf16.mxu0 %v3087
    %3746 = vmatpush2.bf16.msra.mxu0 %v3086
    %3747 = vmatprep.subr.bf16.mxu0 %v3079
    %3748 = vmatpush2.bf16.msra.mxu0 %v3078
    %3749 = vmatprep.subr.bf16.mxu0 %v3071
    %3750 = vmatpush2.bf16.msra.mxu0 %v3070
    %3751 = vmatprep.subr.bf16.mxu0 %v3063
    %3752 = vmatpush2.bf16.msra.mxu0 %v3062
    %3753 = vmatprep.subr.bf16.mxu0 %v3055
    %3754 = vmatpush2.bf16.msra.mxu0 %v3054
    %3755 = vmatprep.subr.bf16.mxu0 %v3047
    %3756 = vmatpush2.bf16.msra.mxu0 %v3046
    %3757 = vmatprep.subr.bf16.mxu0 %v3039
    %3758 = vmatpush2.bf16.msra.mxu0 %v3038
    %3759 = vmatprep.subr.bf16.mxu0 %v3031
    %3760 = vmatpush2.bf16.msra.mxu0 %v3030
    %3761 = vmatprep.mubr.bf16.mxu0 %v491
    %3762 = vmatmul.mubr.bf16.gmra.mxu0 %v490
    %v3763 = vpop.f32.mrf.mxu0
    %v3764 = vadd.f32 %v3723, %v3763
    %v3765 = vpop.f32.mrf.mxu0
    %v3766 = vadd.f32 %v3725, %v3765
    %v3767 = vpop.f32.mrf.mxu0
    %v3768 = vpop.f32.mrf.mxu0
    %3769 = vdwg.mxu0
    %3770 = vmatprep.subr.bf16.mxu0 %v2641
    %3771 = vmatpush1.bf16.msra.mxu0 %v2640
    %3772 = vmatprep.subr.bf16.mxu0 %v2633
    %3773 = vmatpush1.bf16.msra.mxu0 %v2632
    %3774 = vmatprep.subr.bf16.mxu0 %v2625
    %3775 = vmatpush1.bf16.msra.mxu0 %v2624
    %3776 = vmatprep.subr.bf16.mxu0 %v2617
    %3777 = vmatpush1.bf16.msra.mxu0 %v2616
    %3778 = vmatprep.subr.bf16.mxu0 %v2609
    %3779 = vmatpush1.bf16.msra.mxu0 %v2608
    %3780 = vmatprep.subr.bf16.mxu0 %v2601
    %3781 = vmatpush1.bf16.msra.mxu0 %v2600
    %3782 = vmatprep.subr.bf16.mxu0 %v2593
    %3783 = vmatpush1.bf16.msra.mxu0 %v2592
    %3784 = vmatprep.subr.bf16.mxu0 %v2585
    %3785 = vmatpush1.bf16.msra.mxu0 %v2584
    %3786 = vmatprep.subr.bf16.mxu0 %v2705
    %3787 = vmatpush2.bf16.msra.mxu0 %v2704
    %3788 = vmatprep.subr.bf16.mxu0 %v2697
    %3789 = vmatpush2.bf16.msra.mxu0 %v2696
    %3790 = vmatprep.subr.bf16.mxu0 %v2689
    %3791 = vmatpush2.bf16.msra.mxu0 %v2688
    %3792 = vmatprep.subr.bf16.mxu0 %v2681
    %3793 = vmatpush2.bf16.msra.mxu0 %v2680
    %3794 = vmatprep.subr.bf16.mxu0 %v2673
    %3795 = vmatpush2.bf16.msra.mxu0 %v2672
    %3796 = vmatprep.subr.bf16.mxu0 %v2665
    %3797 = vmatpush2.bf16.msra.mxu0 %v2664
    %3798 = vmatprep.subr.bf16.mxu0 %v2657
    %3799 = vmatpush2.bf16.msra.mxu0 %v2656
    %3800 = vmatprep.subr.bf16.mxu0 %v2649
    %3801 = vmatpush2.bf16.msra.mxu0 %v2648
    %3802 = vmatprep.mubr.bf16.mxu0 %v485
    %3803 = vmatmul.mubr.bf16.gmra.mxu0 %v484
    %v3804 = vpop.f32.mrf.mxu0
    %v3805 = vadd.f32 %v1017, %v3804
    %v3806 = vpop.f32.mrf.mxu0
    %v3807 = vadd.f32 %v1021, %v3806
    %v3808 = vpop.f32.mrf.mxu0
    %v3809 = vpop.f32.mrf.mxu0
    %3810 = vdwg.mxu0
    %3811 = vmatprep.subr.bf16.mxu0 %v2769
    %3812 = vmatpush1.bf16.msra.mxu0 %v2768
    %3813 = vmatprep.subr.bf16.mxu0 %v2761
    %3814 = vmatpush1.bf16.msra.mxu0 %v2760
    %3815 = vmatprep.subr.bf16.mxu0 %v2753
    %3816 = vmatpush1.bf16.msra.mxu0 %v2752
    %3817 = vmatprep.subr.bf16.mxu0 %v2745
    %3818 = vmatpush1.bf16.msra.mxu0 %v2744
    %3819 = vmatprep.subr.bf16.mxu0 %v2737
    %3820 = vmatpush1.bf16.msra.mxu0 %v2736
    %3821 = vmatprep.subr.bf16.mxu0 %v2729
    %3822 = vmatpush1.bf16.msra.mxu0 %v2728
    %3823 = vmatprep.subr.bf16.mxu0 %v2721
    %3824 = vmatpush1.bf16.msra.mxu0 %v2720
    %3825 = vmatprep.subr.bf16.mxu0 %v2713
    %3826 = vmatpush1.bf16.msra.mxu0 %v2712
    %3827 = vmatprep.subr.bf16.mxu0 %v2833
    %3828 = vmatpush2.bf16.msra.mxu0 %v2832
    %3829 = vmatprep.subr.bf16.mxu0 %v2825
    %3830 = vmatpush2.bf16.msra.mxu0 %v2824
    %3831 = vmatprep.subr.bf16.mxu0 %v2817
    %3832 = vmatpush2.bf16.msra.mxu0 %v2816
    %3833 = vmatprep.subr.bf16.mxu0 %v2809
    %3834 = vmatpush2.bf16.msra.mxu0 %v2808
    %3835 = vmatprep.subr.bf16.mxu0 %v2801
    %3836 = vmatpush2.bf16.msra.mxu0 %v2800
    %3837 = vmatprep.subr.bf16.mxu0 %v2793
    %3838 = vmatpush2.bf16.msra.mxu0 %v2792
    %3839 = vmatprep.subr.bf16.mxu0 %v2785
    %3840 = vmatpush2.bf16.msra.mxu0 %v2784
    %3841 = vmatprep.subr.bf16.mxu0 %v2777
    %3842 = vmatpush2.bf16.msra.mxu0 %v2776
    %3843 = vmatprep.mubr.bf16.mxu0 %v487
    %3844 = vmatmul.mubr.bf16.gmra.mxu0 %v486
    %v3845 = vpop.f32.mrf.mxu0
    %v3846 = vadd.f32 %v3805, %v3845
    %v3847 = vpop.f32.mrf.mxu0
    %v3848 = vadd.f32 %v3807, %v3847
    %v3849 = vpop.f32.mrf.mxu0
    %v3850 = vpop.f32.mrf.mxu0
    %3851 = vdwg.mxu0
    %3852 = vmatprep.subr.bf16.mxu0 %v2897
    %3853 = vmatpush1.bf16.msra.mxu0 %v2896
    %3854 = vmatprep.subr.bf16.mxu0 %v2889
    %3855 = vmatpush1.bf16.msra.mxu0 %v2888
    %3856 = vmatprep.subr.bf16.mxu0 %v2881
    %3857 = vmatpush1.bf16.msra.mxu0 %v2880
    %3858 = vmatprep.subr.bf16.mxu0 %v2873
    %3859 = vmatpush1.bf16.msra.mxu0 %v2872
    %3860 = vmatprep.subr.bf16.mxu0 %v2865
    %3861 = vmatpush1.bf16.msra.mxu0 %v2864
    %3862 = vmatprep.subr.bf16.mxu0 %v2857
    %3863 = vmatpush1.bf16.msra.mxu0 %v2856
    %3864 = vmatprep.subr.bf16.mxu0 %v2849
    %3865 = vmatpush1.bf16.msra.mxu0 %v2848
    %3866 = vmatprep.subr.bf16.mxu0 %v2841
    %3867 = vmatpush1.bf16.msra.mxu0 %v2840
    %3868 = vmatprep.subr.bf16.mxu0 %v2961
    %3869 = vmatpush2.bf16.msra.mxu0 %v2960
    %3870 = vmatprep.subr.bf16.mxu0 %v2953
    %3871 = vmatpush2.bf16.msra.mxu0 %v2952
    %3872 = vmatprep.subr.bf16.mxu0 %v2945
    %3873 = vmatpush2.bf16.msra.mxu0 %v2944
    %3874 = vmatprep.subr.bf16.mxu0 %v2937
    %3875 = vmatpush2.bf16.msra.mxu0 %v2936
    %3876 = vmatprep.subr.bf16.mxu0 %v2929
    %3877 = vmatpush2.bf16.msra.mxu0 %v2928
    %3878 = vmatprep.subr.bf16.mxu0 %v2921
    %3879 = vmatpush2.bf16.msra.mxu0 %v2920
    %3880 = vmatprep.subr.bf16.mxu0 %v2913
    %3881 = vmatpush2.bf16.msra.mxu0 %v2912
    %3882 = vmatprep.subr.bf16.mxu0 %v2905
    %3883 = vmatpush2.bf16.msra.mxu0 %v2904
    %3884 = vmatprep.mubr.bf16.mxu0 %v489
    %3885 = vmatmul.mubr.bf16.gmra.mxu0 %v488
    %v3886 = vpop.f32.mrf.mxu0
    %v3887 = vadd.f32 %v3846, %v3886
    %v3888 = vpop.f32.mrf.mxu0
    %v3889 = vadd.f32 %v3848, %v3888
    %v3890 = vpop.f32.mrf.mxu0
    %v3891 = vpop.f32.mrf.mxu0
    %3892 = vdwg.mxu0
    %3893 = vmatprep.subr.bf16.mxu0 %v3025
    %3894 = vmatpush1.bf16.msra.mxu0 %v3024
    %3895 = vmatprep.subr.bf16.mxu0 %v3017
    %3896 = vmatpush1.bf16.msra.mxu0 %v3016
    %3897 = vmatprep.subr.bf16.mxu0 %v3009
    %3898 = vmatpush1.bf16.msra.mxu0 %v3008
    %3899 = vmatprep.subr.bf16.mxu0 %v3001
    %3900 = vmatpush1.bf16.msra.mxu0 %v3000
    %3901 = vmatprep.subr.bf16.mxu0 %v2993
    %3902 = vmatpush1.bf16.msra.mxu0 %v2992
    %3903 = vmatprep.subr.bf16.mxu0 %v2985
    %3904 = vmatpush1.bf16.msra.mxu0 %v2984
    %3905 = vmatprep.subr.bf16.mxu0 %v2977
    %3906 = vmatpush1.bf16.msra.mxu0 %v2976
    %3907 = vmatprep.subr.bf16.mxu0 %v2969
    %3908 = vmatpush1.bf16.msra.mxu0 %v2968
    %3909 = vmatprep.subr.bf16.mxu0 %v3089
    %3910 = vmatpush2.bf16.msra.mxu0 %v3088
    %3911 = vmatprep.subr.bf16.mxu0 %v3081
    %3912 = vmatpush2.bf16.msra.mxu0 %v3080
    %3913 = vmatprep.subr.bf16.mxu0 %v3073
    %3914 = vmatpush2.bf16.msra.mxu0 %v3072
    %3915 = vmatprep.subr.bf16.mxu0 %v3065
    %3916 = vmatpush2.bf16.msra.mxu0 %v3064
    %3917 = vmatprep.subr.bf16.mxu0 %v3057
    %3918 = vmatpush2.bf16.msra.mxu0 %v3056
    %3919 = vmatprep.subr.bf16.mxu0 %v3049
    %3920 = vmatpush2.bf16.msra.mxu0 %v3048
    %3921 = vmatprep.subr.bf16.mxu0 %v3041
    %3922 = vmatpush2.bf16.msra.mxu0 %v3040
    %3923 = vmatprep.subr.bf16.mxu0 %v3033
    %3924 = vmatpush2.bf16.msra.mxu0 %v3032
    %3925 = vmatprep.mubr.bf16.mxu0 %v491
    %3926 = vmatmul.mubr.bf16.gmra.mxu0 %v490
    %v3927 = vpop.f32.mrf.mxu0
    %v3928 = vadd.f32 %v3887, %v3927
    %v3929 = vpop.f32.mrf.mxu0
    %v3930 = vadd.f32 %v3889, %v3929
    %v3931 = vpop.f32.mrf.mxu0
    %v3932 = vpop.f32.mrf.mxu0
    %3933 = vdwg.mxu0
    %3934 = vmatprep.subr.bf16.mxu0 %v2643
    %3935 = vmatpush1.bf16.msra.mxu0 %v2642
    %3936 = vmatprep.subr.bf16.mxu0 %v2635
    %3937 = vmatpush1.bf16.msra.mxu0 %v2634
    %3938 = vmatprep.subr.bf16.mxu0 %v2627
    %3939 = vmatpush1.bf16.msra.mxu0 %v2626
    %3940 = vmatprep.subr.bf16.mxu0 %v2619
    %3941 = vmatpush1.bf16.msra.mxu0 %v2618
    %3942 = vmatprep.subr.bf16.mxu0 %v2611
    %3943 = vmatpush1.bf16.msra.mxu0 %v2610
    %3944 = vmatprep.subr.bf16.mxu0 %v2603
    %3945 = vmatpush1.bf16.msra.mxu0 %v2602
    %3946 = vmatprep.subr.bf16.mxu0 %v2595
    %3947 = vmatpush1.bf16.msra.mxu0 %v2594
    %3948 = vmatprep.subr.bf16.mxu0 %v2587
    %3949 = vmatpush1.bf16.msra.mxu0 %v2586
    %3950 = vmatprep.subr.bf16.mxu0 %v2707
    %3951 = vmatpush2.bf16.msra.mxu0 %v2706
    %3952 = vmatprep.subr.bf16.mxu0 %v2699
    %3953 = vmatpush2.bf16.msra.mxu0 %v2698
    %3954 = vmatprep.subr.bf16.mxu0 %v2691
    %3955 = vmatpush2.bf16.msra.mxu0 %v2690
    %3956 = vmatprep.subr.bf16.mxu0 %v2683
    %3957 = vmatpush2.bf16.msra.mxu0 %v2682
    %3958 = vmatprep.subr.bf16.mxu0 %v2675
    %3959 = vmatpush2.bf16.msra.mxu0 %v2674
    %3960 = vmatprep.subr.bf16.mxu0 %v2667
    %3961 = vmatpush2.bf16.msra.mxu0 %v2666
    %3962 = vmatprep.subr.bf16.mxu0 %v2659
    %3963 = vmatpush2.bf16.msra.mxu0 %v2658
    %3964 = vmatprep.subr.bf16.mxu0 %v2651
    %3965 = vmatpush2.bf16.msra.mxu0 %v2650
    %3966 = vmatprep.mubr.bf16.mxu0 %v485
    %3967 = vmatmul.mubr.bf16.gmra.mxu0 %v484
    %v3968 = vpop.f32.mrf.mxu0
    %v3969 = vadd.f32 %v1025, %v3968
    %v3970 = vpop.f32.mrf.mxu0
    %v3971 = vadd.f32 %v1029, %v3970
    %v3972 = vpop.f32.mrf.mxu0
    %v3973 = vpop.f32.mrf.mxu0
    %3974 = vdwg.mxu0
    %3975 = vmatprep.subr.bf16.mxu0 %v2771
    %3976 = vmatpush1.bf16.msra.mxu0 %v2770
    %3977 = vmatprep.subr.bf16.mxu0 %v2763
    %3978 = vmatpush1.bf16.msra.mxu0 %v2762
    %3979 = vmatprep.subr.bf16.mxu0 %v2755
    %3980 = vmatpush1.bf16.msra.mxu0 %v2754
    %3981 = vmatprep.subr.bf16.mxu0 %v2747
    %3982 = vmatpush1.bf16.msra.mxu0 %v2746
    %3983 = vmatprep.subr.bf16.mxu0 %v2739
    %3984 = vmatpush1.bf16.msra.mxu0 %v2738
    %3985 = vmatprep.subr.bf16.mxu0 %v2731
    %3986 = vmatpush1.bf16.msra.mxu0 %v2730
    %3987 = vmatprep.subr.bf16.mxu0 %v2723
    %3988 = vmatpush1.bf16.msra.mxu0 %v2722
    %3989 = vmatprep.subr.bf16.mxu0 %v2715
    %3990 = vmatpush1.bf16.msra.mxu0 %v2714
    %3991 = vmatprep.subr.bf16.mxu0 %v2835
    %3992 = vmatpush2.bf16.msra.mxu0 %v2834
    %3993 = vmatprep.subr.bf16.mxu0 %v2827
    %3994 = vmatpush2.bf16.msra.mxu0 %v2826
    %3995 = vmatprep.subr.bf16.mxu0 %v2819
    %3996 = vmatpush2.bf16.msra.mxu0 %v2818
    %3997 = vmatprep.subr.bf16.mxu0 %v2811
    %3998 = vmatpush2.bf16.msra.mxu0 %v2810
    %3999 = vmatprep.subr.bf16.mxu0 %v2803
    %4000 = vmatpush2.bf16.msra.mxu0 %v2802
    %4001 = vmatprep.subr.bf16.mxu0 %v2795
    %4002 = vmatpush2.bf16.msra.mxu0 %v2794
    %4003 = vmatprep.subr.bf16.mxu0 %v2787
    %4004 = vmatpush2.bf16.msra.mxu0 %v2786
    %4005 = vmatprep.subr.bf16.mxu0 %v2779
    %4006 = vmatpush2.bf16.msra.mxu0 %v2778
    %4007 = vmatprep.mubr.bf16.mxu0 %v487
    %4008 = vmatmul.mubr.bf16.gmra.mxu0 %v486
    %v4009 = vpop.f32.mrf.mxu0
    %v4010 = vadd.f32 %v3969, %v4009
    %v4011 = vpop.f32.mrf.mxu0
    %v4012 = vadd.f32 %v3971, %v4011
    %v4013 = vpop.f32.mrf.mxu0
    %v4014 = vpop.f32.mrf.mxu0
    %4015 = vdwg.mxu0
    %4016 = vmatprep.subr.bf16.mxu0 %v2899
    %4017 = vmatpush1.bf16.msra.mxu0 %v2898
    %4018 = vmatprep.subr.bf16.mxu0 %v2891
    %4019 = vmatpush1.bf16.msra.mxu0 %v2890
    %4020 = vmatprep.subr.bf16.mxu0 %v2883
    %4021 = vmatpush1.bf16.msra.mxu0 %v2882
    %4022 = vmatprep.subr.bf16.mxu0 %v2875
    %4023 = vmatpush1.bf16.msra.mxu0 %v2874
    %4024 = vmatprep.subr.bf16.mxu0 %v2867
    %4025 = vmatpush1.bf16.msra.mxu0 %v2866
    %4026 = vmatprep.subr.bf16.mxu0 %v2859
    %4027 = vmatpush1.bf16.msra.mxu0 %v2858
    %4028 = vmatprep.subr.bf16.mxu0 %v2851
    %4029 = vmatpush1.bf16.msra.mxu0 %v2850
    %4030 = vmatprep.subr.bf16.mxu0 %v2843
    %4031 = vmatpush1.bf16.msra.mxu0 %v2842
    %4032 = vmatprep.subr.bf16.mxu0 %v2963
    %4033 = vmatpush2.bf16.msra.mxu0 %v2962
    %4034 = vmatprep.subr.bf16.mxu0 %v2955
    %4035 = vmatpush2.bf16.msra.mxu0 %v2954
    %4036 = vmatprep.subr.bf16.mxu0 %v2947
    %4037 = vmatpush2.bf16.msra.mxu0 %v2946
    %4038 = vmatprep.subr.bf16.mxu0 %v2939
    %4039 = vmatpush2.bf16.msra.mxu0 %v2938
    %4040 = vmatprep.subr.bf16.mxu0 %v2931
    %4041 = vmatpush2.bf16.msra.mxu0 %v2930
    %4042 = vmatprep.subr.bf16.mxu0 %v2923
    %4043 = vmatpush2.bf16.msra.mxu0 %v2922
    %4044 = vmatprep.subr.bf16.mxu0 %v2915
    %4045 = vmatpush2.bf16.msra.mxu0 %v2914
    %4046 = vmatprep.subr.bf16.mxu0 %v2907
    %4047 = vmatpush2.bf16.msra.mxu0 %v2906
    %4048 = vmatprep.mubr.bf16.mxu0 %v489
    %4049 = vmatmul.mubr.bf16.gmra.mxu0 %v488
    %v4050 = vpop.f32.mrf.mxu0
    %v4051 = vadd.f32 %v4010, %v4050
    %v4052 = vpop.f32.mrf.mxu0
    %v4053 = vadd.f32 %v4012, %v4052
    %v4054 = vpop.f32.mrf.mxu0
    %v4055 = vpop.f32.mrf.mxu0
    %4056 = vdwg.mxu0
    %4057 = vmatprep.subr.bf16.mxu0 %v3027
    %4058 = vmatpush1.bf16.msra.mxu0 %v3026
    %4059 = vmatprep.subr.bf16.mxu0 %v3019
    %4060 = vmatpush1.bf16.msra.mxu0 %v3018
    %4061 = vmatprep.subr.bf16.mxu0 %v3011
    %4062 = vmatpush1.bf16.msra.mxu0 %v3010
    %4063 = vmatprep.subr.bf16.mxu0 %v3003
    %4064 = vmatpush1.bf16.msra.mxu0 %v3002
    %4065 = vmatprep.subr.bf16.mxu0 %v2995
    %4066 = vmatpush1.bf16.msra.mxu0 %v2994
    %4067 = vmatprep.subr.bf16.mxu0 %v2987
    %4068 = vmatpush1.bf16.msra.mxu0 %v2986
    %4069 = vmatprep.subr.bf16.mxu0 %v2979
    %4070 = vmatpush1.bf16.msra.mxu0 %v2978
    %4071 = vmatprep.subr.bf16.mxu0 %v2971
    %4072 = vmatpush1.bf16.msra.mxu0 %v2970
    %4073 = vmatprep.subr.bf16.mxu0 %v3091
    %4074 = vmatpush2.bf16.msra.mxu0 %v3090
    %4075 = vmatprep.subr.bf16.mxu0 %v3083
    %4076 = vmatpush2.bf16.msra.mxu0 %v3082
    %4077 = vmatprep.subr.bf16.mxu0 %v3075
    %4078 = vmatpush2.bf16.msra.mxu0 %v3074
    %4079 = vmatprep.subr.bf16.mxu0 %v3067
    %4080 = vmatpush2.bf16.msra.mxu0 %v3066
    %4081 = vmatprep.subr.bf16.mxu0 %v3059
    %4082 = vmatpush2.bf16.msra.mxu0 %v3058
    %4083 = vmatprep.subr.bf16.mxu0 %v3051
    %4084 = vmatpush2.bf16.msra.mxu0 %v3050
    %4085 = vmatprep.subr.bf16.mxu0 %v3043
    %4086 = vmatpush2.bf16.msra.mxu0 %v3042
    %4087 = vmatprep.subr.bf16.mxu0 %v3035
    %4088 = vmatpush2.bf16.msra.mxu0 %v3034
    %4089 = vmatprep.mubr.bf16.mxu0 %v491
    %4090 = vmatmul.mubr.bf16.gmra.mxu0 %v490
    %v4091 = vpop.f32.mrf.mxu0
    %v4092 = vadd.f32 %v4051, %v4091
    %v4093 = vpop.f32.mrf.mxu0
    %v4094 = vadd.f32 %v4053, %v4093
    %v4095 = vpop.f32.mrf.mxu0
    %v4096 = vpop.f32.mrf.mxu0
    %4097 = vdwg.mxu0
    %4098 = vmatprep.subr.bf16.mxu0 %v2645
    %4099 = vmatpush1.bf16.msra.mxu0 %v2644
    %4100 = vmatprep.subr.bf16.mxu0 %v2637
    %4101 = vmatpush1.bf16.msra.mxu0 %v2636
    %4102 = vmatprep.subr.bf16.mxu0 %v2629
    %4103 = vmatpush1.bf16.msra.mxu0 %v2628
    %4104 = vmatprep.subr.bf16.mxu0 %v2621
    %4105 = vmatpush1.bf16.msra.mxu0 %v2620
    %4106 = vmatprep.subr.bf16.mxu0 %v2613
    %4107 = vmatpush1.bf16.msra.mxu0 %v2612
    %4108 = vmatprep.subr.bf16.mxu0 %v2605
    %4109 = vmatpush1.bf16.msra.mxu0 %v2604
    %4110 = vmatprep.subr.bf16.mxu0 %v2597
    %4111 = vmatpush1.bf16.msra.mxu0 %v2596
    %4112 = vmatprep.subr.bf16.mxu0 %v2589
    %4113 = vmatpush1.bf16.msra.mxu0 %v2588
    %4114 = vmatprep.subr.bf16.mxu0 %v2709
    %4115 = vmatpush2.bf16.msra.mxu0 %v2708
    %4116 = vmatprep.subr.bf16.mxu0 %v2701
    %4117 = vmatpush2.bf16.msra.mxu0 %v2700
    %4118 = vmatprep.subr.bf16.mxu0 %v2693
    %4119 = vmatpush2.bf16.msra.mxu0 %v2692
    %4120 = vmatprep.subr.bf16.mxu0 %v2685
    %4121 = vmatpush2.bf16.msra.mxu0 %v2684
    %4122 = vmatprep.subr.bf16.mxu0 %v2677
    %4123 = vmatpush2.bf16.msra.mxu0 %v2676
    %4124 = vmatprep.subr.bf16.mxu0 %v2669
    %4125 = vmatpush2.bf16.msra.mxu0 %v2668
    %4126 = vmatprep.subr.bf16.mxu0 %v2661
    %4127 = vmatpush2.bf16.msra.mxu0 %v2660
    %4128 = vmatprep.subr.bf16.mxu0 %v2653
    %4129 = vmatpush2.bf16.msra.mxu0 %v2652
    %4130 = vmatprep.mubr.bf16.mxu0 %v485
    %4131 = vmatmul.mubr.bf16.gmra.mxu0 %v484
    %v4132 = vpop.f32.mrf.mxu0
    %v4133 = vadd.f32 %v1033, %v4132
    %v4134 = vpop.f32.mrf.mxu0
    %v4135 = vadd.f32 %v1037, %v4134
    %v4136 = vpop.f32.mrf.mxu0
    %v4137 = vpop.f32.mrf.mxu0
    %4138 = vdwg.mxu0
    %4139 = vmatprep.subr.bf16.mxu0 %v2773
    %4140 = vmatpush1.bf16.msra.mxu0 %v2772
    %4141 = vmatprep.subr.bf16.mxu0 %v2765
    %4142 = vmatpush1.bf16.msra.mxu0 %v2764
    %4143 = vmatprep.subr.bf16.mxu0 %v2757
    %4144 = vmatpush1.bf16.msra.mxu0 %v2756
    %4145 = vmatprep.subr.bf16.mxu0 %v2749
    %4146 = vmatpush1.bf16.msra.mxu0 %v2748
    %4147 = vmatprep.subr.bf16.mxu0 %v2741
    %4148 = vmatpush1.bf16.msra.mxu0 %v2740
    %4149 = vmatprep.subr.bf16.mxu0 %v2733
    %4150 = vmatpush1.bf16.msra.mxu0 %v2732
    %4151 = vmatprep.subr.bf16.mxu0 %v2725
    %4152 = vmatpush1.bf16.msra.mxu0 %v2724
    %4153 = vmatprep.subr.bf16.mxu0 %v2717
    %4154 = vmatpush1.bf16.msra.mxu0 %v2716
    %4155 = vmatprep.subr.bf16.mxu0 %v2837
    %4156 = vmatpush2.bf16.msra.mxu0 %v2836
    %4157 = vmatprep.subr.bf16.mxu0 %v2829
    %4158 = vmatpush2.bf16.msra.mxu0 %v2828
    %4159 = vmatprep.subr.bf16.mxu0 %v2821
    %4160 = vmatpush2.bf16.msra.mxu0 %v2820
    %4161 = vmatprep.subr.bf16.mxu0 %v2813
    %4162 = vmatpush2.bf16.msra.mxu0 %v2812
    %4163 = vmatprep.subr.bf16.mxu0 %v2805
    %4164 = vmatpush2.bf16.msra.mxu0 %v2804
    %4165 = vmatprep.subr.bf16.mxu0 %v2797
    %4166 = vmatpush2.bf16.msra.mxu0 %v2796
    %4167 = vmatprep.subr.bf16.mxu0 %v2789
    %4168 = vmatpush2.bf16.msra.mxu0 %v2788
    %4169 = vmatprep.subr.bf16.mxu0 %v2781
    %4170 = vmatpush2.bf16.msra.mxu0 %v2780
    %4171 = vmatprep.mubr.bf16.mxu0 %v487
    %4172 = vmatmul.mubr.bf16.gmra.mxu0 %v486
    %v4173 = vpop.f32.mrf.mxu0
    %v4174 = vadd.f32 %v4133, %v4173
    %v4175 = vpop.f32.mrf.mxu0
    %v4176 = vadd.f32 %v4135, %v4175
    %v4177 = vpop.f32.mrf.mxu0
    %v4178 = vpop.f32.mrf.mxu0
    %4179 = vdwg.mxu0
    %4180 = vmatprep.subr.bf16.mxu0 %v2901
    %4181 = vmatpush1.bf16.msra.mxu0 %v2900
    %4182 = vmatprep.subr.bf16.mxu0 %v2893
    %4183 = vmatpush1.bf16.msra.mxu0 %v2892
    %4184 = vmatprep.subr.bf16.mxu0 %v2885
    %4185 = vmatpush1.bf16.msra.mxu0 %v2884
    %4186 = vmatprep.subr.bf16.mxu0 %v2877
    %4187 = vmatpush1.bf16.msra.mxu0 %v2876
    %4188 = vmatprep.subr.bf16.mxu0 %v2869
    %4189 = vmatpush1.bf16.msra.mxu0 %v2868
    %4190 = vmatprep.subr.bf16.mxu0 %v2861
    %4191 = vmatpush1.bf16.msra.mxu0 %v2860
    %4192 = vmatprep.subr.bf16.mxu0 %v2853
    %4193 = vmatpush1.bf16.msra.mxu0 %v2852
    %4194 = vmatprep.subr.bf16.mxu0 %v2845
    %4195 = vmatpush1.bf16.msra.mxu0 %v2844
    %4196 = vmatprep.subr.bf16.mxu0 %v2965
    %4197 = vmatpush2.bf16.msra.mxu0 %v2964
    %4198 = vmatprep.subr.bf16.mxu0 %v2957
    %4199 = vmatpush2.bf16.msra.mxu0 %v2956
    %4200 = vmatprep.subr.bf16.mxu0 %v2949
    %4201 = vmatpush2.bf16.msra.mxu0 %v2948
    %4202 = vmatprep.subr.bf16.mxu0 %v2941
    %4203 = vmatpush2.bf16.msra.mxu0 %v2940
    %4204 = vmatprep.subr.bf16.mxu0 %v2933
    %4205 = vmatpush2.bf16.msra.mxu0 %v2932
    %4206 = vmatprep.subr.bf16.mxu0 %v2925
    %4207 = vmatpush2.bf16.msra.mxu0 %v2924
    %4208 = vmatprep.subr.bf16.mxu0 %v2917
    %4209 = vmatpush2.bf16.msra.mxu0 %v2916
    %4210 = vmatprep.subr.bf16.mxu0 %v2909
    %4211 = vmatpush2.bf16.msra.mxu0 %v2908
    %4212 = vmatprep.mubr.bf16.mxu0 %v489
    %4213 = vmatmul.mubr.bf16.gmra.mxu0 %v488
    %v4214 = vpop.f32.mrf.mxu0
    %v4215 = vadd.f32 %v4174, %v4214
    %v4216 = vpop.f32.mrf.mxu0
    %v4217 = vadd.f32 %v4176, %v4216
    %v4218 = vpop.f32.mrf.mxu0
    %v4219 = vpop.f32.mrf.mxu0
    %4220 = vdwg.mxu0
    %4221 = vmatprep.subr.bf16.mxu0 %v3029
    %4222 = vmatpush1.bf16.msra.mxu0 %v3028
    %4223 = vmatprep.subr.bf16.mxu0 %v3021
    %4224 = vmatpush1.bf16.msra.mxu0 %v3020
    %4225 = vmatprep.subr.bf16.mxu0 %v3013
    %4226 = vmatpush1.bf16.msra.mxu0 %v3012
    %4227 = vmatprep.subr.bf16.mxu0 %v3005
    %4228 = vmatpush1.bf16.msra.mxu0 %v3004
    %4229 = vmatprep.subr.bf16.mxu0 %v2997
    %4230 = vmatpush1.bf16.msra.mxu0 %v2996
    %4231 = vmatprep.subr.bf16.mxu0 %v2989
    %4232 = vmatpush1.bf16.msra.mxu0 %v2988
    %4233 = vmatprep.subr.bf16.mxu0 %v2981
    %4234 = vmatpush1.bf16.msra.mxu0 %v2980
    %4235 = vmatprep.subr.bf16.mxu0 %v2973
    %4236 = vmatpush1.bf16.msra.mxu0 %v2972
    %4237 = vmatprep.subr.bf16.mxu0 %v3093
    %4238 = vmatpush2.bf16.msra.mxu0 %v3092
    %4239 = vmatprep.subr.bf16.mxu0 %v3085
    %4240 = vmatpush2.bf16.msra.mxu0 %v3084
    %4241 = vmatprep.subr.bf16.mxu0 %v3077
    %4242 = vmatpush2.bf16.msra.mxu0 %v3076
    %4243 = vmatprep.subr.bf16.mxu0 %v3069
    %4244 = vmatpush2.bf16.msra.mxu0 %v3068
    %4245 = vmatprep.subr.bf16.mxu0 %v3061
    %4246 = vmatpush2.bf16.msra.mxu0 %v3060
    %4247 = vmatprep.subr.bf16.mxu0 %v3053
    %4248 = vmatpush2.bf16.msra.mxu0 %v3052
    %4249 = vmatprep.subr.bf16.mxu0 %v3045
    %4250 = vmatpush2.bf16.msra.mxu0 %v3044
    %4251 = vmatprep.subr.bf16.mxu0 %v3037
    %4252 = vmatpush2.bf16.msra.mxu0 %v3036
    %4253 = vmatprep.mubr.bf16.mxu0 %v491
    %4254 = vmatmul.mubr.bf16.gmra.mxu0 %v490
    %v4255 = vpop.f32.mrf.mxu0
    %v4256 = vadd.f32 %v4215, %v4255
    %v4257 = vpop.f32.mrf.mxu0
    %v4258 = vadd.f32 %v4217, %v4257
    %v4259 = vpop.f32.mrf.mxu0
    %v4260 = vpop.f32.mrf.mxu0
    %4261 = vdwg.mxu0
    %vm4262 = vcmp.gt.f32.partialorder %v3764, 0.0
    %vm4263 = vcmp.gt.f32.partialorder %v3766, 0.0
    %vm4264 = vcmp.gt.f32.partialorder %v3928, 0.0
    %vm4265 = vcmp.gt.f32.partialorder %v3930, 0.0
    %vm4266 = vcmp.gt.f32.partialorder %v4092, 0.0
    %vm4267 = vcmp.gt.f32.partialorder %v4094, 0.0
    %vm4268 = vcmp.gt.f32.partialorder %v4256, 0.0
    %vm4269 = vcmp.gt.f32.partialorder %v4258, 0.0
    %v4270 = vmul.f32 %v3764, 1.442695
    %v4271 = vpow.pop %v4270
    %v4272 = vmul.f32 %v3766, 1.442695
    %v4273 = vpow.pop %v4272
    %v4274 = vmul.f32 %v3928, 1.442695
    %v4275 = vpow.pop %v4274
    %v4276 = vmul.f32 %v3930, 1.442695
    %v4277 = vpow.pop %v4276
    %v4278 = vmul.f32 %v4092, 1.442695
    %v4279 = vpow.pop %v4278
    %v4280 = vmul.f32 %v4094, 1.442695
    %v4281 = vpow.pop %v4280
    %v4282 = vmul.f32 %v4256, 1.442695
    %v4283 = vpow.pop %v4282
    %v4284 = vmul.f32 %v4258, 1.442695
    %v4285 = vpow.pop %v4284
    %v4286 = vsub.f32 %v4271, 1.0
    %v4287 = vsub.f32 %v4273, 1.0
    %v4288 = vsub.f32 %v4275, 1.0
    %v4289 = vsub.f32 %v4277, 1.0
    %v4290 = vsub.f32 %v4279, 1.0
    %v4291 = vsub.f32 %v4281, 1.0
    %v4292 = vsub.f32 %v4283, 1.0
    %v4293 = vsub.f32 %v4285, 1.0
    %v4294 = vmul.f32 %v4286, 1.6732632
    %v4295 = vmul.f32 %v4287, 1.6732632
    %v4296 = vmul.f32 %v4288, 1.6732632
    %v4297 = vmul.f32 %v4289, 1.6732632
    %v4298 = vmul.f32 %v4290, 1.6732632
    %v4299 = vmul.f32 %v4291, 1.6732632
    %v4300 = vmul.f32 %v4292, 1.6732632
    %v4301 = vmul.f32 %v4293, 1.6732632
    %v4302 = vsel %vm4262, %v3764, %v4294
    %v4303 = vsel %vm4263, %v3766, %v4295
    %v4304 = vsel %vm4264, %v3928, %v4296
    %v4305 = vsel %vm4265, %v3930, %v4297
    %v4306 = vsel %vm4266, %v4092, %v4298
    %v4307 = vsel %vm4267, %v4094, %v4299
    %v4308 = vsel %vm4268, %v4256, %v4300
    %v4309 = vsel %vm4269, %v4258, %v4301
    %v4310 = vmul.f32 %v4302, 1.050701
    %v4311 = vmul.f32 %v4303, 1.050701
    %v4312 = vmul.f32 %v4304, 1.050701
    %v4313 = vmul.f32 %v4305, 1.050701
    %v4314 = vmul.f32 %v4306, 1.050701
    %v4315 = vmul.f32 %v4307, 1.050701
    %v4316 = vmul.f32 %v4308, 1.050701
    %v4317 = vmul.f32 %v4309, 1.050701
    %v4318 = vpack.c.bf16 %v4310, %v4310
    %v4319 = vpack.c.bf16 %v4311, %v4311
    %v4320 = vpack.c.bf16 %v4312, %v4312
    %v4321 = vpack.c.bf16 %v4313, %v4313
    %v4322 = vpack.c.bf16 %v4314, %v4314
    %v4323 = vpack.c.bf16 %v4315, %v4315
    %v4324 = vpack.c.bf16 %v4316, %v4316
    %v4325 = vpack.c.bf16 %v4317, %v4317
    %v4326 = vld [vmem:[#allocation10] sm:$0xff]
    %v4327 = vld [vmem:[#allocation10 + $0x8] sm:$0xff]
    %v4328 = vld [vmem:[#allocation10 + $0x10] sm:$0xff]
    %v4329 = vld [vmem:[#allocation10 + $0x18] sm:$0xff]
    %v4330 = vld [vmem:[#allocation10 + $0x20] sm:$0xff]
    %v4331 = vld [vmem:[#allocation10 + $0x28] sm:$0xff]
    %v4332 = vld [vmem:[#allocation10 + $0x30] sm:$0xff]
    %v4333 = vld [vmem:[#allocation10 + $0x38] sm:$0xff]
    %v4334 = vld [vmem:[#allocation10 + $0x40] sm:$0xff]
    %v4335 = vld [vmem:[#allocation10 + $0x48] sm:$0xff]
    %v4336 = vld [vmem:[#allocation10 + $0x50] sm:$0xff]
    %v4337 = vld [vmem:[#allocation10 + $0x58] sm:$0xff]
    %v4338 = vld [vmem:[#allocation10 + $0x60] sm:$0xff]
    %v4339 = vld [vmem:[#allocation10 + $0x68] sm:$0xff]
    %v4340 = vld [vmem:[#allocation10 + $0x70] sm:$0xff]
    %v4341 = vld [vmem:[#allocation10 + $0x78] sm:$0xff]
    %v4342 = vld [vmem:[#allocation10 + $0x80] sm:$0xff]
    %v4343 = vld [vmem:[#allocation10 + $0x88] sm:$0xff]
    %v4344 = vld [vmem:[#allocation10 + $0x90] sm:$0xff]
    %v4345 = vld [vmem:[#allocation10 + $0x98] sm:$0xff]
    %v4346 = vld [vmem:[#allocation10 + $0xa0] sm:$0xff]
    %v4347 = vld [vmem:[#allocation10 + $0xa8] sm:$0xff]
    %v4348 = vld [vmem:[#allocation10 + $0xb0] sm:$0xff]
    %v4349 = vld [vmem:[#allocation10 + $0xb8] sm:$0xff]
    %v4350 = vld [vmem:[#allocation10 + $0xc0] sm:$0xff]
    %v4351 = vld [vmem:[#allocation10 + $0xc8] sm:$0xff]
    %v4352 = vld [vmem:[#allocation10 + $0xd0] sm:$0xff]
    %v4353 = vld [vmem:[#allocation10 + $0xd8] sm:$0xff]
    %v4354 = vld [vmem:[#allocation10 + $0xe0] sm:$0xff]
    %v4355 = vld [vmem:[#allocation10 + $0xe8] sm:$0xff]
    %v4356 = vld [vmem:[#allocation10 + $0xf0] sm:$0xff]
    %v4357 = vld [vmem:[#allocation10 + $0xf8] sm:$0xff]
    %v4358 = vld [vmem:[#allocation10 + $0x100] sm:$0xff]
    %v4359 = vld [vmem:[#allocation10 + $0x108] sm:$0xff]
    %v4360 = vld [vmem:[#allocation10 + $0x110] sm:$0xff]
    %v4361 = vld [vmem:[#allocation10 + $0x118] sm:$0xff]
    %v4362 = vld [vmem:[#allocation10 + $0x120] sm:$0xff]
    %v4363 = vld [vmem:[#allocation10 + $0x128] sm:$0xff]
    %v4364 = vld [vmem:[#allocation10 + $0x130] sm:$0xff]
    %v4365 = vld [vmem:[#allocation10 + $0x138] sm:$0xff]
    %v4366 = vld [vmem:[#allocation10 + $0x140] sm:$0xff]
    %v4367 = vld [vmem:[#allocation10 + $0x148] sm:$0xff]
    %v4368 = vld [vmem:[#allocation10 + $0x150] sm:$0xff]
    %v4369 = vld [vmem:[#allocation10 + $0x158] sm:$0xff]
    %v4370 = vld [vmem:[#allocation10 + $0x160] sm:$0xff]
    %v4371 = vld [vmem:[#allocation10 + $0x168] sm:$0xff]
    %v4372 = vld [vmem:[#allocation10 + $0x170] sm:$0xff]
    %v4373 = vld [vmem:[#allocation10 + $0x178] sm:$0xff]
    %v4374 = vld [vmem:[#allocation10 + $0x180] sm:$0xff]
    %v4375 = vld [vmem:[#allocation10 + $0x188] sm:$0xff]
    %v4376 = vld [vmem:[#allocation10 + $0x190] sm:$0xff]
    %v4377 = vld [vmem:[#allocation10 + $0x198] sm:$0xff]
    %v4378 = vld [vmem:[#allocation10 + $0x1a0] sm:$0xff]
    %v4379 = vld [vmem:[#allocation10 + $0x1a8] sm:$0xff]
    %v4380 = vld [vmem:[#allocation10 + $0x1b0] sm:$0xff]
    %v4381 = vld [vmem:[#allocation10 + $0x1b8] sm:$0xff]
    %v4382 = vld [vmem:[#allocation10 + $0x1c0] sm:$0xff]
    %v4383 = vld [vmem:[#allocation10 + $0x1c8] sm:$0xff]
    %v4384 = vld [vmem:[#allocation10 + $0x1d0] sm:$0xff]
    %v4385 = vld [vmem:[#allocation10 + $0x1d8] sm:$0xff]
    %v4386 = vld [vmem:[#allocation10 + $0x1e0] sm:$0xff]
    %v4387 = vld [vmem:[#allocation10 + $0x1e8] sm:$0xff]
    %v4388 = vld [vmem:[#allocation10 + $0x1f0] sm:$0xff]
    %v4389 = vld [vmem:[#allocation10 + $0x1f8] sm:$0xff]
    %v4390 = vld [vmem:[#allocation10 + $0x200] sm:$0xff]
    %v4391 = vld [vmem:[#allocation10 + $0x208] sm:$0xff]
    %v4392 = vld [vmem:[#allocation10 + $0x210] sm:$0xff]
    %v4393 = vld [vmem:[#allocation10 + $0x218] sm:$0xff]
    %v4394 = vld [vmem:[#allocation10 + $0x220] sm:$0xff]
    %v4395 = vld [vmem:[#allocation10 + $0x228] sm:$0xff]
    %v4396 = vld [vmem:[#allocation10 + $0x230] sm:$0xff]
    %v4397 = vld [vmem:[#allocation10 + $0x238] sm:$0xff]
    %v4398 = vld [vmem:[#allocation10 + $0x240] sm:$0xff]
    %v4399 = vld [vmem:[#allocation10 + $0x248] sm:$0xff]
    %v4400 = vld [vmem:[#allocation10 + $0x250] sm:$0xff]
    %v4401 = vld [vmem:[#allocation10 + $0x258] sm:$0xff]
    %v4402 = vld [vmem:[#allocation10 + $0x260] sm:$0xff]
    %v4403 = vld [vmem:[#allocation10 + $0x268] sm:$0xff]
    %v4404 = vld [vmem:[#allocation10 + $0x270] sm:$0xff]
    %v4405 = vld [vmem:[#allocation10 + $0x278] sm:$0xff]
    %v4406 = vld [vmem:[#allocation10 + $0x280] sm:$0xff]
    %v4407 = vld [vmem:[#allocation10 + $0x288] sm:$0xff]
    %v4408 = vld [vmem:[#allocation10 + $0x290] sm:$0xff]
    %v4409 = vld [vmem:[#allocation10 + $0x298] sm:$0xff]
    %v4410 = vld [vmem:[#allocation10 + $0x2a0] sm:$0xff]
    %v4411 = vld [vmem:[#allocation10 + $0x2a8] sm:$0xff]
    %v4412 = vld [vmem:[#allocation10 + $0x2b0] sm:$0xff]
    %v4413 = vld [vmem:[#allocation10 + $0x2b8] sm:$0xff]
    %v4414 = vld [vmem:[#allocation10 + $0x2c0] sm:$0xff]
    %v4415 = vld [vmem:[#allocation10 + $0x2c8] sm:$0xff]
    %v4416 = vld [vmem:[#allocation10 + $0x2d0] sm:$0xff]
    %v4417 = vld [vmem:[#allocation10 + $0x2d8] sm:$0xff]
    %v4418 = vld [vmem:[#allocation10 + $0x2e0] sm:$0xff]
    %v4419 = vld [vmem:[#allocation10 + $0x2e8] sm:$0xff]
    %v4420 = vld [vmem:[#allocation10 + $0x2f0] sm:$0xff]
    %v4421 = vld [vmem:[#allocation10 + $0x2f8] sm:$0xff]
    %v4422 = vld [vmem:[#allocation10 + $0x300] sm:$0xff]
    %v4423 = vld [vmem:[#allocation10 + $0x308] sm:$0xff]
    %v4424 = vld [vmem:[#allocation10 + $0x310] sm:$0xff]
    %v4425 = vld [vmem:[#allocation10 + $0x318] sm:$0xff]
    %v4426 = vld [vmem:[#allocation10 + $0x320] sm:$0xff]
    %v4427 = vld [vmem:[#allocation10 + $0x328] sm:$0xff]
    %v4428 = vld [vmem:[#allocation10 + $0x330] sm:$0xff]
    %v4429 = vld [vmem:[#allocation10 + $0x338] sm:$0xff]
    %v4430 = vld [vmem:[#allocation10 + $0x340] sm:$0xff]
    %v4431 = vld [vmem:[#allocation10 + $0x348] sm:$0xff]
    %v4432 = vld [vmem:[#allocation10 + $0x350] sm:$0xff]
    %v4433 = vld [vmem:[#allocation10 + $0x358] sm:$0xff]
    %v4434 = vld [vmem:[#allocation10 + $0x360] sm:$0xff]
    %v4435 = vld [vmem:[#allocation10 + $0x368] sm:$0xff]
    %v4436 = vld [vmem:[#allocation10 + $0x370] sm:$0xff]
    %v4437 = vld [vmem:[#allocation10 + $0x378] sm:$0xff]
    %v4438 = vld [vmem:[#allocation10 + $0x380] sm:$0xff]
    %v4439 = vld [vmem:[#allocation10 + $0x388] sm:$0xff]
    %v4440 = vld [vmem:[#allocation10 + $0x390] sm:$0xff]
    %v4441 = vld [vmem:[#allocation10 + $0x398] sm:$0xff]
    %v4442 = vld [vmem:[#allocation10 + $0x3a0] sm:$0xff]
    %v4443 = vld [vmem:[#allocation10 + $0x3a8] sm:$0xff]
    %v4444 = vld [vmem:[#allocation10 + $0x3b0] sm:$0xff]
    %v4445 = vld [vmem:[#allocation10 + $0x3b8] sm:$0xff]
    %v4446 = vld [vmem:[#allocation10 + $0x3c0] sm:$0xff]
    %v4447 = vld [vmem:[#allocation10 + $0x3c8] sm:$0xff]
    %v4448 = vld [vmem:[#allocation10 + $0x3d0] sm:$0xff]
    %v4449 = vld [vmem:[#allocation10 + $0x3d8] sm:$0xff]
    %v4450 = vld [vmem:[#allocation10 + $0x3e0] sm:$0xff]
    %v4451 = vld [vmem:[#allocation10 + $0x3e8] sm:$0xff]
    %v4452 = vld [vmem:[#allocation10 + $0x3f0] sm:$0xff]
    %v4453 = vld [vmem:[#allocation10 + $0x3f8] sm:$0xff]
    %v4454 = vld [vmem:[#allocation10 + $0x400] sm:$0xff]
    %v4455 = vld [vmem:[#allocation10 + $0x408] sm:$0xff]
    %v4456 = vld [vmem:[#allocation10 + $0x410] sm:$0xff]
    %v4457 = vld [vmem:[#allocation10 + $0x418] sm:$0xff]
    %v4458 = vld [vmem:[#allocation10 + $0x420] sm:$0xff]
    %v4459 = vld [vmem:[#allocation10 + $0x428] sm:$0xff]
    %v4460 = vld [vmem:[#allocation10 + $0x430] sm:$0xff]
    %v4461 = vld [vmem:[#allocation10 + $0x438] sm:$0xff]
    %v4462 = vld [vmem:[#allocation10 + $0x440] sm:$0xff]
    %v4463 = vld [vmem:[#allocation10 + $0x448] sm:$0xff]
    %v4464 = vld [vmem:[#allocation10 + $0x450] sm:$0xff]
    %v4465 = vld [vmem:[#allocation10 + $0x458] sm:$0xff]
    %v4466 = vld [vmem:[#allocation10 + $0x460] sm:$0xff]
    %v4467 = vld [vmem:[#allocation10 + $0x468] sm:$0xff]
    %v4468 = vld [vmem:[#allocation10 + $0x470] sm:$0xff]
    %v4469 = vld [vmem:[#allocation10 + $0x478] sm:$0xff]
    %v4470 = vld [vmem:[#allocation10 + $0x480] sm:$0xff]
    %v4471 = vld [vmem:[#allocation10 + $0x488] sm:$0xff]
    %v4472 = vld [vmem:[#allocation10 + $0x490] sm:$0xff]
    %v4473 = vld [vmem:[#allocation10 + $0x498] sm:$0xff]
    %v4474 = vld [vmem:[#allocation10 + $0x4a0] sm:$0xff]
    %v4475 = vld [vmem:[#allocation10 + $0x4a8] sm:$0xff]
    %v4476 = vld [vmem:[#allocation10 + $0x4b0] sm:$0xff]
    %v4477 = vld [vmem:[#allocation10 + $0x4b8] sm:$0xff]
    %v4478 = vld [vmem:[#allocation10 + $0x4c0] sm:$0xff]
    %v4479 = vld [vmem:[#allocation10 + $0x4c8] sm:$0xff]
    %v4480 = vld [vmem:[#allocation10 + $0x4d0] sm:$0xff]
    %v4481 = vld [vmem:[#allocation10 + $0x4d8] sm:$0xff]
    %v4482 = vld [vmem:[#allocation10 + $0x4e0] sm:$0xff]
    %v4483 = vld [vmem:[#allocation10 + $0x4e8] sm:$0xff]
    %v4484 = vld [vmem:[#allocation10 + $0x4f0] sm:$0xff]
    %v4485 = vld [vmem:[#allocation10 + $0x4f8] sm:$0xff]
    %v4486 = vld [vmem:[#allocation10 + $0x500] sm:$0xff]
    %v4487 = vld [vmem:[#allocation10 + $0x508] sm:$0xff]
    %v4488 = vld [vmem:[#allocation10 + $0x510] sm:$0xff]
    %v4489 = vld [vmem:[#allocation10 + $0x518] sm:$0xff]
    %v4490 = vld [vmem:[#allocation10 + $0x520] sm:$0xff]
    %v4491 = vld [vmem:[#allocation10 + $0x528] sm:$0xff]
    %v4492 = vld [vmem:[#allocation10 + $0x530] sm:$0xff]
    %v4493 = vld [vmem:[#allocation10 + $0x538] sm:$0xff]
    %v4494 = vld [vmem:[#allocation10 + $0x540] sm:$0xff]
    %v4495 = vld [vmem:[#allocation10 + $0x548] sm:$0xff]
    %v4496 = vld [vmem:[#allocation10 + $0x550] sm:$0xff]
    %v4497 = vld [vmem:[#allocation10 + $0x558] sm:$0xff]
    %v4498 = vld [vmem:[#allocation10 + $0x560] sm:$0xff]
    %v4499 = vld [vmem:[#allocation10 + $0x568] sm:$0xff]
    %v4500 = vld [vmem:[#allocation10 + $0x570] sm:$0xff]
    %v4501 = vld [vmem:[#allocation10 + $0x578] sm:$0xff]
    %v4502 = vld [vmem:[#allocation10 + $0x580] sm:$0xff]
    %v4503 = vld [vmem:[#allocation10 + $0x588] sm:$0xff]
    %v4504 = vld [vmem:[#allocation10 + $0x590] sm:$0xff]
    %v4505 = vld [vmem:[#allocation10 + $0x598] sm:$0xff]
    %v4506 = vld [vmem:[#allocation10 + $0x5a0] sm:$0xff]
    %v4507 = vld [vmem:[#allocation10 + $0x5a8] sm:$0xff]
    %v4508 = vld [vmem:[#allocation10 + $0x5b0] sm:$0xff]
    %v4509 = vld [vmem:[#allocation10 + $0x5b8] sm:$0xff]
    %v4510 = vld [vmem:[#allocation10 + $0x5c0] sm:$0xff]
    %v4511 = vld [vmem:[#allocation10 + $0x5c8] sm:$0xff]
    %v4512 = vld [vmem:[#allocation10 + $0x5d0] sm:$0xff]
    %v4513 = vld [vmem:[#allocation10 + $0x5d8] sm:$0xff]
    %v4514 = vld [vmem:[#allocation10 + $0x5e0] sm:$0xff]
    %v4515 = vld [vmem:[#allocation10 + $0x5e8] sm:$0xff]
    %v4516 = vld [vmem:[#allocation10 + $0x5f0] sm:$0xff]
    %v4517 = vld [vmem:[#allocation10 + $0x5f8] sm:$0xff]
    %v4518 = vld [vmem:[#allocation10 + $0x600] sm:$0xff]
    %v4519 = vld [vmem:[#allocation10 + $0x608] sm:$0xff]
    %v4520 = vld [vmem:[#allocation10 + $0x610] sm:$0xff]
    %v4521 = vld [vmem:[#allocation10 + $0x618] sm:$0xff]
    %v4522 = vld [vmem:[#allocation10 + $0x620] sm:$0xff]
    %v4523 = vld [vmem:[#allocation10 + $0x628] sm:$0xff]
    %v4524 = vld [vmem:[#allocation10 + $0x630] sm:$0xff]
    %v4525 = vld [vmem:[#allocation10 + $0x638] sm:$0xff]
    %v4526 = vld [vmem:[#allocation10 + $0x640] sm:$0xff]
    %v4527 = vld [vmem:[#allocation10 + $0x648] sm:$0xff]
    %v4528 = vld [vmem:[#allocation10 + $0x650] sm:$0xff]
    %v4529 = vld [vmem:[#allocation10 + $0x658] sm:$0xff]
    %v4530 = vld [vmem:[#allocation10 + $0x660] sm:$0xff]
    %v4531 = vld [vmem:[#allocation10 + $0x668] sm:$0xff]
    %v4532 = vld [vmem:[#allocation10 + $0x670] sm:$0xff]
    %v4533 = vld [vmem:[#allocation10 + $0x678] sm:$0xff]
    %v4534 = vld [vmem:[#allocation10 + $0x680] sm:$0xff]
    %v4535 = vld [vmem:[#allocation10 + $0x688] sm:$0xff]
    %v4536 = vld [vmem:[#allocation10 + $0x690] sm:$0xff]
    %v4537 = vld [vmem:[#allocation10 + $0x698] sm:$0xff]
    %v4538 = vld [vmem:[#allocation10 + $0x6a0] sm:$0xff]
    %v4539 = vld [vmem:[#allocation10 + $0x6a8] sm:$0xff]
    %v4540 = vld [vmem:[#allocation10 + $0x6b0] sm:$0xff]
    %v4541 = vld [vmem:[#allocation10 + $0x6b8] sm:$0xff]
    %v4542 = vld [vmem:[#allocation10 + $0x6c0] sm:$0xff]
    %v4543 = vld [vmem:[#allocation10 + $0x6c8] sm:$0xff]
    %v4544 = vld [vmem:[#allocation10 + $0x6d0] sm:$0xff]
    %v4545 = vld [vmem:[#allocation10 + $0x6d8] sm:$0xff]
    %v4546 = vld [vmem:[#allocation10 + $0x6e0] sm:$0xff]
    %v4547 = vld [vmem:[#allocation10 + $0x6e8] sm:$0xff]
    %v4548 = vld [vmem:[#allocation10 + $0x6f0] sm:$0xff]
    %v4549 = vld [vmem:[#allocation10 + $0x6f8] sm:$0xff]
    %v4550 = vld [vmem:[#allocation10 + $0x700] sm:$0xff]
    %v4551 = vld [vmem:[#allocation10 + $0x708] sm:$0xff]
    %v4552 = vld [vmem:[#allocation10 + $0x710] sm:$0xff]
    %v4553 = vld [vmem:[#allocation10 + $0x718] sm:$0xff]
    %v4554 = vld [vmem:[#allocation10 + $0x720] sm:$0xff]
    %v4555 = vld [vmem:[#allocation10 + $0x728] sm:$0xff]
    %v4556 = vld [vmem:[#allocation10 + $0x730] sm:$0xff]
    %v4557 = vld [vmem:[#allocation10 + $0x738] sm:$0xff]
    %v4558 = vld [vmem:[#allocation10 + $0x740] sm:$0xff]
    %v4559 = vld [vmem:[#allocation10 + $0x748] sm:$0xff]
    %v4560 = vld [vmem:[#allocation10 + $0x750] sm:$0xff]
    %v4561 = vld [vmem:[#allocation10 + $0x758] sm:$0xff]
    %v4562 = vld [vmem:[#allocation10 + $0x760] sm:$0xff]
    %v4563 = vld [vmem:[#allocation10 + $0x768] sm:$0xff]
    %v4564 = vld [vmem:[#allocation10 + $0x770] sm:$0xff]
    %v4565 = vld [vmem:[#allocation10 + $0x778] sm:$0xff]
    %v4566 = vld [vmem:[#allocation10 + $0x780] sm:$0xff]
    %v4567 = vld [vmem:[#allocation10 + $0x788] sm:$0xff]
    %v4568 = vld [vmem:[#allocation10 + $0x790] sm:$0xff]
    %v4569 = vld [vmem:[#allocation10 + $0x798] sm:$0xff]
    %v4570 = vld [vmem:[#allocation10 + $0x7a0] sm:$0xff]
    %v4571 = vld [vmem:[#allocation10 + $0x7a8] sm:$0xff]
    %v4572 = vld [vmem:[#allocation10 + $0x7b0] sm:$0xff]
    %v4573 = vld [vmem:[#allocation10 + $0x7b8] sm:$0xff]
    %v4574 = vld [vmem:[#allocation10 + $0x7c0] sm:$0xff]
    %v4575 = vld [vmem:[#allocation10 + $0x7c8] sm:$0xff]
    %v4576 = vld [vmem:[#allocation10 + $0x7d0] sm:$0xff]
    %v4577 = vld [vmem:[#allocation10 + $0x7d8] sm:$0xff]
    %v4578 = vld [vmem:[#allocation10 + $0x7e0] sm:$0xff]
    %v4579 = vld [vmem:[#allocation10 + $0x7e8] sm:$0xff]
    %v4580 = vld [vmem:[#allocation10 + $0x7f0] sm:$0xff]
    %v4581 = vld [vmem:[#allocation10 + $0x7f8] sm:$0xff]
    %v4582 = vld [vmem:[#allocation11] sm:$0xf]
    %v4584 = vlaneseq
    %v4585 = vshrl.u32 %v4584, 7
    %v4586 = vsub.s32 0, %v4585
    %v4587 = vrot.slane %v4582, %v4586
    %v4588 = vlaneseq
    %v4589 = vshrl.u32 %v4588, 7
    %v4590 = vsub.s32 1, %v4589
    %v4591 = vrot.slane %v4582, %v4590
    %v4592 = vlaneseq
    %v4593 = vshrl.u32 %v4592, 7
    %v4594 = vsub.s32 2, %v4593
    %v4595 = vrot.slane %v4582, %v4594
    %v4596 = vlaneseq
    %v4597 = vshrl.u32 %v4596, 7
    %v4598 = vsub.s32 3, %v4597
    %v4599 = vrot.slane %v4582, %v4598
    %v4860 = vunpack.c.l.b16 %v4326
    %v4861 = vunpack.c.h.b16 %v4326
    %v4862 = vunpack.c.l.b16 %v4327
    %v4863 = vunpack.c.h.b16 %v4327
    %v4864 = vunpack.c.l.b16 %v4328
    %v4865 = vunpack.c.h.b16 %v4328
    %v4866 = vunpack.c.l.b16 %v4329
    %v4867 = vunpack.c.h.b16 %v4329
    %v4868 = vunpack.c.l.b16 %v4330
    %v4869 = vunpack.c.h.b16 %v4330
    %v4870 = vunpack.c.l.b16 %v4331
    %v4871 = vunpack.c.h.b16 %v4331
    %v4872 = vunpack.c.l.b16 %v4332
    %v4873 = vunpack.c.h.b16 %v4332
    %v4874 = vunpack.c.l.b16 %v4333
    %v4875 = vunpack.c.h.b16 %v4333
    %v4876 = vunpack.c.l.b16 %v4334
    %v4877 = vunpack.c.h.b16 %v4334
    %v4878 = vunpack.c.l.b16 %v4335
    %v4879 = vunpack.c.h.b16 %v4335
    %v4880 = vunpack.c.l.b16 %v4336
    %v4881 = vunpack.c.h.b16 %v4336
    %v4882 = vunpack.c.l.b16 %v4337
    %v4883 = vunpack.c.h.b16 %v4337
    %v4884 = vunpack.c.l.b16 %v4338
    %v4885 = vunpack.c.h.b16 %v4338
    %v4886 = vunpack.c.l.b16 %v4339
    %v4887 = vunpack.c.h.b16 %v4339
    %v4888 = vunpack.c.l.b16 %v4340
    %v4889 = vunpack.c.h.b16 %v4340
    %v4890 = vunpack.c.l.b16 %v4341
    %v4891 = vunpack.c.h.b16 %v4341
    %v4892 = vunpack.c.l.b16 %v4342
    %v4893 = vunpack.c.h.b16 %v4342
    %v4894 = vunpack.c.l.b16 %v4343
    %v4895 = vunpack.c.h.b16 %v4343
    %v4896 = vunpack.c.l.b16 %v4344
    %v4897 = vunpack.c.h.b16 %v4344
    %v4898 = vunpack.c.l.b16 %v4345
    %v4899 = vunpack.c.h.b16 %v4345
    %v4900 = vunpack.c.l.b16 %v4346
    %v4901 = vunpack.c.h.b16 %v4346
    %v4902 = vunpack.c.l.b16 %v4347
    %v4903 = vunpack.c.h.b16 %v4347
    %v4904 = vunpack.c.l.b16 %v4348
    %v4905 = vunpack.c.h.b16 %v4348
    %v4906 = vunpack.c.l.b16 %v4349
    %v4907 = vunpack.c.h.b16 %v4349
    %v4908 = vunpack.c.l.b16 %v4350
    %v4909 = vunpack.c.h.b16 %v4350
    %v4910 = vunpack.c.l.b16 %v4351
    %v4911 = vunpack.c.h.b16 %v4351
    %v4912 = vunpack.c.l.b16 %v4352
    %v4913 = vunpack.c.h.b16 %v4352
    %v4914 = vunpack.c.l.b16 %v4353
    %v4915 = vunpack.c.h.b16 %v4353
    %v4916 = vunpack.c.l.b16 %v4354
    %v4917 = vunpack.c.h.b16 %v4354
    %v4918 = vunpack.c.l.b16 %v4355
    %v4919 = vunpack.c.h.b16 %v4355
    %v4920 = vunpack.c.l.b16 %v4356
    %v4921 = vunpack.c.h.b16 %v4356
    %v4922 = vunpack.c.l.b16 %v4357
    %v4923 = vunpack.c.h.b16 %v4357
    %v4924 = vunpack.c.l.b16 %v4358
    %v4925 = vunpack.c.h.b16 %v4358
    %v4926 = vunpack.c.l.b16 %v4359
    %v4927 = vunpack.c.h.b16 %v4359
    %v4928 = vunpack.c.l.b16 %v4360
    %v4929 = vunpack.c.h.b16 %v4360
    %v4930 = vunpack.c.l.b16 %v4361
    %v4931 = vunpack.c.h.b16 %v4361
    %v4932 = vunpack.c.l.b16 %v4362
    %v4933 = vunpack.c.h.b16 %v4362
    %v4934 = vunpack.c.l.b16 %v4363
    %v4935 = vunpack.c.h.b16 %v4363
    %v4936 = vunpack.c.l.b16 %v4364
    %v4937 = vunpack.c.h.b16 %v4364
    %v4938 = vunpack.c.l.b16 %v4365
    %v4939 = vunpack.c.h.b16 %v4365
    %v4940 = vunpack.c.l.b16 %v4366
    %v4941 = vunpack.c.h.b16 %v4366
    %v4942 = vunpack.c.l.b16 %v4367
    %v4943 = vunpack.c.h.b16 %v4367
    %v4944 = vunpack.c.l.b16 %v4368
    %v4945 = vunpack.c.h.b16 %v4368
    %v4946 = vunpack.c.l.b16 %v4369
    %v4947 = vunpack.c.h.b16 %v4369
    %v4948 = vunpack.c.l.b16 %v4370
    %v4949 = vunpack.c.h.b16 %v4370
    %v4950 = vunpack.c.l.b16 %v4371
    %v4951 = vunpack.c.h.b16 %v4371
    %v4952 = vunpack.c.l.b16 %v4372
    %v4953 = vunpack.c.h.b16 %v4372
    %v4954 = vunpack.c.l.b16 %v4373
    %v4955 = vunpack.c.h.b16 %v4373
    %v4956 = vunpack.c.l.b16 %v4374
    %v4957 = vunpack.c.h.b16 %v4374
    %v4958 = vunpack.c.l.b16 %v4375
    %v4959 = vunpack.c.h.b16 %v4375
    %v4960 = vunpack.c.l.b16 %v4376
    %v4961 = vunpack.c.h.b16 %v4376
    %v4962 = vunpack.c.l.b16 %v4377
    %v4963 = vunpack.c.h.b16 %v4377
    %v4964 = vunpack.c.l.b16 %v4378
    %v4965 = vunpack.c.h.b16 %v4378
    %v4966 = vunpack.c.l.b16 %v4379
    %v4967 = vunpack.c.h.b16 %v4379
    %v4968 = vunpack.c.l.b16 %v4380
    %v4969 = vunpack.c.h.b16 %v4380
    %v4970 = vunpack.c.l.b16 %v4381
    %v4971 = vunpack.c.h.b16 %v4381
    %v4972 = vunpack.c.l.b16 %v4382
    %v4973 = vunpack.c.h.b16 %v4382
    %v4974 = vunpack.c.l.b16 %v4383
    %v4975 = vunpack.c.h.b16 %v4383
    %v4976 = vunpack.c.l.b16 %v4384
    %v4977 = vunpack.c.h.b16 %v4384
    %v4978 = vunpack.c.l.b16 %v4385
    %v4979 = vunpack.c.h.b16 %v4385
    %v4980 = vunpack.c.l.b16 %v4386
    %v4981 = vunpack.c.h.b16 %v4386
    %v4982 = vunpack.c.l.b16 %v4387
    %v4983 = vunpack.c.h.b16 %v4387
    %v4984 = vunpack.c.l.b16 %v4388
    %v4985 = vunpack.c.h.b16 %v4388
    %v4986 = vunpack.c.l.b16 %v4389
    %v4987 = vunpack.c.h.b16 %v4389
    %v4988 = vunpack.c.l.b16 %v4390
    %v4989 = vunpack.c.h.b16 %v4390
    %v4990 = vunpack.c.l.b16 %v4391
    %v4991 = vunpack.c.h.b16 %v4391
    %v4992 = vunpack.c.l.b16 %v4392
    %v4993 = vunpack.c.h.b16 %v4392
    %v4994 = vunpack.c.l.b16 %v4393
    %v4995 = vunpack.c.h.b16 %v4393
    %v4996 = vunpack.c.l.b16 %v4394
    %v4997 = vunpack.c.h.b16 %v4394
    %v4998 = vunpack.c.l.b16 %v4395
    %v4999 = vunpack.c.h.b16 %v4395
    %v5000 = vunpack.c.l.b16 %v4396
    %v5001 = vunpack.c.h.b16 %v4396
    %v5002 = vunpack.c.l.b16 %v4397
    %v5003 = vunpack.c.h.b16 %v4397
    %v5004 = vunpack.c.l.b16 %v4398
    %v5005 = vunpack.c.h.b16 %v4398
    %v5006 = vunpack.c.l.b16 %v4399
    %v5007 = vunpack.c.h.b16 %v4399
    %v5008 = vunpack.c.l.b16 %v4400
    %v5009 = vunpack.c.h.b16 %v4400
    %v5010 = vunpack.c.l.b16 %v4401
    %v5011 = vunpack.c.h.b16 %v4401
    %v5012 = vunpack.c.l.b16 %v4402
    %v5013 = vunpack.c.h.b16 %v4402
    %v5014 = vunpack.c.l.b16 %v4403
    %v5015 = vunpack.c.h.b16 %v4403
    %v5016 = vunpack.c.l.b16 %v4404
    %v5017 = vunpack.c.h.b16 %v4404
    %v5018 = vunpack.c.l.b16 %v4405
    %v5019 = vunpack.c.h.b16 %v4405
    %v5020 = vunpack.c.l.b16 %v4406
    %v5021 = vunpack.c.h.b16 %v4406
    %v5022 = vunpack.c.l.b16 %v4407
    %v5023 = vunpack.c.h.b16 %v4407
    %v5024 = vunpack.c.l.b16 %v4408
    %v5025 = vunpack.c.h.b16 %v4408
    %v5026 = vunpack.c.l.b16 %v4409
    %v5027 = vunpack.c.h.b16 %v4409
    %v5028 = vunpack.c.l.b16 %v4410
    %v5029 = vunpack.c.h.b16 %v4410
    %v5030 = vunpack.c.l.b16 %v4411
    %v5031 = vunpack.c.h.b16 %v4411
    %v5032 = vunpack.c.l.b16 %v4412
    %v5033 = vunpack.c.h.b16 %v4412
    %v5034 = vunpack.c.l.b16 %v4413
    %v5035 = vunpack.c.h.b16 %v4413
    %v5036 = vunpack.c.l.b16 %v4414
    %v5037 = vunpack.c.h.b16 %v4414
    %v5038 = vunpack.c.l.b16 %v4415
    %v5039 = vunpack.c.h.b16 %v4415
    %v5040 = vunpack.c.l.b16 %v4416
    %v5041 = vunpack.c.h.b16 %v4416
    %v5042 = vunpack.c.l.b16 %v4417
    %v5043 = vunpack.c.h.b16 %v4417
    %v5044 = vunpack.c.l.b16 %v4418
    %v5045 = vunpack.c.h.b16 %v4418
    %v5046 = vunpack.c.l.b16 %v4419
    %v5047 = vunpack.c.h.b16 %v4419
    %v5048 = vunpack.c.l.b16 %v4420
    %v5049 = vunpack.c.h.b16 %v4420
    %v5050 = vunpack.c.l.b16 %v4421
    %v5051 = vunpack.c.h.b16 %v4421
    %v5052 = vunpack.c.l.b16 %v4422
    %v5053 = vunpack.c.h.b16 %v4422
    %v5054 = vunpack.c.l.b16 %v4423
    %v5055 = vunpack.c.h.b16 %v4423
    %v5056 = vunpack.c.l.b16 %v4424
    %v5057 = vunpack.c.h.b16 %v4424
    %v5058 = vunpack.c.l.b16 %v4425
    %v5059 = vunpack.c.h.b16 %v4425
    %v5060 = vunpack.c.l.b16 %v4426
    %v5061 = vunpack.c.h.b16 %v4426
    %v5062 = vunpack.c.l.b16 %v4427
    %v5063 = vunpack.c.h.b16 %v4427
    %v5064 = vunpack.c.l.b16 %v4428
    %v5065 = vunpack.c.h.b16 %v4428
    %v5066 = vunpack.c.l.b16 %v4429
    %v5067 = vunpack.c.h.b16 %v4429
    %v5068 = vunpack.c.l.b16 %v4430
    %v5069 = vunpack.c.h.b16 %v4430
    %v5070 = vunpack.c.l.b16 %v4431
    %v5071 = vunpack.c.h.b16 %v4431
    %v5072 = vunpack.c.l.b16 %v4432
    %v5073 = vunpack.c.h.b16 %v4432
    %v5074 = vunpack.c.l.b16 %v4433
    %v5075 = vunpack.c.h.b16 %v4433
    %v5076 = vunpack.c.l.b16 %v4434
    %v5077 = vunpack.c.h.b16 %v4434
    %v5078 = vunpack.c.l.b16 %v4435
    %v5079 = vunpack.c.h.b16 %v4435
    %v5080 = vunpack.c.l.b16 %v4436
    %v5081 = vunpack.c.h.b16 %v4436
    %v5082 = vunpack.c.l.b16 %v4437
    %v5083 = vunpack.c.h.b16 %v4437
    %v5084 = vunpack.c.l.b16 %v4438
    %v5085 = vunpack.c.h.b16 %v4438
    %v5086 = vunpack.c.l.b16 %v4439
    %v5087 = vunpack.c.h.b16 %v4439
    %v5088 = vunpack.c.l.b16 %v4440
    %v5089 = vunpack.c.h.b16 %v4440
    %v5090 = vunpack.c.l.b16 %v4441
    %v5091 = vunpack.c.h.b16 %v4441
    %v5092 = vunpack.c.l.b16 %v4442
    %v5093 = vunpack.c.h.b16 %v4442
    %v5094 = vunpack.c.l.b16 %v4443
    %v5095 = vunpack.c.h.b16 %v4443
    %v5096 = vunpack.c.l.b16 %v4444
    %v5097 = vunpack.c.h.b16 %v4444
    %v5098 = vunpack.c.l.b16 %v4445
    %v5099 = vunpack.c.h.b16 %v4445
    %v5100 = vunpack.c.l.b16 %v4446
    %v5101 = vunpack.c.h.b16 %v4446
    %v5102 = vunpack.c.l.b16 %v4447
    %v5103 = vunpack.c.h.b16 %v4447
    %v5104 = vunpack.c.l.b16 %v4448
    %v5105 = vunpack.c.h.b16 %v4448
    %v5106 = vunpack.c.l.b16 %v4449
    %v5107 = vunpack.c.h.b16 %v4449
    %v5108 = vunpack.c.l.b16 %v4450
    %v5109 = vunpack.c.h.b16 %v4450
    %v5110 = vunpack.c.l.b16 %v4451
    %v5111 = vunpack.c.h.b16 %v4451
    %v5112 = vunpack.c.l.b16 %v4452
    %v5113 = vunpack.c.h.b16 %v4452
    %v5114 = vunpack.c.l.b16 %v4453
    %v5115 = vunpack.c.h.b16 %v4453
    %v5116 = vunpack.c.l.b16 %v4454
    %v5117 = vunpack.c.h.b16 %v4454
    %v5118 = vunpack.c.l.b16 %v4455
    %v5119 = vunpack.c.h.b16 %v4455
    %v5120 = vunpack.c.l.b16 %v4456
    %v5121 = vunpack.c.h.b16 %v4456
    %v5122 = vunpack.c.l.b16 %v4457
    %v5123 = vunpack.c.h.b16 %v4457
    %v5124 = vunpack.c.l.b16 %v4458
    %v5125 = vunpack.c.h.b16 %v4458
    %v5126 = vunpack.c.l.b16 %v4459
    %v5127 = vunpack.c.h.b16 %v4459
    %v5128 = vunpack.c.l.b16 %v4460
    %v5129 = vunpack.c.h.b16 %v4460
    %v5130 = vunpack.c.l.b16 %v4461
    %v5131 = vunpack.c.h.b16 %v4461
    %v5132 = vunpack.c.l.b16 %v4462
    %v5133 = vunpack.c.h.b16 %v4462
    %v5134 = vunpack.c.l.b16 %v4463
    %v5135 = vunpack.c.h.b16 %v4463
    %v5136 = vunpack.c.l.b16 %v4464
    %v5137 = vunpack.c.h.b16 %v4464
    %v5138 = vunpack.c.l.b16 %v4465
    %v5139 = vunpack.c.h.b16 %v4465
    %v5140 = vunpack.c.l.b16 %v4466
    %v5141 = vunpack.c.h.b16 %v4466
    %v5142 = vunpack.c.l.b16 %v4467
    %v5143 = vunpack.c.h.b16 %v4467
    %v5144 = vunpack.c.l.b16 %v4468
    %v5145 = vunpack.c.h.b16 %v4468
    %v5146 = vunpack.c.l.b16 %v4469
    %v5147 = vunpack.c.h.b16 %v4469
    %v5148 = vunpack.c.l.b16 %v4470
    %v5149 = vunpack.c.h.b16 %v4470
    %v5150 = vunpack.c.l.b16 %v4471
    %v5151 = vunpack.c.h.b16 %v4471
    %v5152 = vunpack.c.l.b16 %v4472
    %v5153 = vunpack.c.h.b16 %v4472
    %v5154 = vunpack.c.l.b16 %v4473
    %v5155 = vunpack.c.h.b16 %v4473
    %v5156 = vunpack.c.l.b16 %v4474
    %v5157 = vunpack.c.h.b16 %v4474
    %v5158 = vunpack.c.l.b16 %v4475
    %v5159 = vunpack.c.h.b16 %v4475
    %v5160 = vunpack.c.l.b16 %v4476
    %v5161 = vunpack.c.h.b16 %v4476
    %v5162 = vunpack.c.l.b16 %v4477
    %v5163 = vunpack.c.h.b16 %v4477
    %v5164 = vunpack.c.l.b16 %v4478
    %v5165 = vunpack.c.h.b16 %v4478
    %v5166 = vunpack.c.l.b16 %v4479
    %v5167 = vunpack.c.h.b16 %v4479
    %v5168 = vunpack.c.l.b16 %v4480
    %v5169 = vunpack.c.h.b16 %v4480
    %v5170 = vunpack.c.l.b16 %v4481
    %v5171 = vunpack.c.h.b16 %v4481
    %v5172 = vunpack.c.l.b16 %v4482
    %v5173 = vunpack.c.h.b16 %v4482
    %v5174 = vunpack.c.l.b16 %v4483
    %v5175 = vunpack.c.h.b16 %v4483
    %v5176 = vunpack.c.l.b16 %v4484
    %v5177 = vunpack.c.h.b16 %v4484
    %v5178 = vunpack.c.l.b16 %v4485
    %v5179 = vunpack.c.h.b16 %v4485
    %v5180 = vunpack.c.l.b16 %v4486
    %v5181 = vunpack.c.h.b16 %v4486
    %v5182 = vunpack.c.l.b16 %v4487
    %v5183 = vunpack.c.h.b16 %v4487
    %v5184 = vunpack.c.l.b16 %v4488
    %v5185 = vunpack.c.h.b16 %v4488
    %v5186 = vunpack.c.l.b16 %v4489
    %v5187 = vunpack.c.h.b16 %v4489
    %v5188 = vunpack.c.l.b16 %v4490
    %v5189 = vunpack.c.h.b16 %v4490
    %v5190 = vunpack.c.l.b16 %v4491
    %v5191 = vunpack.c.h.b16 %v4491
    %v5192 = vunpack.c.l.b16 %v4492
    %v5193 = vunpack.c.h.b16 %v4492
    %v5194 = vunpack.c.l.b16 %v4493
    %v5195 = vunpack.c.h.b16 %v4493
    %v5196 = vunpack.c.l.b16 %v4494
    %v5197 = vunpack.c.h.b16 %v4494
    %v5198 = vunpack.c.l.b16 %v4495
    %v5199 = vunpack.c.h.b16 %v4495
    %v5200 = vunpack.c.l.b16 %v4496
    %v5201 = vunpack.c.h.b16 %v4496
    %v5202 = vunpack.c.l.b16 %v4497
    %v5203 = vunpack.c.h.b16 %v4497
    %v5204 = vunpack.c.l.b16 %v4498
    %v5205 = vunpack.c.h.b16 %v4498
    %v5206 = vunpack.c.l.b16 %v4499
    %v5207 = vunpack.c.h.b16 %v4499
    %v5208 = vunpack.c.l.b16 %v4500
    %v5209 = vunpack.c.h.b16 %v4500
    %v5210 = vunpack.c.l.b16 %v4501
    %v5211 = vunpack.c.h.b16 %v4501
    %v5212 = vunpack.c.l.b16 %v4502
    %v5213 = vunpack.c.h.b16 %v4502
    %v5214 = vunpack.c.l.b16 %v4503
    %v5215 = vunpack.c.h.b16 %v4503
    %v5216 = vunpack.c.l.b16 %v4504
    %v5217 = vunpack.c.h.b16 %v4504
    %v5218 = vunpack.c.l.b16 %v4505
    %v5219 = vunpack.c.h.b16 %v4505
    %v5220 = vunpack.c.l.b16 %v4506
    %v5221 = vunpack.c.h.b16 %v4506
    %v5222 = vunpack.c.l.b16 %v4507
    %v5223 = vunpack.c.h.b16 %v4507
    %v5224 = vunpack.c.l.b16 %v4508
    %v5225 = vunpack.c.h.b16 %v4508
    %v5226 = vunpack.c.l.b16 %v4509
    %v5227 = vunpack.c.h.b16 %v4509
    %v5228 = vunpack.c.l.b16 %v4510
    %v5229 = vunpack.c.h.b16 %v4510
    %v5230 = vunpack.c.l.b16 %v4511
    %v5231 = vunpack.c.h.b16 %v4511
    %v5232 = vunpack.c.l.b16 %v4512
    %v5233 = vunpack.c.h.b16 %v4512
    %v5234 = vunpack.c.l.b16 %v4513
    %v5235 = vunpack.c.h.b16 %v4513
    %v5236 = vunpack.c.l.b16 %v4514
    %v5237 = vunpack.c.h.b16 %v4514
    %v5238 = vunpack.c.l.b16 %v4515
    %v5239 = vunpack.c.h.b16 %v4515
    %v5240 = vunpack.c.l.b16 %v4516
    %v5241 = vunpack.c.h.b16 %v4516
    %v5242 = vunpack.c.l.b16 %v4517
    %v5243 = vunpack.c.h.b16 %v4517
    %v5244 = vunpack.c.l.b16 %v4518
    %v5245 = vunpack.c.h.b16 %v4518
    %v5246 = vunpack.c.l.b16 %v4519
    %v5247 = vunpack.c.h.b16 %v4519
    %v5248 = vunpack.c.l.b16 %v4520
    %v5249 = vunpack.c.h.b16 %v4520
    %v5250 = vunpack.c.l.b16 %v4521
    %v5251 = vunpack.c.h.b16 %v4521
    %v5252 = vunpack.c.l.b16 %v4522
    %v5253 = vunpack.c.h.b16 %v4522
    %v5254 = vunpack.c.l.b16 %v4523
    %v5255 = vunpack.c.h.b16 %v4523
    %v5256 = vunpack.c.l.b16 %v4524
    %v5257 = vunpack.c.h.b16 %v4524
    %v5258 = vunpack.c.l.b16 %v4525
    %v5259 = vunpack.c.h.b16 %v4525
    %v5260 = vunpack.c.l.b16 %v4526
    %v5261 = vunpack.c.h.b16 %v4526
    %v5262 = vunpack.c.l.b16 %v4527
    %v5263 = vunpack.c.h.b16 %v4527
    %v5264 = vunpack.c.l.b16 %v4528
    %v5265 = vunpack.c.h.b16 %v4528
    %v5266 = vunpack.c.l.b16 %v4529
    %v5267 = vunpack.c.h.b16 %v4529
    %v5268 = vunpack.c.l.b16 %v4530
    %v5269 = vunpack.c.h.b16 %v4530
    %v5270 = vunpack.c.l.b16 %v4531
    %v5271 = vunpack.c.h.b16 %v4531
    %v5272 = vunpack.c.l.b16 %v4532
    %v5273 = vunpack.c.h.b16 %v4532
    %v5274 = vunpack.c.l.b16 %v4533
    %v5275 = vunpack.c.h.b16 %v4533
    %v5276 = vunpack.c.l.b16 %v4534
    %v5277 = vunpack.c.h.b16 %v4534
    %v5278 = vunpack.c.l.b16 %v4535
    %v5279 = vunpack.c.h.b16 %v4535
    %v5280 = vunpack.c.l.b16 %v4536
    %v5281 = vunpack.c.h.b16 %v4536
    %v5282 = vunpack.c.l.b16 %v4537
    %v5283 = vunpack.c.h.b16 %v4537
    %v5284 = vunpack.c.l.b16 %v4538
    %v5285 = vunpack.c.h.b16 %v4538
    %v5286 = vunpack.c.l.b16 %v4539
    %v5287 = vunpack.c.h.b16 %v4539
    %v5288 = vunpack.c.l.b16 %v4540
    %v5289 = vunpack.c.h.b16 %v4540
    %v5290 = vunpack.c.l.b16 %v4541
    %v5291 = vunpack.c.h.b16 %v4541
    %v5292 = vunpack.c.l.b16 %v4542
    %v5293 = vunpack.c.h.b16 %v4542
    %v5294 = vunpack.c.l.b16 %v4543
    %v5295 = vunpack.c.h.b16 %v4543
    %v5296 = vunpack.c.l.b16 %v4544
    %v5297 = vunpack.c.h.b16 %v4544
    %v5298 = vunpack.c.l.b16 %v4545
    %v5299 = vunpack.c.h.b16 %v4545
    %v5300 = vunpack.c.l.b16 %v4546
    %v5301 = vunpack.c.h.b16 %v4546
    %v5302 = vunpack.c.l.b16 %v4547
    %v5303 = vunpack.c.h.b16 %v4547
    %v5304 = vunpack.c.l.b16 %v4548
    %v5305 = vunpack.c.h.b16 %v4548
    %v5306 = vunpack.c.l.b16 %v4549
    %v5307 = vunpack.c.h.b16 %v4549
    %v5308 = vunpack.c.l.b16 %v4550
    %v5309 = vunpack.c.h.b16 %v4550
    %v5310 = vunpack.c.l.b16 %v4551
    %v5311 = vunpack.c.h.b16 %v4551
    %v5312 = vunpack.c.l.b16 %v4552
    %v5313 = vunpack.c.h.b16 %v4552
    %v5314 = vunpack.c.l.b16 %v4553
    %v5315 = vunpack.c.h.b16 %v4553
    %v5316 = vunpack.c.l.b16 %v4554
    %v5317 = vunpack.c.h.b16 %v4554
    %v5318 = vunpack.c.l.b16 %v4555
    %v5319 = vunpack.c.h.b16 %v4555
    %v5320 = vunpack.c.l.b16 %v4556
    %v5321 = vunpack.c.h.b16 %v4556
    %v5322 = vunpack.c.l.b16 %v4557
    %v5323 = vunpack.c.h.b16 %v4557
    %v5324 = vunpack.c.l.b16 %v4558
    %v5325 = vunpack.c.h.b16 %v4558
    %v5326 = vunpack.c.l.b16 %v4559
    %v5327 = vunpack.c.h.b16 %v4559
    %v5328 = vunpack.c.l.b16 %v4560
    %v5329 = vunpack.c.h.b16 %v4560
    %v5330 = vunpack.c.l.b16 %v4561
    %v5331 = vunpack.c.h.b16 %v4561
    %v5332 = vunpack.c.l.b16 %v4562
    %v5333 = vunpack.c.h.b16 %v4562
    %v5334 = vunpack.c.l.b16 %v4563
    %v5335 = vunpack.c.h.b16 %v4563
    %v5336 = vunpack.c.l.b16 %v4564
    %v5337 = vunpack.c.h.b16 %v4564
    %v5338 = vunpack.c.l.b16 %v4565
    %v5339 = vunpack.c.h.b16 %v4565
    %v5340 = vunpack.c.l.b16 %v4566
    %v5341 = vunpack.c.h.b16 %v4566
    %v5342 = vunpack.c.l.b16 %v4567
    %v5343 = vunpack.c.h.b16 %v4567
    %v5344 = vunpack.c.l.b16 %v4568
    %v5345 = vunpack.c.h.b16 %v4568
    %v5346 = vunpack.c.l.b16 %v4569
    %v5347 = vunpack.c.h.b16 %v4569
    %v5348 = vunpack.c.l.b16 %v4570
    %v5349 = vunpack.c.h.b16 %v4570
    %v5350 = vunpack.c.l.b16 %v4571
    %v5351 = vunpack.c.h.b16 %v4571
    %v5352 = vunpack.c.l.b16 %v4572
    %v5353 = vunpack.c.h.b16 %v4572
    %v5354 = vunpack.c.l.b16 %v4573
    %v5355 = vunpack.c.h.b16 %v4573
    %v5356 = vunpack.c.l.b16 %v4574
    %v5357 = vunpack.c.h.b16 %v4574
    %v5358 = vunpack.c.l.b16 %v4575
    %v5359 = vunpack.c.h.b16 %v4575
    %v5360 = vunpack.c.l.b16 %v4576
    %v5361 = vunpack.c.h.b16 %v4576
    %v5362 = vunpack.c.l.b16 %v4577
    %v5363 = vunpack.c.h.b16 %v4577
    %v5364 = vunpack.c.l.b16 %v4578
    %v5365 = vunpack.c.h.b16 %v4578
    %v5366 = vunpack.c.l.b16 %v4579
    %v5367 = vunpack.c.h.b16 %v4579
    %v5368 = vunpack.c.l.b16 %v4580
    %v5369 = vunpack.c.h.b16 %v4580
    %v5370 = vunpack.c.l.b16 %v4581
    %v5371 = vunpack.c.h.b16 %v4581
    %v5372 = vpack.c.b16 %v4864, %v4860
    %v5373 = vpack.c.b16 %v4865, %v4861
    %v5374 = vpack.c.b16 %v4866, %v4862
    %v5375 = vpack.c.b16 %v4867, %v4863
    %v5376 = vpack.c.b16 %v4872, %v4868
    %v5377 = vpack.c.b16 %v4873, %v4869
    %v5378 = vpack.c.b16 %v4874, %v4870
    %v5379 = vpack.c.b16 %v4875, %v4871
    %v5380 = vpack.c.b16 %v4880, %v4876
    %v5381 = vpack.c.b16 %v4881, %v4877
    %v5382 = vpack.c.b16 %v4882, %v4878
    %v5383 = vpack.c.b16 %v4883, %v4879
    %v5384 = vpack.c.b16 %v4888, %v4884
    %v5385 = vpack.c.b16 %v4889, %v4885
    %v5386 = vpack.c.b16 %v4890, %v4886
    %v5387 = vpack.c.b16 %v4891, %v4887
    %v5388 = vpack.c.b16 %v4896, %v4892
    %v5389 = vpack.c.b16 %v4897, %v4893
    %v5390 = vpack.c.b16 %v4898, %v4894
    %v5391 = vpack.c.b16 %v4899, %v4895
    %v5392 = vpack.c.b16 %v4904, %v4900
    %v5393 = vpack.c.b16 %v4905, %v4901
    %v5394 = vpack.c.b16 %v4906, %v4902
    %v5395 = vpack.c.b16 %v4907, %v4903
    %v5396 = vpack.c.b16 %v4912, %v4908
    %v5397 = vpack.c.b16 %v4913, %v4909
    %v5398 = vpack.c.b16 %v4914, %v4910
    %v5399 = vpack.c.b16 %v4915, %v4911
    %v5400 = vpack.c.b16 %v4920, %v4916
    %v5401 = vpack.c.b16 %v4921, %v4917
    %v5402 = vpack.c.b16 %v4922, %v4918
    %v5403 = vpack.c.b16 %v4923, %v4919
    %v5404 = vpack.c.b16 %v4928, %v4924
    %v5405 = vpack.c.b16 %v4929, %v4925
    %v5406 = vpack.c.b16 %v4930, %v4926
    %v5407 = vpack.c.b16 %v4931, %v4927
    %v5408 = vpack.c.b16 %v4936, %v4932
    %v5409 = vpack.c.b16 %v4937, %v4933
    %v5410 = vpack.c.b16 %v4938, %v4934
    %v5411 = vpack.c.b16 %v4939, %v4935
    %v5412 = vpack.c.b16 %v4944, %v4940
    %v5413 = vpack.c.b16 %v4945, %v4941
    %v5414 = vpack.c.b16 %v4946, %v4942
    %v5415 = vpack.c.b16 %v4947, %v4943
    %v5416 = vpack.c.b16 %v4952, %v4948
    %v5417 = vpack.c.b16 %v4953, %v4949
    %v5418 = vpack.c.b16 %v4954, %v4950
    %v5419 = vpack.c.b16 %v4955, %v4951
    %v5420 = vpack.c.b16 %v4960, %v4956
    %v5421 = vpack.c.b16 %v4961, %v4957
    %v5422 = vpack.c.b16 %v4962, %v4958
    %v5423 = vpack.c.b16 %v4963, %v4959
    %v5424 = vpack.c.b16 %v4968, %v4964
    %v5425 = vpack.c.b16 %v4969, %v4965
    %v5426 = vpack.c.b16 %v4970, %v4966
    %v5427 = vpack.c.b16 %v4971, %v4967
    %v5428 = vpack.c.b16 %v4976, %v4972
    %v5429 = vpack.c.b16 %v4977, %v4973
    %v5430 = vpack.c.b16 %v4978, %v4974
    %v5431 = vpack.c.b16 %v4979, %v4975
    %v5432 = vpack.c.b16 %v4984, %v4980
    %v5433 = vpack.c.b16 %v4985, %v4981
    %v5434 = vpack.c.b16 %v4986, %v4982
    %v5435 = vpack.c.b16 %v4987, %v4983
    %v5436 = vpack.c.b16 %v4992, %v4988
    %v5437 = vpack.c.b16 %v4993, %v4989
    %v5438 = vpack.c.b16 %v4994, %v4990
    %v5439 = vpack.c.b16 %v4995, %v4991
    %v5440 = vpack.c.b16 %v5000, %v4996
    %v5441 = vpack.c.b16 %v5001, %v4997
    %v5442 = vpack.c.b16 %v5002, %v4998
    %v5443 = vpack.c.b16 %v5003, %v4999
    %v5444 = vpack.c.b16 %v5008, %v5004
    %v5445 = vpack.c.b16 %v5009, %v5005
    %v5446 = vpack.c.b16 %v5010, %v5006
    %v5447 = vpack.c.b16 %v5011, %v5007
    %v5448 = vpack.c.b16 %v5016, %v5012
    %v5449 = vpack.c.b16 %v5017, %v5013
    %v5450 = vpack.c.b16 %v5018, %v5014
    %v5451 = vpack.c.b16 %v5019, %v5015
    %v5452 = vpack.c.b16 %v5024, %v5020
    %v5453 = vpack.c.b16 %v5025, %v5021
    %v5454 = vpack.c.b16 %v5026, %v5022
    %v5455 = vpack.c.b16 %v5027, %v5023
    %v5456 = vpack.c.b16 %v5032, %v5028
    %v5457 = vpack.c.b16 %v5033, %v5029
    %v5458 = vpack.c.b16 %v5034, %v5030
    %v5459 = vpack.c.b16 %v5035, %v5031
    %v5460 = vpack.c.b16 %v5040, %v5036
    %v5461 = vpack.c.b16 %v5041, %v5037
    %v5462 = vpack.c.b16 %v5042, %v5038
    %v5463 = vpack.c.b16 %v5043, %v5039
    %v5464 = vpack.c.b16 %v5048, %v5044
    %v5465 = vpack.c.b16 %v5049, %v5045
    %v5466 = vpack.c.b16 %v5050, %v5046
    %v5467 = vpack.c.b16 %v5051, %v5047
    %v5468 = vpack.c.b16 %v5056, %v5052
    %v5469 = vpack.c.b16 %v5057, %v5053
    %v5470 = vpack.c.b16 %v5058, %v5054
    %v5471 = vpack.c.b16 %v5059, %v5055
    %v5472 = vpack.c.b16 %v5064, %v5060
    %v5473 = vpack.c.b16 %v5065, %v5061
    %v5474 = vpack.c.b16 %v5066, %v5062
    %v5475 = vpack.c.b16 %v5067, %v5063
    %v5476 = vpack.c.b16 %v5072, %v5068
    %v5477 = vpack.c.b16 %v5073, %v5069
    %v5478 = vpack.c.b16 %v5074, %v5070
    %v5479 = vpack.c.b16 %v5075, %v5071
    %v5480 = vpack.c.b16 %v5080, %v5076
    %v5481 = vpack.c.b16 %v5081, %v5077
    %v5482 = vpack.c.b16 %v5082, %v5078
    %v5483 = vpack.c.b16 %v5083, %v5079
    %v5484 = vpack.c.b16 %v5088, %v5084
    %v5485 = vpack.c.b16 %v5089, %v5085
    %v5486 = vpack.c.b16 %v5090, %v5086
    %v5487 = vpack.c.b16 %v5091, %v5087
    %v5488 = vpack.c.b16 %v5096, %v5092
    %v5489 = vpack.c.b16 %v5097, %v5093
    %v5490 = vpack.c.b16 %v5098, %v5094
    %v5491 = vpack.c.b16 %v5099, %v5095
    %v5492 = vpack.c.b16 %v5104, %v5100
    %v5493 = vpack.c.b16 %v5105, %v5101
    %v5494 = vpack.c.b16 %v5106, %v5102
    %v5495 = vpack.c.b16 %v5107, %v5103
    %v5496 = vpack.c.b16 %v5112, %v5108
    %v5497 = vpack.c.b16 %v5113, %v5109
    %v5498 = vpack.c.b16 %v5114, %v5110
    %v5499 = vpack.c.b16 %v5115, %v5111
    %v5500 = vpack.c.b16 %v5120, %v5116
    %v5501 = vpack.c.b16 %v5121, %v5117
    %v5502 = vpack.c.b16 %v5122, %v5118
    %v5503 = vpack.c.b16 %v5123, %v5119
    %v5504 = vpack.c.b16 %v5128, %v5124
    %v5505 = vpack.c.b16 %v5129, %v5125
    %v5506 = vpack.c.b16 %v5130, %v5126
    %v5507 = vpack.c.b16 %v5131, %v5127
    %v5508 = vpack.c.b16 %v5136, %v5132
    %v5509 = vpack.c.b16 %v5137, %v5133
    %v5510 = vpack.c.b16 %v5138, %v5134
    %v5511 = vpack.c.b16 %v5139, %v5135
    %v5512 = vpack.c.b16 %v5144, %v5140
    %v5513 = vpack.c.b16 %v5145, %v5141
    %v5514 = vpack.c.b16 %v5146, %v5142
    %v5515 = vpack.c.b16 %v5147, %v5143
    %v5516 = vpack.c.b16 %v5152, %v5148
    %v5517 = vpack.c.b16 %v5153, %v5149
    %v5518 = vpack.c.b16 %v5154, %v5150
    %v5519 = vpack.c.b16 %v5155, %v5151
    %v5520 = vpack.c.b16 %v5160, %v5156
    %v5521 = vpack.c.b16 %v5161, %v5157
    %v5522 = vpack.c.b16 %v5162, %v5158
    %v5523 = vpack.c.b16 %v5163, %v5159
    %v5524 = vpack.c.b16 %v5168, %v5164
    %v5525 = vpack.c.b16 %v5169, %v5165
    %v5526 = vpack.c.b16 %v5170, %v5166
    %v5527 = vpack.c.b16 %v5171, %v5167
    %v5528 = vpack.c.b16 %v5176, %v5172
    %v5529 = vpack.c.b16 %v5177, %v5173
    %v5530 = vpack.c.b16 %v5178, %v5174
    %v5531 = vpack.c.b16 %v5179, %v5175
    %v5532 = vpack.c.b16 %v5184, %v5180
    %v5533 = vpack.c.b16 %v5185, %v5181
    %v5534 = vpack.c.b16 %v5186, %v5182
    %v5535 = vpack.c.b16 %v5187, %v5183
    %v5536 = vpack.c.b16 %v5192, %v5188
    %v5537 = vpack.c.b16 %v5193, %v5189
    %v5538 = vpack.c.b16 %v5194, %v5190
    %v5539 = vpack.c.b16 %v5195, %v5191
    %v5540 = vpack.c.b16 %v5200, %v5196
    %v5541 = vpack.c.b16 %v5201, %v5197
    %v5542 = vpack.c.b16 %v5202, %v5198
    %v5543 = vpack.c.b16 %v5203, %v5199
    %v5544 = vpack.c.b16 %v5208, %v5204
    %v5545 = vpack.c.b16 %v5209, %v5205
    %v5546 = vpack.c.b16 %v5210, %v5206
    %v5547 = vpack.c.b16 %v5211, %v5207
    %v5548 = vpack.c.b16 %v5216, %v5212
    %v5549 = vpack.c.b16 %v5217, %v5213
    %v5550 = vpack.c.b16 %v5218, %v5214
    %v5551 = vpack.c.b16 %v5219, %v5215
    %v5552 = vpack.c.b16 %v5224, %v5220
    %v5553 = vpack.c.b16 %v5225, %v5221
    %v5554 = vpack.c.b16 %v5226, %v5222
    %v5555 = vpack.c.b16 %v5227, %v5223
    %v5556 = vpack.c.b16 %v5232, %v5228
    %v5557 = vpack.c.b16 %v5233, %v5229
    %v5558 = vpack.c.b16 %v5234, %v5230
    %v5559 = vpack.c.b16 %v5235, %v5231
    %v5560 = vpack.c.b16 %v5240, %v5236
    %v5561 = vpack.c.b16 %v5241, %v5237
    %v5562 = vpack.c.b16 %v5242, %v5238
    %v5563 = vpack.c.b16 %v5243, %v5239
    %v5564 = vpack.c.b16 %v5248, %v5244
    %v5565 = vpack.c.b16 %v5249, %v5245
    %v5566 = vpack.c.b16 %v5250, %v5246
    %v5567 = vpack.c.b16 %v5251, %v5247
    %v5568 = vpack.c.b16 %v5256, %v5252
    %v5569 = vpack.c.b16 %v5257, %v5253
    %v5570 = vpack.c.b16 %v5258, %v5254
    %v5571 = vpack.c.b16 %v5259, %v5255
    %v5572 = vpack.c.b16 %v5264, %v5260
    %v5573 = vpack.c.b16 %v5265, %v5261
    %v5574 = vpack.c.b16 %v5266, %v5262
    %v5575 = vpack.c.b16 %v5267, %v5263
    %v5576 = vpack.c.b16 %v5272, %v5268
    %v5577 = vpack.c.b16 %v5273, %v5269
    %v5578 = vpack.c.b16 %v5274, %v5270
    %v5579 = vpack.c.b16 %v5275, %v5271
    %v5580 = vpack.c.b16 %v5280, %v5276
    %v5581 = vpack.c.b16 %v5281, %v5277
    %v5582 = vpack.c.b16 %v5282, %v5278
    %v5583 = vpack.c.b16 %v5283, %v5279
    %v5584 = vpack.c.b16 %v5288, %v5284
    %v5585 = vpack.c.b16 %v5289, %v5285
    %v5586 = vpack.c.b16 %v5290, %v5286
    %v5587 = vpack.c.b16 %v5291, %v5287
    %v5588 = vpack.c.b16 %v5296, %v5292
    %v5589 = vpack.c.b16 %v5297, %v5293
    %v5590 = vpack.c.b16 %v5298, %v5294
    %v5591 = vpack.c.b16 %v5299, %v5295
    %v5592 = vpack.c.b16 %v5304, %v5300
    %v5593 = vpack.c.b16 %v5305, %v5301
    %v5594 = vpack.c.b16 %v5306, %v5302
    %v5595 = vpack.c.b16 %v5307, %v5303
    %v5596 = vpack.c.b16 %v5312, %v5308
    %v5597 = vpack.c.b16 %v5313, %v5309
    %v5598 = vpack.c.b16 %v5314, %v5310
    %v5599 = vpack.c.b16 %v5315, %v5311
    %v5600 = vpack.c.b16 %v5320, %v5316
    %v5601 = vpack.c.b16 %v5321, %v5317
    %v5602 = vpack.c.b16 %v5322, %v5318
    %v5603 = vpack.c.b16 %v5323, %v5319
    %v5604 = vpack.c.b16 %v5328, %v5324
    %v5605 = vpack.c.b16 %v5329, %v5325
    %v5606 = vpack.c.b16 %v5330, %v5326
    %v5607 = vpack.c.b16 %v5331, %v5327
    %v5608 = vpack.c.b16 %v5336, %v5332
    %v5609 = vpack.c.b16 %v5337, %v5333
    %v5610 = vpack.c.b16 %v5338, %v5334
    %v5611 = vpack.c.b16 %v5339, %v5335
    %v5612 = vpack.c.b16 %v5344, %v5340
    %v5613 = vpack.c.b16 %v5345, %v5341
    %v5614 = vpack.c.b16 %v5346, %v5342
    %v5615 = vpack.c.b16 %v5347, %v5343
    %v5616 = vpack.c.b16 %v5352, %v5348
    %v5617 = vpack.c.b16 %v5353, %v5349
    %v5618 = vpack.c.b16 %v5354, %v5350
    %v5619 = vpack.c.b16 %v5355, %v5351
    %v5620 = vpack.c.b16 %v5360, %v5356
    %v5621 = vpack.c.b16 %v5361, %v5357
    %v5622 = vpack.c.b16 %v5362, %v5358
    %v5623 = vpack.c.b16 %v5363, %v5359
    %v5624 = vpack.c.b16 %v5368, %v5364
    %v5625 = vpack.c.b16 %v5369, %v5365
    %v5626 = vpack.c.b16 %v5370, %v5366
    %v5627 = vpack.c.b16 %v5371, %v5367
    %5884 = vmatprep.subr.bf16.mxu0 %v5401
    %5885 = vmatpush1.bf16.msra.mxu0 %v5400
    %5886 = vmatprep.subr.bf16.mxu0 %v5397
    %5887 = vmatpush1.bf16.msra.mxu0 %v5396
    %5888 = vmatprep.subr.bf16.mxu0 %v5393
    %5889 = vmatpush1.bf16.msra.mxu0 %v5392
    %5890 = vmatprep.subr.bf16.mxu0 %v5389
    %5891 = vmatpush1.bf16.msra.mxu0 %v5388
    %5892 = vmatprep.subr.bf16.mxu0 %v5385
    %5893 = vmatpush1.bf16.msra.mxu0 %v5384
    %5894 = vmatprep.subr.bf16.mxu0 %v5381
    %5895 = vmatpush1.bf16.msra.mxu0 %v5380
    %5896 = vmatprep.subr.bf16.mxu0 %v5377
    %5897 = vmatpush1.bf16.msra.mxu0 %v5376
    %5898 = vmatprep.subr.bf16.mxu0 %v5373
    %5899 = vmatpush1.bf16.msra.mxu0 %v5372
    %5900 = vmatprep.subr.bf16.mxu0 %v5433
    %5901 = vmatpush2.bf16.msra.mxu0 %v5432
    %5902 = vmatprep.subr.bf16.mxu0 %v5429
    %5903 = vmatpush2.bf16.msra.mxu0 %v5428
    %5904 = vmatprep.subr.bf16.mxu0 %v5425
    %5905 = vmatpush2.bf16.msra.mxu0 %v5424
    %5906 = vmatprep.subr.bf16.mxu0 %v5421
    %5907 = vmatpush2.bf16.msra.mxu0 %v5420
    %5908 = vmatprep.subr.bf16.mxu0 %v5417
    %5909 = vmatpush2.bf16.msra.mxu0 %v5416
    %5910 = vmatprep.subr.bf16.mxu0 %v5413
    %5911 = vmatpush2.bf16.msra.mxu0 %v5412
    %5912 = vmatprep.subr.bf16.mxu0 %v5409
    %5913 = vmatpush2.bf16.msra.mxu0 %v5408
    %5914 = vmatprep.subr.bf16.mxu0 %v5405
    %5915 = vmatpush2.bf16.msra.mxu0 %v5404
    %5916 = vmatprep.mubr.bf16.mxu0 %v4319
    %5917 = vmatmul.mubr.bf16.gmra.mxu0 %v4318
    %v5918 = vpop.f32.mrf.mxu0
    %v5919 = vadd.f32 %v4587, %v5918
    %v5920 = vpop.f32.mrf.mxu0
    %v5921 = vadd.f32 %v4591, %v5920
    %v5922 = vpop.f32.mrf.mxu0
    %v5923 = vpop.f32.mrf.mxu0
    %5924 = vdwg.mxu0
    %5925 = vmatprep.subr.bf16.mxu0 %v5465
    %5926 = vmatpush1.bf16.msra.mxu0 %v5464
    %5927 = vmatprep.subr.bf16.mxu0 %v5461
    %5928 = vmatpush1.bf16.msra.mxu0 %v5460
    %5929 = vmatprep.subr.bf16.mxu0 %v5457
    %5930 = vmatpush1.bf16.msra.mxu0 %v5456
    %5931 = vmatprep.subr.bf16.mxu0 %v5453
    %5932 = vmatpush1.bf16.msra.mxu0 %v5452
    %5933 = vmatprep.subr.bf16.mxu0 %v5449
    %5934 = vmatpush1.bf16.msra.mxu0 %v5448
    %5935 = vmatprep.subr.bf16.mxu0 %v5445
    %5936 = vmatpush1.bf16.msra.mxu0 %v5444
    %5937 = vmatprep.subr.bf16.mxu0 %v5441
    %5938 = vmatpush1.bf16.msra.mxu0 %v5440
    %5939 = vmatprep.subr.bf16.mxu0 %v5437
    %5940 = vmatpush1.bf16.msra.mxu0 %v5436
    %5941 = vmatprep.subr.bf16.mxu0 %v5497
    %5942 = vmatpush2.bf16.msra.mxu0 %v5496
    %5943 = vmatprep.subr.bf16.mxu0 %v5493
    %5944 = vmatpush2.bf16.msra.mxu0 %v5492
    %5945 = vmatprep.subr.bf16.mxu0 %v5489
    %5946 = vmatpush2.bf16.msra.mxu0 %v5488
    %5947 = vmatprep.subr.bf16.mxu0 %v5485
    %5948 = vmatpush2.bf16.msra.mxu0 %v5484
    %5949 = vmatprep.subr.bf16.mxu0 %v5481
    %5950 = vmatpush2.bf16.msra.mxu0 %v5480
    %5951 = vmatprep.subr.bf16.mxu0 %v5477
    %5952 = vmatpush2.bf16.msra.mxu0 %v5476
    %5953 = vmatprep.subr.bf16.mxu0 %v5473
    %5954 = vmatpush2.bf16.msra.mxu0 %v5472
    %5955 = vmatprep.subr.bf16.mxu0 %v5469
    %5956 = vmatpush2.bf16.msra.mxu0 %v5468
    %5957 = vmatprep.mubr.bf16.mxu0 %v4321
    %5958 = vmatmul.mubr.bf16.gmra.mxu0 %v4320
    %v5959 = vpop.f32.mrf.mxu0
    %v5960 = vadd.f32 %v5919, %v5959
    %v5961 = vpop.f32.mrf.mxu0
    %v5962 = vadd.f32 %v5921, %v5961
    %v5963 = vpop.f32.mrf.mxu0
    %v5964 = vpop.f32.mrf.mxu0
    %5965 = vdwg.mxu0
    %5966 = vmatprep.subr.bf16.mxu0 %v5529
    %5967 = vmatpush1.bf16.msra.mxu0 %v5528
    %5968 = vmatprep.subr.bf16.mxu0 %v5525
    %5969 = vmatpush1.bf16.msra.mxu0 %v5524
    %5970 = vmatprep.subr.bf16.mxu0 %v5521
    %5971 = vmatpush1.bf16.msra.mxu0 %v5520
    %5972 = vmatprep.subr.bf16.mxu0 %v5517
    %5973 = vmatpush1.bf16.msra.mxu0 %v5516
    %5974 = vmatprep.subr.bf16.mxu0 %v5513
    %5975 = vmatpush1.bf16.msra.mxu0 %v5512
    %5976 = vmatprep.subr.bf16.mxu0 %v5509
    %5977 = vmatpush1.bf16.msra.mxu0 %v5508
    %5978 = vmatprep.subr.bf16.mxu0 %v5505
    %5979 = vmatpush1.bf16.msra.mxu0 %v5504
    %5980 = vmatprep.subr.bf16.mxu0 %v5501
    %5981 = vmatpush1.bf16.msra.mxu0 %v5500
    %5982 = vmatprep.subr.bf16.mxu0 %v5561
    %5983 = vmatpush2.bf16.msra.mxu0 %v5560
    %5984 = vmatprep.subr.bf16.mxu0 %v5557
    %5985 = vmatpush2.bf16.msra.mxu0 %v5556
    %5986 = vmatprep.subr.bf16.mxu0 %v5553
    %5987 = vmatpush2.bf16.msra.mxu0 %v5552
    %5988 = vmatprep.subr.bf16.mxu0 %v5549
    %5989 = vmatpush2.bf16.msra.mxu0 %v5548
    %5990 = vmatprep.subr.bf16.mxu0 %v5545
    %5991 = vmatpush2.bf16.msra.mxu0 %v5544
    %5992 = vmatprep.subr.bf16.mxu0 %v5541
    %5993 = vmatpush2.bf16.msra.mxu0 %v5540
    %5994 = vmatprep.subr.bf16.mxu0 %v5537
    %5995 = vmatpush2.bf16.msra.mxu0 %v5536
    %5996 = vmatprep.subr.bf16.mxu0 %v5533
    %5997 = vmatpush2.bf16.msra.mxu0 %v5532
    %5998 = vmatprep.mubr.bf16.mxu0 %v4323
    %5999 = vmatmul.mubr.bf16.gmra.mxu0 %v4322
    %v6000 = vpop.f32.mrf.mxu0
    %v6001 = vadd.f32 %v5960, %v6000
    %v6002 = vpop.f32.mrf.mxu0
    %v6003 = vadd.f32 %v5962, %v6002
    %v6004 = vpop.f32.mrf.mxu0
    %v6005 = vpop.f32.mrf.mxu0
    %6006 = vdwg.mxu0
    %6007 = vmatprep.subr.bf16.mxu0 %v5593
    %6008 = vmatpush1.bf16.msra.mxu0 %v5592
    %6009 = vmatprep.subr.bf16.mxu0 %v5589
    %6010 = vmatpush1.bf16.msra.mxu0 %v5588
    %6011 = vmatprep.subr.bf16.mxu0 %v5585
    %6012 = vmatpush1.bf16.msra.mxu0 %v5584
    %6013 = vmatprep.subr.bf16.mxu0 %v5581
    %6014 = vmatpush1.bf16.msra.mxu0 %v5580
    %6015 = vmatprep.subr.bf16.mxu0 %v5577
    %6016 = vmatpush1.bf16.msra.mxu0 %v5576
    %6017 = vmatprep.subr.bf16.mxu0 %v5573
    %6018 = vmatpush1.bf16.msra.mxu0 %v5572
    %6019 = vmatprep.subr.bf16.mxu0 %v5569
    %6020 = vmatpush1.bf16.msra.mxu0 %v5568
    %6021 = vmatprep.subr.bf16.mxu0 %v5565
    %6022 = vmatpush1.bf16.msra.mxu0 %v5564
    %6023 = vmatprep.subr.bf16.mxu0 %v5625
    %6024 = vmatpush2.bf16.msra.mxu0 %v5624
    %6025 = vmatprep.subr.bf16.mxu0 %v5621
    %6026 = vmatpush2.bf16.msra.mxu0 %v5620
    %6027 = vmatprep.subr.bf16.mxu0 %v5617
    %6028 = vmatpush2.bf16.msra.mxu0 %v5616
    %6029 = vmatprep.subr.bf16.mxu0 %v5613
    %6030 = vmatpush2.bf16.msra.mxu0 %v5612
    %6031 = vmatprep.subr.bf16.mxu0 %v5609
    %6032 = vmatpush2.bf16.msra.mxu0 %v5608
    %6033 = vmatprep.subr.bf16.mxu0 %v5605
    %6034 = vmatpush2.bf16.msra.mxu0 %v5604
    %6035 = vmatprep.subr.bf16.mxu0 %v5601
    %6036 = vmatpush2.bf16.msra.mxu0 %v5600
    %6037 = vmatprep.subr.bf16.mxu0 %v5597
    %6038 = vmatpush2.bf16.msra.mxu0 %v5596
    %6039 = vmatprep.mubr.bf16.mxu0 %v4325
    %6040 = vmatmul.mubr.bf16.gmra.mxu0 %v4324
    %v6041 = vpop.f32.mrf.mxu0
    %v6042 = vadd.f32 %v6001, %v6041
    %v6043 = vpop.f32.mrf.mxu0
    %v6044 = vadd.f32 %v6003, %v6043
    %v6045 = vpop.f32.mrf.mxu0
    %v6046 = vpop.f32.mrf.mxu0
    %6047 = vdwg.mxu0
    %6048 = vmatprep.subr.bf16.mxu0 %v5403
    %6049 = vmatpush1.bf16.msra.mxu0 %v5402
    %6050 = vmatprep.subr.bf16.mxu0 %v5399
    %6051 = vmatpush1.bf16.msra.mxu0 %v5398
    %6052 = vmatprep.subr.bf16.mxu0 %v5395
    %6053 = vmatpush1.bf16.msra.mxu0 %v5394
    %6054 = vmatprep.subr.bf16.mxu0 %v5391
    %6055 = vmatpush1.bf16.msra.mxu0 %v5390
    %6056 = vmatprep.subr.bf16.mxu0 %v5387
    %6057 = vmatpush1.bf16.msra.mxu0 %v5386
    %6058 = vmatprep.subr.bf16.mxu0 %v5383
    %6059 = vmatpush1.bf16.msra.mxu0 %v5382
    %6060 = vmatprep.subr.bf16.mxu0 %v5379
    %6061 = vmatpush1.bf16.msra.mxu0 %v5378
    %6062 = vmatprep.subr.bf16.mxu0 %v5375
    %6063 = vmatpush1.bf16.msra.mxu0 %v5374
    %6064 = vmatprep.subr.bf16.mxu0 %v5435
    %6065 = vmatpush2.bf16.msra.mxu0 %v5434
    %6066 = vmatprep.subr.bf16.mxu0 %v5431
    %6067 = vmatpush2.bf16.msra.mxu0 %v5430
    %6068 = vmatprep.subr.bf16.mxu0 %v5427
    %6069 = vmatpush2.bf16.msra.mxu0 %v5426
    %6070 = vmatprep.subr.bf16.mxu0 %v5423
    %6071 = vmatpush2.bf16.msra.mxu0 %v5422
    %6072 = vmatprep.subr.bf16.mxu0 %v5419
    %6073 = vmatpush2.bf16.msra.mxu0 %v5418
    %6074 = vmatprep.subr.bf16.mxu0 %v5415
    %6075 = vmatpush2.bf16.msra.mxu0 %v5414
    %6076 = vmatprep.subr.bf16.mxu0 %v5411
    %6077 = vmatpush2.bf16.msra.mxu0 %v5410
    %6078 = vmatprep.subr.bf16.mxu0 %v5407
    %6079 = vmatpush2.bf16.msra.mxu0 %v5406
    %6080 = vmatprep.mubr.bf16.mxu0 %v4319
    %6081 = vmatmul.mubr.bf16.gmra.mxu0 %v4318
    %v6082 = vpop.f32.mrf.mxu0
    %v6083 = vadd.f32 %v4595, %v6082
    %v6084 = vpop.f32.mrf.mxu0
    %v6085 = vadd.f32 %v4599, %v6084
    %v6086 = vpop.f32.mrf.mxu0
    %v6087 = vpop.f32.mrf.mxu0
    %6088 = vdwg.mxu0
    %6089 = vmatprep.subr.bf16.mxu0 %v5467
    %6090 = vmatpush1.bf16.msra.mxu0 %v5466
    %6091 = vmatprep.subr.bf16.mxu0 %v5463
    %6092 = vmatpush1.bf16.msra.mxu0 %v5462
    %6093 = vmatprep.subr.bf16.mxu0 %v5459
    %6094 = vmatpush1.bf16.msra.mxu0 %v5458
    %6095 = vmatprep.subr.bf16.mxu0 %v5455
    %6096 = vmatpush1.bf16.msra.mxu0 %v5454
    %6097 = vmatprep.subr.bf16.mxu0 %v5451
    %6098 = vmatpush1.bf16.msra.mxu0 %v5450
    %6099 = vmatprep.subr.bf16.mxu0 %v5447
    %6100 = vmatpush1.bf16.msra.mxu0 %v5446
    %6101 = vmatprep.subr.bf16.mxu0 %v5443
    %6102 = vmatpush1.bf16.msra.mxu0 %v5442
    %6103 = vmatprep.subr.bf16.mxu0 %v5439
    %6104 = vmatpush1.bf16.msra.mxu0 %v5438
    %6105 = vmatprep.subr.bf16.mxu0 %v5499
    %6106 = vmatpush2.bf16.msra.mxu0 %v5498
    %6107 = vmatprep.subr.bf16.mxu0 %v5495
    %6108 = vmatpush2.bf16.msra.mxu0 %v5494
    %6109 = vmatprep.subr.bf16.mxu0 %v5491
    %6110 = vmatpush2.bf16.msra.mxu0 %v5490
    %6111 = vmatprep.subr.bf16.mxu0 %v5487
    %6112 = vmatpush2.bf16.msra.mxu0 %v5486
    %6113 = vmatprep.subr.bf16.mxu0 %v5483
    %6114 = vmatpush2.bf16.msra.mxu0 %v5482
    %6115 = vmatprep.subr.bf16.mxu0 %v5479
    %6116 = vmatpush2.bf16.msra.mxu0 %v5478
    %6117 = vmatprep.subr.bf16.mxu0 %v5475
    %6118 = vmatpush2.bf16.msra.mxu0 %v5474
    %6119 = vmatprep.subr.bf16.mxu0 %v5471
    %6120 = vmatpush2.bf16.msra.mxu0 %v5470
    %6121 = vmatprep.mubr.bf16.mxu0 %v4321
    %6122 = vmatmul.mubr.bf16.gmra.mxu0 %v4320
    %v6123 = vpop.f32.mrf.mxu0
    %v6124 = vadd.f32 %v6083, %v6123
    %v6125 = vpop.f32.mrf.mxu0
    %v6126 = vadd.f32 %v6085, %v6125
    %v6127 = vpop.f32.mrf.mxu0
    %v6128 = vpop.f32.mrf.mxu0
    %6129 = vdwg.mxu0
    %6130 = vmatprep.subr.bf16.mxu0 %v5531
    %6131 = vmatpush1.bf16.msra.mxu0 %v5530
    %6132 = vmatprep.subr.bf16.mxu0 %v5527
    %6133 = vmatpush1.bf16.msra.mxu0 %v5526
    %6134 = vmatprep.subr.bf16.mxu0 %v5523
    %6135 = vmatpush1.bf16.msra.mxu0 %v5522
    %6136 = vmatprep.subr.bf16.mxu0 %v5519
    %6137 = vmatpush1.bf16.msra.mxu0 %v5518
    %6138 = vmatprep.subr.bf16.mxu0 %v5515
    %6139 = vmatpush1.bf16.msra.mxu0 %v5514
    %6140 = vmatprep.subr.bf16.mxu0 %v5511
    %6141 = vmatpush1.bf16.msra.mxu0 %v5510
    %6142 = vmatprep.subr.bf16.mxu0 %v5507
    %6143 = vmatpush1.bf16.msra.mxu0 %v5506
    %6144 = vmatprep.subr.bf16.mxu0 %v5503
    %6145 = vmatpush1.bf16.msra.mxu0 %v5502
    %6146 = vmatprep.subr.bf16.mxu0 %v5563
    %6147 = vmatpush2.bf16.msra.mxu0 %v5562
    %6148 = vmatprep.subr.bf16.mxu0 %v5559
    %6149 = vmatpush2.bf16.msra.mxu0 %v5558
    %6150 = vmatprep.subr.bf16.mxu0 %v5555
    %6151 = vmatpush2.bf16.msra.mxu0 %v5554
    %6152 = vmatprep.subr.bf16.mxu0 %v5551
    %6153 = vmatpush2.bf16.msra.mxu0 %v5550
    %6154 = vmatprep.subr.bf16.mxu0 %v5547
    %6155 = vmatpush2.bf16.msra.mxu0 %v5546
    %6156 = vmatprep.subr.bf16.mxu0 %v5543
    %6157 = vmatpush2.bf16.msra.mxu0 %v5542
    %6158 = vmatprep.subr.bf16.mxu0 %v5539
    %6159 = vmatpush2.bf16.msra.mxu0 %v5538
    %6160 = vmatprep.subr.bf16.mxu0 %v5535
    %6161 = vmatpush2.bf16.msra.mxu0 %v5534
    %6162 = vmatprep.mubr.bf16.mxu0 %v4323
    %6163 = vmatmul.mubr.bf16.gmra.mxu0 %v4322
    %v6164 = vpop.f32.mrf.mxu0
    %v6165 = vadd.f32 %v6124, %v6164
    %v6166 = vpop.f32.mrf.mxu0
    %v6167 = vadd.f32 %v6126, %v6166
    %v6168 = vpop.f32.mrf.mxu0
    %v6169 = vpop.f32.mrf.mxu0
    %6170 = vdwg.mxu0
    %6171 = vmatprep.subr.bf16.mxu0 %v5595
    %6172 = vmatpush1.bf16.msra.mxu0 %v5594
    %6173 = vmatprep.subr.bf16.mxu0 %v5591
    %6174 = vmatpush1.bf16.msra.mxu0 %v5590
    %6175 = vmatprep.subr.bf16.mxu0 %v5587
    %6176 = vmatpush1.bf16.msra.mxu0 %v5586
    %6177 = vmatprep.subr.bf16.mxu0 %v5583
    %6178 = vmatpush1.bf16.msra.mxu0 %v5582
    %6179 = vmatprep.subr.bf16.mxu0 %v5579
    %6180 = vmatpush1.bf16.msra.mxu0 %v5578
    %6181 = vmatprep.subr.bf16.mxu0 %v5575
    %6182 = vmatpush1.bf16.msra.mxu0 %v5574
    %6183 = vmatprep.subr.bf16.mxu0 %v5571
    %6184 = vmatpush1.bf16.msra.mxu0 %v5570
    %6185 = vmatprep.subr.bf16.mxu0 %v5567
    %6186 = vmatpush1.bf16.msra.mxu0 %v5566
    %6187 = vmatprep.subr.bf16.mxu0 %v5627
    %6188 = vmatpush2.bf16.msra.mxu0 %v5626
    %6189 = vmatprep.subr.bf16.mxu0 %v5623
    %6190 = vmatpush2.bf16.msra.mxu0 %v5622
    %6191 = vmatprep.subr.bf16.mxu0 %v5619
    %6192 = vmatpush2.bf16.msra.mxu0 %v5618
    %6193 = vmatprep.subr.bf16.mxu0 %v5615
    %6194 = vmatpush2.bf16.msra.mxu0 %v5614
    %6195 = vmatprep.subr.bf16.mxu0 %v5611
    %6196 = vmatpush2.bf16.msra.mxu0 %v5610
    %6197 = vmatprep.subr.bf16.mxu0 %v5607
    %6198 = vmatpush2.bf16.msra.mxu0 %v5606
    %6199 = vmatprep.subr.bf16.mxu0 %v5603
    %6200 = vmatpush2.bf16.msra.mxu0 %v5602
    %6201 = vmatprep.subr.bf16.mxu0 %v5599
    %6202 = vmatpush2.bf16.msra.mxu0 %v5598
    %6203 = vmatprep.mubr.bf16.mxu0 %v4325
    %6204 = vmatmul.mubr.bf16.gmra.mxu0 %v4324
    %v6205 = vpop.f32.mrf.mxu0
    %v6206 = vadd.f32 %v6165, %v6205
    %v6207 = vpop.f32.mrf.mxu0
    %v6208 = vadd.f32 %v6167, %v6207
    %v6209 = vpop.f32.mrf.mxu0
    %v6210 = vpop.f32.mrf.mxu0
    %6211 = vdwg.mxu0
    %vm6212 = vcmp.gt.f32.partialorder %v6042, 0.0
    %vm6213 = vcmp.gt.f32.partialorder %v6044, 0.0
    %vm6214 = vcmp.gt.f32.partialorder %v6206, 0.0
    %vm6215 = vcmp.gt.f32.partialorder %v6208, 0.0
    %v6216 = vmul.f32 %v6042, 1.442695
    %v6217 = vpow.pop %v6216
    %v6218 = vmul.f32 %v6044, 1.442695
    %v6219 = vpow.pop %v6218
    %v6220 = vmul.f32 %v6206, 1.442695
    %v6221 = vpow.pop %v6220
    %v6222 = vmul.f32 %v6208, 1.442695
    %v6223 = vpow.pop %v6222
    %v6224 = vsub.f32 %v6217, 1.0
    %v6225 = vsub.f32 %v6219, 1.0
    %v6226 = vsub.f32 %v6221, 1.0
    %v6227 = vsub.f32 %v6223, 1.0
    %v6228 = vmul.f32 %v6224, 1.6732632
    %v6229 = vmul.f32 %v6225, 1.6732632
    %v6230 = vmul.f32 %v6226, 1.6732632
    %v6231 = vmul.f32 %v6227, 1.6732632
    %v6232 = vsel %vm6212, %v6042, %v6228
    %v6233 = vsel %vm6213, %v6044, %v6229
    %v6234 = vsel %vm6214, %v6206, %v6230
    %v6235 = vsel %vm6215, %v6208, %v6231
    %v6236 = vmul.f32 %v6232, 1.050701
    %v6237 = vmul.f32 %v6233, 1.050701
    %v6238 = vmul.f32 %v6234, 1.050701
    %v6239 = vmul.f32 %v6235, 1.050701
    %v6240 = vpack.c.bf16 %v6236, %v6236
    %v6241 = vpack.c.bf16 %v6237, %v6237
    %v6242 = vpack.c.bf16 %v6238, %v6238
    %v6243 = vpack.c.bf16 %v6239, %v6239
    %v6244 = vld [vmem:[%s7] sm:$0xf]
    %v6245 = vld [vmem:[%s7 + $0x4] sm:$0xf]
    %v6246 = vld [vmem:[%s7 + $0x8] sm:$0xf]
    %v6247 = vld [vmem:[%s7 + $0xc] sm:$0xf]
    %v6248 = vld [vmem:[%s7 + $0x10] sm:$0xf]
    %v6249 = vld [vmem:[%s7 + $0x14] sm:$0xf]
    %v6250 = vld [vmem:[%s7 + $0x18] sm:$0xf]
    %v6251 = vld [vmem:[%s7 + $0x1c] sm:$0xf]
    %v6252 = vld [vmem:[%s7 + $0x20] sm:$0xf]
    %v6253 = vld [vmem:[%s7 + $0x24] sm:$0xf]
    %v6254 = vld [vmem:[%s7 + $0x28] sm:$0xf]
    %v6255 = vld [vmem:[%s7 + $0x2c] sm:$0xf]
    %v6256 = vld [vmem:[%s7 + $0x30] sm:$0xf]
    %v6257 = vld [vmem:[%s7 + $0x34] sm:$0xf]
    %v6258 = vld [vmem:[%s7 + $0x38] sm:$0xf]
    %v6259 = vld [vmem:[%s7 + $0x3c] sm:$0xf]
    %v6260 = vld [vmem:[%s7 + $0x40] sm:$0xf]
    %v6261 = vld [vmem:[%s7 + $0x44] sm:$0xf]
    %v6262 = vld [vmem:[%s7 + $0x48] sm:$0xf]
    %v6263 = vld [vmem:[%s7 + $0x4c] sm:$0xf]
    %v6264 = vld [vmem:[%s7 + $0x50] sm:$0xf]
    %v6265 = vld [vmem:[%s7 + $0x54] sm:$0xf]
    %v6266 = vld [vmem:[%s7 + $0x58] sm:$0xf]
    %v6267 = vld [vmem:[%s7 + $0x5c] sm:$0xf]
    %v6268 = vld [vmem:[%s7 + $0x60] sm:$0xf]
    %v6269 = vld [vmem:[%s7 + $0x64] sm:$0xf]
    %v6270 = vld [vmem:[%s7 + $0x68] sm:$0xf]
    %v6271 = vld [vmem:[%s7 + $0x6c] sm:$0xf]
    %v6272 = vld [vmem:[%s7 + $0x70] sm:$0xf]
    %v6273 = vld [vmem:[%s7 + $0x74] sm:$0xf]
    %v6274 = vld [vmem:[%s7 + $0x78] sm:$0xf]
    %v6275 = vld [vmem:[%s7 + $0x7c] sm:$0xf]
    %v6276 = vld [vmem:[%s7 + $0x80] sm:$0xf]
    %v6277 = vld [vmem:[%s7 + $0x84] sm:$0xf]
    %v6278 = vld [vmem:[%s7 + $0x88] sm:$0xf]
    %v6279 = vld [vmem:[%s7 + $0x8c] sm:$0xf]
    %v6280 = vld [vmem:[%s7 + $0x90] sm:$0xf]
    %v6281 = vld [vmem:[%s7 + $0x94] sm:$0xf]
    %v6282 = vld [vmem:[%s7 + $0x98] sm:$0xf]
    %v6283 = vld [vmem:[%s7 + $0x9c] sm:$0xf]
    %v6284 = vld [vmem:[%s7 + $0xa0] sm:$0xf]
    %v6285 = vld [vmem:[%s7 + $0xa4] sm:$0xf]
    %v6286 = vld [vmem:[%s7 + $0xa8] sm:$0xf]
    %v6287 = vld [vmem:[%s7 + $0xac] sm:$0xf]
    %v6288 = vld [vmem:[%s7 + $0xb0] sm:$0xf]
    %v6289 = vld [vmem:[%s7 + $0xb4] sm:$0xf]
    %v6290 = vld [vmem:[%s7 + $0xb8] sm:$0xf]
    %v6291 = vld [vmem:[%s7 + $0xbc] sm:$0xf]
    %v6292 = vld [vmem:[%s7 + $0xc0] sm:$0xf]
    %v6293 = vld [vmem:[%s7 + $0xc4] sm:$0xf]
    %v6294 = vld [vmem:[%s7 + $0xc8] sm:$0xf]
    %v6295 = vld [vmem:[%s7 + $0xcc] sm:$0xf]
    %v6296 = vld [vmem:[%s7 + $0xd0] sm:$0xf]
    %v6297 = vld [vmem:[%s7 + $0xd4] sm:$0xf]
    %v6298 = vld [vmem:[%s7 + $0xd8] sm:$0xf]
    %v6299 = vld [vmem:[%s7 + $0xdc] sm:$0xf]
    %v6300 = vld [vmem:[%s7 + $0xe0] sm:$0xf]
    %v6301 = vld [vmem:[%s7 + $0xe4] sm:$0xf]
    %v6302 = vld [vmem:[%s7 + $0xe8] sm:$0xf]
    %v6303 = vld [vmem:[%s7 + $0xec] sm:$0xf]
    %v6304 = vld [vmem:[%s7 + $0xf0] sm:$0xf]
    %v6305 = vld [vmem:[%s7 + $0xf4] sm:$0xf]
    %v6306 = vld [vmem:[%s7 + $0xf8] sm:$0xf]
    %v6307 = vld [vmem:[%s7 + $0xfc] sm:$0xf]
    %v6308 = vld [vmem:[#allocation13] sm:$0x1]
    %v6310 = vlaneseq
    %v6311 = vshrl.u32 %v6310, 7
    %v6312 = vsub.s32 0, %v6311
    %v6313 = vrot.slane %v6308, %v6312
    %v6379 = vunpack.c.l.b16 %v6244
    %v6380 = vunpack.c.l.b16 %v6245
    %v6381 = vunpack.c.l.b16 %v6246
    %v6382 = vunpack.c.l.b16 %v6247
    %v6383 = vunpack.c.l.b16 %v6248
    %v6384 = vunpack.c.l.b16 %v6249
    %v6385 = vunpack.c.l.b16 %v6250
    %v6386 = vunpack.c.l.b16 %v6251
    %v6387 = vunpack.c.l.b16 %v6252
    %v6388 = vunpack.c.l.b16 %v6253
    %v6389 = vunpack.c.l.b16 %v6254
    %v6390 = vunpack.c.l.b16 %v6255
    %v6391 = vunpack.c.l.b16 %v6256
    %v6392 = vunpack.c.l.b16 %v6257
    %v6393 = vunpack.c.l.b16 %v6258
    %v6394 = vunpack.c.l.b16 %v6259
    %v6395 = vunpack.c.l.b16 %v6260
    %v6396 = vunpack.c.l.b16 %v6261
    %v6397 = vunpack.c.l.b16 %v6262
    %v6398 = vunpack.c.l.b16 %v6263
    %v6399 = vunpack.c.l.b16 %v6264
    %v6400 = vunpack.c.l.b16 %v6265
    %v6401 = vunpack.c.l.b16 %v6266
    %v6402 = vunpack.c.l.b16 %v6267
    %v6403 = vunpack.c.l.b16 %v6268
    %v6404 = vunpack.c.l.b16 %v6269
    %v6405 = vunpack.c.l.b16 %v6270
    %v6406 = vunpack.c.l.b16 %v6271
    %v6407 = vunpack.c.l.b16 %v6272
    %v6408 = vunpack.c.l.b16 %v6273
    %v6409 = vunpack.c.l.b16 %v6274
    %v6410 = vunpack.c.l.b16 %v6275
    %v6411 = vunpack.c.l.b16 %v6276
    %v6412 = vunpack.c.l.b16 %v6277
    %v6413 = vunpack.c.l.b16 %v6278
    %v6414 = vunpack.c.l.b16 %v6279
    %v6415 = vunpack.c.l.b16 %v6280
    %v6416 = vunpack.c.l.b16 %v6281
    %v6417 = vunpack.c.l.b16 %v6282
    %v6418 = vunpack.c.l.b16 %v6283
    %v6419 = vunpack.c.l.b16 %v6284
    %v6420 = vunpack.c.l.b16 %v6285
    %v6421 = vunpack.c.l.b16 %v6286
    %v6422 = vunpack.c.l.b16 %v6287
    %v6423 = vunpack.c.l.b16 %v6288
    %v6424 = vunpack.c.l.b16 %v6289
    %v6425 = vunpack.c.l.b16 %v6290
    %v6426 = vunpack.c.l.b16 %v6291
    %v6427 = vunpack.c.l.b16 %v6292
    %v6428 = vunpack.c.l.b16 %v6293
    %v6429 = vunpack.c.l.b16 %v6294
    %v6430 = vunpack.c.l.b16 %v6295
    %v6431 = vunpack.c.l.b16 %v6296
    %v6432 = vunpack.c.l.b16 %v6297
    %v6433 = vunpack.c.l.b16 %v6298
    %v6434 = vunpack.c.l.b16 %v6299
    %v6435 = vunpack.c.l.b16 %v6300
    %v6436 = vunpack.c.l.b16 %v6301
    %v6437 = vunpack.c.l.b16 %v6302
    %v6438 = vunpack.c.l.b16 %v6303
    %v6439 = vunpack.c.l.b16 %v6304
    %v6440 = vunpack.c.l.b16 %v6305
    %v6441 = vunpack.c.l.b16 %v6306
    %v6442 = vunpack.c.l.b16 %v6307
    %v6443 = vpack.c.b16 %v6380, %v6379
    %v6444 = vpack.c.b16 %v6382, %v6381
    %v6445 = vpack.c.b16 %v6384, %v6383
    %v6446 = vpack.c.b16 %v6386, %v6385
    %v6447 = vpack.c.b16 %v6388, %v6387
    %v6448 = vpack.c.b16 %v6390, %v6389
    %v6449 = vpack.c.b16 %v6392, %v6391
    %v6450 = vpack.c.b16 %v6394, %v6393
    %v6451 = vpack.c.b16 %v6396, %v6395
    %v6452 = vpack.c.b16 %v6398, %v6397
    %v6453 = vpack.c.b16 %v6400, %v6399
    %v6454 = vpack.c.b16 %v6402, %v6401
    %v6455 = vpack.c.b16 %v6404, %v6403
    %v6456 = vpack.c.b16 %v6406, %v6405
    %v6457 = vpack.c.b16 %v6408, %v6407
    %v6458 = vpack.c.b16 %v6410, %v6409
    %v6459 = vpack.c.b16 %v6412, %v6411
    %v6460 = vpack.c.b16 %v6414, %v6413
    %v6461 = vpack.c.b16 %v6416, %v6415
    %v6462 = vpack.c.b16 %v6418, %v6417
    %v6463 = vpack.c.b16 %v6420, %v6419
    %v6464 = vpack.c.b16 %v6422, %v6421
    %v6465 = vpack.c.b16 %v6424, %v6423
    %v6466 = vpack.c.b16 %v6426, %v6425
    %v6467 = vpack.c.b16 %v6428, %v6427
    %v6468 = vpack.c.b16 %v6430, %v6429
    %v6469 = vpack.c.b16 %v6432, %v6431
    %v6470 = vpack.c.b16 %v6434, %v6433
    %v6471 = vpack.c.b16 %v6436, %v6435
    %v6472 = vpack.c.b16 %v6438, %v6437
    %v6473 = vpack.c.b16 %v6440, %v6439
    %v6474 = vpack.c.b16 %v6442, %v6441
    %6507 = vmatprep.subr.bf16.mxu0 0
    %6508 = vmatpush1.bf16.msra.mxu0 %v6450
    %6509 = vmatprep.subr.bf16.mxu0 0
    %6510 = vmatpush1.bf16.msra.mxu0 %v6449
    %6511 = vmatprep.subr.bf16.mxu0 0
    %6512 = vmatpush1.bf16.msra.mxu0 %v6448
    %6513 = vmatprep.subr.bf16.mxu0 0
    %6514 = vmatpush1.bf16.msra.mxu0 %v6447
    %6515 = vmatprep.subr.bf16.mxu0 0
    %6516 = vmatpush1.bf16.msra.mxu0 %v6446
    %6517 = vmatprep.subr.bf16.mxu0 0
    %6518 = vmatpush1.bf16.msra.mxu0 %v6445
    %6519 = vmatprep.subr.bf16.mxu0 0
    %6520 = vmatpush1.bf16.msra.mxu0 %v6444
    %6521 = vmatprep.subr.bf16.mxu0 0
    %6522 = vmatpush1.bf16.msra.mxu0 %v6443
    %6523 = vmatprep.subr.bf16.mxu0 0
    %6524 = vmatpush2.bf16.msra.mxu0 %v6458
    %6525 = vmatprep.subr.bf16.mxu0 0
    %6526 = vmatpush2.bf16.msra.mxu0 %v6457
    %6527 = vmatprep.subr.bf16.mxu0 0
    %6528 = vmatpush2.bf16.msra.mxu0 %v6456
    %6529 = vmatprep.subr.bf16.mxu0 0
    %6530 = vmatpush2.bf16.msra.mxu0 %v6455
    %6531 = vmatprep.subr.bf16.mxu0 0
    %6532 = vmatpush2.bf16.msra.mxu0 %v6454
    %6533 = vmatprep.subr.bf16.mxu0 0
    %6534 = vmatpush2.bf16.msra.mxu0 %v6453
    %6535 = vmatprep.subr.bf16.mxu0 0
    %6536 = vmatpush2.bf16.msra.mxu0 %v6452
    %6537 = vmatprep.subr.bf16.mxu0 0
    %6538 = vmatpush2.bf16.msra.mxu0 %v6451
    %6539 = vmatprep.mubr.bf16.mxu0 %v6241
    %6540 = vmatmul.mubr.bf16.gmra.mxu0 %v6240
    %v6541 = vpop.f32.mrf.mxu0
    %v6542 = vadd.f32 %v6313, %v6541
    %v6543 = vpop.f32.mrf.mxu0
    %v6544 = vpop.f32.mrf.mxu0
    %v6545 = vpop.f32.mrf.mxu0
    %6546 = vdwg.mxu0
    %6547 = vmatprep.subr.bf16.mxu0 0
    %6548 = vmatpush1.bf16.msra.mxu0 %v6466
    %6549 = vmatprep.subr.bf16.mxu0 0
    %6550 = vmatpush1.bf16.msra.mxu0 %v6465
    %6551 = vmatprep.subr.bf16.mxu0 0
    %6552 = vmatpush1.bf16.msra.mxu0 %v6464
    %6553 = vmatprep.subr.bf16.mxu0 0
    %6554 = vmatpush1.bf16.msra.mxu0 %v6463
    %6555 = vmatprep.subr.bf16.mxu0 0
    %6556 = vmatpush1.bf16.msra.mxu0 %v6462
    %6557 = vmatprep.subr.bf16.mxu0 0
    %6558 = vmatpush1.bf16.msra.mxu0 %v6461
    %6559 = vmatprep.subr.bf16.mxu0 0
    %6560 = vmatpush1.bf16.msra.mxu0 %v6460
    %6561 = vmatprep.subr.bf16.mxu0 0
    %6562 = vmatpush1.bf16.msra.mxu0 %v6459
    %6563 = vmatprep.subr.bf16.mxu0 0
    %6564 = vmatpush2.bf16.msra.mxu0 %v6474
    %6565 = vmatprep.subr.bf16.mxu0 0
    %6566 = vmatpush2.bf16.msra.mxu0 %v6473
    %6567 = vmatprep.subr.bf16.mxu0 0
    %6568 = vmatpush2.bf16.msra.mxu0 %v6472
    %6569 = vmatprep.subr.bf16.mxu0 0
    %6570 = vmatpush2.bf16.msra.mxu0 %v6471
    %6571 = vmatprep.subr.bf16.mxu0 0
    %6572 = vmatpush2.bf16.msra.mxu0 %v6470
    %6573 = vmatprep.subr.bf16.mxu0 0
    %6574 = vmatpush2.bf16.msra.mxu0 %v6469
    %6575 = vmatprep.subr.bf16.mxu0 0
    %6576 = vmatpush2.bf16.msra.mxu0 %v6468
    %6577 = vmatprep.subr.bf16.mxu0 0
    %6578 = vmatpush2.bf16.msra.mxu0 %v6467
    %6579 = vmatprep.mubr.bf16.mxu0 %v6243
    %6580 = vmatmul.mubr.bf16.gmra.mxu0 %v6242
    %v6581 = vpop.f32.mrf.mxu0
    %v6582 = vadd.f32 %v6542, %v6581
    %v6583 = vpop.f32.mrf.mxu0
    %v6584 = vpop.f32.mrf.mxu0
    %v6585 = vpop.f32.mrf.mxu0
    %6586 = vdwg.mxu0
    %vm6587 = vcmask 64512
    %v6588 = vsel %vm6587, %v6582, -inf
    %6589 = vmax.xlane.f32.xlu0 %v6588
    %v6590 = vpop.xlane.xlu0 %6589
    %v6591 = vsub.f32 %v6582, %v6590
    %v6592 = vmul.f32 %v6591, 1.442695
    %v6593 = vpow.pop %v6592
    %v6594 = vsel %vm6587, %v6593, 0.0
    %6595 = vadd.xlane.f32.xlu0 %v6594
    %v6596 = vpop.xlane.xlu0 %6595
    %v6597 = vrcp.pop %v6596
    %v6598 = vmul.f32 %v6593, %v6597
    %6599 = vst.msk [vmem:[#allocation14] sm:$0xff] %vm6587, %v6598
    // Predicated region
    $region66: #{fe_nn_forward.1} parent=1 // pred_check
      _
    $region67: #{fe_nn_forward.1} parent=1 // pred_check_branch
      %6601 = sbr.rel (0) target = $region69
    $region68: #{fe_nn_forward.1} parent=1 // pred_region
      %s6603 = ssub.s32 128, 128
      %6604 = vsyncadd [#allocation4], %s6603
      %s6606 = sshll.u32 [#allocation14], 4
      %s6607 = int_to_ptr.vmem [resolvable:$true] %s6606
      %6609 = dma.vmem_to_hbm [thread:$0]  %s6607, 128, %s9, [#allocation4]
    $region69: #{fe_nn_forward.1} parent=1 // pred_fallthru
      _
    // Predicated region
    $region70: #{fe_nn_forward.1} parent=1 // pred_check
      _
    $region71: #{fe_nn_forward.1} parent=1 // pred_check_branch
      %6611 = sbr.rel (0) target = $region73
    $region72: #{fe_nn_forward.1} parent=1 // pred_region
      %6612 = dma.done [#allocation4], 128
    $region73: #{fe_nn_forward.1} parent=1 // pred_fallthru
      _
    %6613 = vsyncpa [#allocation3], 1
    %6614 = vsyncpa [#allocation6], 1
    %6615 = vsyncpa [#allocation9], 1
    %6616 = vsyncpa [#allocation12], 1
    %6617 = vsyncpa [#allocation4], 1

</llo_original>
